<compile_context>
chip_gen: v6e
topology: v6e:2x2x1
jax: 0.10.0
libtpu: 0.0.40
codegen_flags: <defaults>
</compile_context>

<pallas_src>
import numpy as np
import jax
import jax.numpy as jnp
from jax.experimental import pallas as pl
from jax.experimental.pallas import tpu as pltpu


# ---------------------------------------------------------------------------
# One-time (model-load) parameter prep: fold eval-mode GBN (m, s) into the conv
# weights, fold the fixed 0.5 sym/antisym pair convolutions into the reinforce
# weights, and pack everything into a single (8, Fh, F) slab:
#   slot 0: r0 sym half-weight   (0.5 * W_sym  / s)  applied to a AND to c
#   slot 1: r0 antisym half-wt   (0.5 * W_asym / s)  applied to |a - c|
#   slot 2: r0 quadjet weight    (W_q / s)
#   slot 3: c0 jet-conv weight   (W / s)
#   slot 4-6: same as 0-2 for the second reinforce layer
#   slot 7: folded biases, columns 0/1/2 = r0 / c0 / r1 (rest zero)
# Fold identity:  ((d - m) / s) @ w + b  ==  d @ (w / s) + (b - (m / s) @ w)
# ---------------------------------------------------------------------------
def prepare_resnet_block_params(params):
    def fold_reinforce(w, b, m, s):
        # w: (3, F, Fh) [slot, in_feat, out_feat]; b: (1, Fh); m, s: (3, F)
        wf = jnp.transpose(w / s[:, :, None], (0, 2, 1))              # (3, Fh, F)
        bf = b[0] - jnp.einsum("kf,kfo->o", m / s, w, precision="highest")
        return 0.5 * wf[0], 0.5 * wf[1], wf[2], bf

    def fold_conv(w, b, m, s):
        # w: (F, Fh); b: (1, Fh); m, s: (1, F)
        wf = jnp.transpose(w / s[0][:, None])                         # (Fh, F)
        bf = b[0] - jnp.einsum("f,fo->o", m[0] / s[0], w, precision="highest")
        return wf, bf

    r0s, r0a, r0q, r0b = fold_reinforce(params["r0_w"], params["r0_b"],
                                        params["r0_m"], params["r0_s"])
    c0w, c0b = fold_conv(params["c0_w"], params["c0_b"],
                         params["c0_m"], params["c0_s"])
    r1s, r1a, r1q, r1b = fold_reinforce(params["r1_w"], params["r1_b"],
                                        params["r1_m"], params["r1_s"])
    fh, f = c0w.shape
    assert f >= 3
    bias = jnp.zeros((fh, f), jnp.float32)
    bias = bias.at[:, 0].set(r0b).at[:, 1].set(c0b).at[:, 2].set(r1b)
    return jnp.stack([r0s, r0a, r0q, c0w, r1s, r1a, r1q, bias]).astype(jnp.float32)


# ---------------------------------------------------------------------------
# Kernel: activation blocks are (P, F, TB) with TB (batch tile) on the 128-lane
# axis; all matmuls are tiny-K MXU dots fed straight from the block buffers.
# ---------------------------------------------------------------------------
def resnet_block_kernel(x_ref, xx_ref, x0_ref, xx0_ref, w_ref,
                        xx_out_ref, xx0_out_ref):
    fh = w_ref.shape[1]            # F // 2 (phase_symmetric conv output channels)
    tb = x_ref.shape[2]            # batch tile (multiple of 128)
    odt = xx_out_ref.dtype

    # Weights (tiny, block index constant across the grid -> fetched once).
    w_r0s, w_r0a, w_r0q, w_c0 = w_ref[0], w_ref[1], w_ref[2], w_ref[3]
    w_r1s, w_r1a, w_r1q, bias = w_ref[4], w_ref[5], w_ref[6], w_ref[7]
    # Layer-2 weights split into column halves so layer-1 activations can stay
    # as separate [y, -y] halves (no sublane/lane concatenates anywhere).
    w_r1s_t, w_r1s_b = w_r1s[:, :fh], w_r1s[:, fh:]
    w_r1a_t, w_r1a_b = w_r1a[:, :fh], w_r1a[:, fh:]
    w_r1q_t, w_r1q_b = w_r1q[:, :fh], w_r1q[:, fh:]
    # Hoist the lane-broadcast of the biases once (JAX does not CSE broadcasts).
    b_r0 = jnp.broadcast_to(bias[:, 0:1], (fh, tb))
    b_c0 = jnp.broadcast_to(bias[:, 1:2], (fh, tb))
    b_r1 = jnp.broadcast_to(bias[:, 2:3], (fh, tb))

    def mm(w, v):
        return jnp.dot(w, v, preferred_element_type=jnp.float32)

    def silu(v):
        # v*sigmoid(v) == 0.5*v*(1 + tanh(0.5*v)); tanh rides the EUP slot
        # (no f32 divide / Newton reciprocal on the VPU).
        h = 0.5 * v
        return h + h * jnp.tanh(h)

    x_pix = [x_ref[p].astype(jnp.float32) for p in range(6)]      # each (F, TB)
    xx_pix = [xx_ref[g].astype(jnp.float32) for g in range(3)]

    # ---- layer 1: jet conv + reinforce (on pre-conv x), residual + SiLU -----
    x1_t, x1_b = [], []
    for p in range(6):
        y = mm(w_c0, x_pix[p]) + b_c0                               # (Fh, TB)
        x1_t.append(silu(y + x0_ref[p, :fh, :]))
        x1_b.append(silu(x0_ref[p, fh:, :] - y))                    # -y + res

    xx1_t, xx1_b = [], []
    for g in range(3):
        a, c = x_pix[2 * g], x_pix[2 * g + 1]
        y = (mm(w_r0s, a) + mm(w_r0s, c)          # 0.5*W_sym folded onto a and c
             + mm(w_r0a, jnp.abs(a - c))          # 0.5*W_asym folded; |.| on VPU
             + mm(w_r0q, xx_pix[g]) + b_r0)
        xx1_t.append(silu(y + xx0_ref[g, :fh, :]))
        xx1_b.append(silu(xx0_ref[g, fh:, :] - y))

    # ---- layer 2: final reinforce + residual; store [y, -y] halves directly -
    for g in range(3):
        at, ab = x1_t[2 * g], x1_b[2 * g]
        ct, cb = x1_t[2 * g + 1], x1_b[2 * g + 1]
        y = (mm(w_r1s_t, at) + mm(w_r1s_b, ab)
             + mm(w_r1s_t, ct) + mm(w_r1s_b, cb)
             + mm(w_r1a_t, jnp.abs(at - ct)) + mm(w_r1a_b, jnp.abs(ab - cb))
             + mm(w_r1q_t, xx1_t[g]) + mm(w_r1q_b, xx1_b[g])
             + b_r1)
        top = y + xx0_ref[g, :fh, :]
        bot = xx0_ref[g, fh:, :] - y
        xx0_out_ref[g, :fh, :] = top.astype(odt)        # xx0 update (pre-activation)
        xx0_out_ref[g, fh:, :] = bot.astype(odt)
        xx_out_ref[g, :fh, :] = silu(top).astype(odt)   # activated output
        xx_out_ref[g, fh:, :] = silu(bot).astype(odt)


# ---------------------------------------------------------------------------
# Generation-aware tiling
# ---------------------------------------------------------------------------
def _tpu_hw_info():
    """(num_tensorcores, vmem_limit_bytes); conservative defaults if unknown."""
    kind = ""
    try:
        kind = jax.devices()[0].device_kind.lower()
    except Exception:
        pass
    if any(t in kind for t in ("v5e", "v5 lite", "v5litepod", "v6")):
        return 1, 96 * 1024 * 1024     # v5e / v6e: 1 TC, 128 MiB physical VMEM
    return 2, 48 * 1024 * 1024         # v7x (2 TC, 64 MiB) and unknown: be safe


def _pick_batch_tile(batch, f, num_tc, vmem_limit):
    """Batch tile (multiple of 128), grid steps, padded batch.

    Budget = double-buffered I/O blocks (24*F f32 rows/column) PLUS live
    in-kernel intermediates (~20*F f32 rows/column: x1/xx1 halves, y tiles,
    |a-c| temps), against 75% of the compiler VMEM limit.  On multi-TC parts
    the step count is rounded up to a multiple of num_tc so the 'parallel'
    grid axis splits evenly across TensorCores; on 1-TC parts we simply take
    the largest tile that fits.
    """
    n = max(1, -(-batch // 128))                       # 128-lane column groups
    bytes_per_col = 24 * f * 4 * 2 + 20 * f * 4
    budget = (vmem_limit * 3) // 4
    d_max = max(1, budget // (bytes_per_col * 128))
    steps = max(1, -(-n // d_max))
    if num_tc > 1 and n >= num_tc:
        steps = -(-steps // num_tc) * num_tc
    d = -(-n // steps)
    return 128 * d, steps, 128 * d * steps


# ---------------------------------------------------------------------------
# Forward passes
# ---------------------------------------------------------------------------
@jax.jit
def resnet_block_forward_pfb(x, xx, x0, xx0, w_pack):
    """Native-layout entry: x, x0: (6, F, B); xx, xx0: (3, F, B).

    Keeping activations in (pixel, feature, batch) across the whole network
    avoids the per-call HBM round trip of NCL<->PFB transposes (the kernel is
    HBM-bandwidth bound, so that round trip roughly doubles its cost).
    """
    _, F, B = x.shape
    Fh = w_pack.shape[1]
    assert F % 8 == 0 and 2 * Fh == F, "feature dim must be even and a multiple of 8"

    num_tc, vmem_limit = _tpu_hw_info()
    TB, steps, b_pad = _pick_batch_tile(B, F, num_tc, vmem_limit)
    if b_pad != B:
        pad = [(0, 0), (0, 0), (0, b_pad - B)]
        x, xx, x0, xx0 = (jnp.pad(t, pad) for t in (x, xx, x0, xx0))

    act6 = pl.BlockSpec((6, F, TB), lambda i: (0, 0, i))
    act3 = pl.BlockSpec((3, F, TB), lambda i: (0, 0, i))
    wspec = pl.BlockSpec(w_pack.shape, lambda i: (0, 0, 0))

    xx_out, xx0_out = pl.pallas_call(
        resnet_block_kernel,
        grid=(steps,),
        in_specs=[act6, act3, act6, act3, wspec],
        out_specs=(act3, act3),
        out_shape=(jax.ShapeDtypeStruct((3, F, b_pad), x.dtype),
                   jax.ShapeDtypeStruct((3, F, b_pad), x.dtype)),
        compiler_params=pltpu.CompilerParams(
            dimension_semantics=("parallel",),
            vmem_limit_bytes=vmem_limit),
    )(x, xx, x0, xx0, w_pack)

    if b_pad != B:
        xx_out, xx0_out = xx_out[:, :, :B], xx0_out[:, :, :B]
    return xx_out, xx0_out


@jax.jit
def resnet_block_forward(x, xx, x0, xx0, w_pack):
    """PyTorch-layout entry: x, x0: (B, F, 6); xx, xx0: (B, F, 3).

    The layout transposes/pad live inside this jit so XLA fuses them into a
    single pass around the pallas_call.  Callers that can keep (P, F, B)
    activations should use resnet_block_forward_pfb directly and skip them.
    TODO(synk): if the surrounding network adopts the (P, F, B) layout, delete
                this wrapper to remove the remaining transpose HBM traffic.
    """
    to_pfb = lambda t: jnp.transpose(t, (2, 1, 0))
    xx_o, xx0_o = resnet_block_forward_pfb(to_pfb(x), to_pfb(xx),
                                           to_pfb(x0), to_pfb(xx0), w_pack)
    from_pfb = lambda t: jnp.transpose(t, (2, 1, 0))
    return from_pfb(xx_o), from_pfb(xx0_o)


# ---------------------------------------------------------------------------
# Pure-JAX reference with identical math (unfolded GBN), for verification.
# ---------------------------------------------------------------------------
def reference_forward(x, xx, x0, xx0, p):
    to_bpf = lambda t: jnp.transpose(t, (0, 2, 1))
    x, xx, x0, xx0 = (to_bpf(t) for t in (x, xx, x0, xx0))
    silu = lambda v: v * (1.0 / (1.0 + jnp.exp(-v)))

    def reinforce(x, xx, m, s, w, b):
        a, c = x[:, 0::2, :], x[:, 1::2, :]
        slab = jnp.stack([0.5 * (a + c), jnp.abs(0.5 * (a - c)), xx], axis=2)
        slab = (slab - m[None, None]) / s[None, None]
        y = jnp.einsum("bgkf,kfo->bgo", slab, w, precision="highest") + b[0]
        return jnp.concatenate([y, -y], axis=-1)

    def gbn_conv(x, m, s, w, b):
        xn = (x - m[0]) / s[0]
        y = jnp.einsum("bpf,fo->bpo", xn, w, precision="highest") + b[0]
        return jnp.concatenate([y, -y], axis=-1)

    xx = reinforce(x, xx, p["r0_m"], p["r0_s"], p["r0_w"], p["r0_b"])
    x = gbn_conv(x, p["c0_m"], p["c0_s"], p["c0_w"], p["c0_b"])
    xx = silu(xx + xx0)
    x = silu(x + x0)
    xx = reinforce(x, xx, p["r1_m"], p["r1_s"], p["r1_w"], p["r1_b"])
    xx = xx + xx0
    from_bpf = lambda t: jnp.transpose(t, (0, 2, 1))
    return from_bpf(silu(xx)), from_bpf(xx)


if __name__ == "__main__":
    B, F = 256, 16         # batch (lane-dense: multiple of 128), nFeatures (d)
    Fh = F // 2            # phase_symmetric -> conv produces F//2 channels
    key = jax.random.PRNGKey(0)
    ks = jax.random.split(key, 16)

    k_r = (1.0 / (F * 3)) ** 0.5   # Conv1d init bound, kernel_size=3
    k_c = (1.0 / (F * 1)) ** 0.5   # Conv1d init bound, kernel_size=1

    def u(k, shape, bound):
        return jax.random.uniform(k, shape, jnp.float32, -bound, bound)

    params = {
        "r0_m": 0.1 * jax.random.normal(ks[0], (3, F), jnp.float32),
        "r0_s": jax.random.uniform(ks[1], (3, F), jnp.float32, 0.5, 1.5),
        "r0_w": u(ks[2], (3, F, Fh), k_r),
        "r0_b": u(ks[3], (1, Fh), k_r),
        "c0_m": 0.1 * jax.random.normal(ks[4], (1, F), jnp.float32),
        "c0_s": jax.random.uniform(ks[5], (1, F), jnp.float32, 0.5, 1.5),
        "c0_w": u(ks[6], (F, Fh), k_c),
        "c0_b": u(ks[7], (1, Fh), k_c),
        "r1_m": 0.1 * jax.random.normal(ks[8], (3, F), jnp.float32),
        "r1_s": jax.random.uniform(ks[9], (3, F), jnp.float32, 0.5, 1.5),
        "r1_w": u(ks[10], (3, F, Fh), k_r),
        "r1_b": u(ks[11], (1, Fh), k_r),
    }

    # PyTorch layout: x/x0 = dijets (B, d, 6), xx/xx0 = quadjets (B, d, 3)
    x = jax.random.normal(ks[12], (B, F, 6), jnp.float32)
    xx = jax.random.normal(ks[13], (B, F, 3), jnp.float32)
    x0 = jax.random.normal(ks[14], (B, F, 6), jnp.float32)
    xx0 = jax.random.normal(ks[15], (B, F, 3), jnp.float32)

    # Model-load-time fold + pack (done once, outside the per-call path).
    w_pack = prepare_resnet_block_params(params)
    jax.block_until_ready(w_pack)

    xx_out, xx0_out = resnet_block_forward(x, xx, x0, xx0, w_pack)
    jax.block_until_ready((xx_out, xx0_out))

    ref_xx, ref_xx0 = reference_forward(x, xx, x0, xx0, params)
    np.testing.assert_allclose(np.asarray(xx_out), np.asarray(ref_xx),
                               rtol=1e-4, atol=1e-5)
    np.testing.assert_allclose(np.asarray(xx0_out), np.asarray(ref_xx0),
                               rtol=1e-4, atol=1e-5)

    print("KERNEL_OK")
</pallas_src>

<mosaic_0001>
module attributes {stable_mosaic.version = 11 : i64} {
  func.func @resnet_block_kernel(%arg0: i32, %arg1: memref<6x16x128xf32, #tpu.memory_space<vmem>>, %arg2: memref<3x16x128xf32, #tpu.memory_space<vmem>>, %arg3: memref<6x16x128xf32, #tpu.memory_space<vmem>>, %arg4: memref<3x16x128xf32, #tpu.memory_space<vmem>>, %arg5: memref<8x8x16xf32, #tpu.memory_space<vmem>>, %arg6: memref<3x16x128xf32, #tpu.memory_space<vmem>>, %arg7: memref<3x16x128xf32, #tpu.memory_space<vmem>>) attributes {dimension_semantics = [#tpu.dimension_semantics<parallel>], iteration_bounds = array<i64: 2>, scalar_prefetch = 0 : i64, scratch_operands = 0 : i64, tpu.core_type = #tpu.core_type<tc>, window_params = [{transform_indices = @transform_0, window_bounds = array<i64: 6, 16, 128>}, {transform_indices = @transform_1, window_bounds = array<i64: 3, 16, 128>}, {transform_indices = @transform_2, window_bounds = array<i64: 6, 16, 128>}, {transform_indices = @transform_3, window_bounds = array<i64: 3, 16, 128>}, {pipeline_mode = #tpu.pipeline_mode<synchronous>, transform_indices = @transform_4, window_bounds = array<i64: 8, 8, 16>}, {transform_indices = @transform_5, window_bounds = array<i64: 3, 16, 128>}, {transform_indices = @transform_6, window_bounds = array<i64: 3, 16, 128>}]} {
    %c0 = arith.constant 0 : index
    %c0_0 = arith.constant 0 : index
    %c0_1 = arith.constant 0 : index
    %0 = vector.load %arg5[%c0, %c0_0, %c0_1] : memref<8x8x16xf32, #tpu.memory_space<vmem>>, vector<1x8x16xf32>
    %1 = vector.shape_cast %0 : vector<1x8x16xf32> to vector<8x16xf32>
    %c1 = arith.constant 1 : index
    %c0_2 = arith.constant 0 : index
    %c0_3 = arith.constant 0 : index
    %2 = vector.load %arg5[%c1, %c0_2, %c0_3] : memref<8x8x16xf32, #tpu.memory_space<vmem>>, vector<1x8x16xf32>
    %3 = vector.shape_cast %2 : vector<1x8x16xf32> to vector<8x16xf32>
    %c2 = arith.constant 2 : index
    %c0_4 = arith.constant 0 : index
    %c0_5 = arith.constant 0 : index
    %4 = vector.load %arg5[%c2, %c0_4, %c0_5] : memref<8x8x16xf32, #tpu.memory_space<vmem>>, vector<1x8x16xf32>
    %5 = vector.shape_cast %4 : vector<1x8x16xf32> to vector<8x16xf32>
    %c3 = arith.constant 3 : index
    %c0_6 = arith.constant 0 : index
    %c0_7 = arith.constant 0 : index
    %6 = vector.load %arg5[%c3, %c0_6, %c0_7] : memref<8x8x16xf32, #tpu.memory_space<vmem>>, vector<1x8x16xf32>
    %7 = vector.shape_cast %6 : vector<1x8x16xf32> to vector<8x16xf32>
    %c4 = arith.constant 4 : index
    %c0_8 = arith.constant 0 : index
    %c0_9 = arith.constant 0 : index
    %8 = vector.load %arg5[%c4, %c0_8, %c0_9] : memref<8x8x16xf32, #tpu.memory_space<vmem>>, vector<1x8x16xf32>
    %9 = vector.shape_cast %8 : vector<1x8x16xf32> to vector<8x16xf32>
    %c5 = arith.constant 5 : index
    %c0_10 = arith.constant 0 : index
    %c0_11 = arith.constant 0 : index
    %10 = vector.load %arg5[%c5, %c0_10, %c0_11] : memref<8x8x16xf32, #tpu.memory_space<vmem>>, vector<1x8x16xf32>
    %11 = vector.shape_cast %10 : vector<1x8x16xf32> to vector<8x16xf32>
    %c6 = arith.constant 6 : index
    %c0_12 = arith.constant 0 : index
    %c0_13 = arith.constant 0 : index
    %12 = vector.load %arg5[%c6, %c0_12, %c0_13] : memref<8x8x16xf32, #tpu.memory_space<vmem>>, vector<1x8x16xf32>
    %13 = vector.shape_cast %12 : vector<1x8x16xf32> to vector<8x16xf32>
    %c7 = arith.constant 7 : index
    %c0_14 = arith.constant 0 : index
    %c0_15 = arith.constant 0 : index
    %14 = vector.load %arg5[%c7, %c0_14, %c0_15] : memref<8x8x16xf32, #tpu.memory_space<vmem>>, vector<1x8x16xf32>
    %15 = vector.shape_cast %14 : vector<1x8x16xf32> to vector<8x16xf32>
    %16 = vector.extract_strided_slice %9 {offsets = [0, 0], sizes = [8, 8], strides = [1, 1]} : vector<8x16xf32> to vector<8x8xf32>
    %17 = vector.extract_strided_slice %9 {offsets = [0, 8], sizes = [8, 8], strides = [1, 1]} : vector<8x16xf32> to vector<8x8xf32>
    %18 = vector.extract_strided_slice %11 {offsets = [0, 0], sizes = [8, 8], strides = [1, 1]} : vector<8x16xf32> to vector<8x8xf32>
    %19 = vector.extract_strided_slice %11 {offsets = [0, 8], sizes = [8, 8], strides = [1, 1]} : vector<8x16xf32> to vector<8x8xf32>
    %20 = vector.extract_strided_slice %13 {offsets = [0, 0], sizes = [8, 8], strides = [1, 1]} : vector<8x16xf32> to vector<8x8xf32>
    %21 = vector.extract_strided_slice %13 {offsets = [0, 8], sizes = [8, 8], strides = [1, 1]} : vector<8x16xf32> to vector<8x8xf32>
    %22 = vector.extract_strided_slice %15 {offsets = [0, 0], sizes = [8, 1], strides = [1, 1]} : vector<8x16xf32> to vector<8x1xf32>
    %23 = vector.shape_cast %22 : vector<8x1xf32> to vector<8x1xf32>
    %24 = vector.broadcast %23 : vector<8x1xf32> to vector<8x128xf32>
    %25 = vector.extract_strided_slice %15 {offsets = [0, 1], sizes = [8, 1], strides = [1, 1]} : vector<8x16xf32> to vector<8x1xf32>
    %26 = vector.shape_cast %25 : vector<8x1xf32> to vector<8x1xf32>
    %27 = vector.broadcast %26 : vector<8x1xf32> to vector<8x128xf32>
    %28 = vector.extract_strided_slice %15 {offsets = [0, 2], sizes = [8, 1], strides = [1, 1]} : vector<8x16xf32> to vector<8x1xf32>
    %29 = vector.shape_cast %28 : vector<8x1xf32> to vector<8x1xf32>
    %30 = vector.broadcast %29 : vector<8x1xf32> to vector<8x128xf32>
    %c0_16 = arith.constant 0 : index
    %c0_17 = arith.constant 0 : index
    %c0_18 = arith.constant 0 : index
    %31 = vector.load %arg1[%c0_16, %c0_17, %c0_18] : memref<6x16x128xf32, #tpu.memory_space<vmem>>, vector<1x16x128xf32>
    %32 = vector.shape_cast %31 : vector<1x16x128xf32> to vector<16x128xf32>
    %c1_19 = arith.constant 1 : index
    %c0_20 = arith.constant 0 : index
    %c0_21 = arith.constant 0 : index
    %33 = vector.load %arg1[%c1_19, %c0_20, %c0_21] : memref<6x16x128xf32, #tpu.memory_space<vmem>>, vector<1x16x128xf32>
    %34 = vector.shape_cast %33 : vector<1x16x128xf32> to vector<16x128xf32>
    %c2_22 = arith.constant 2 : index
    %c0_23 = arith.constant 0 : index
    %c0_24 = arith.constant 0 : index
    %35 = vector.load %arg1[%c2_22, %c0_23, %c0_24] : memref<6x16x128xf32, #tpu.memory_space<vmem>>, vector<1x16x128xf32>
    %36 = vector.shape_cast %35 : vector<1x16x128xf32> to vector<16x128xf32>
    %c3_25 = arith.constant 3 : index
    %c0_26 = arith.constant 0 : index
    %c0_27 = arith.constant 0 : index
    %37 = vector.load %arg1[%c3_25, %c0_26, %c0_27] : memref<6x16x128xf32, #tpu.memory_space<vmem>>, vector<1x16x128xf32>
    %38 = vector.shape_cast %37 : vector<1x16x128xf32> to vector<16x128xf32>
    %c4_28 = arith.constant 4 : index
    %c0_29 = arith.constant 0 : index
    %c0_30 = arith.constant 0 : index
    %39 = vector.load %arg1[%c4_28, %c0_29, %c0_30] : memref<6x16x128xf32, #tpu.memory_space<vmem>>, vector<1x16x128xf32>
    %40 = vector.shape_cast %39 : vector<1x16x128xf32> to vector<16x128xf32>
    %c5_31 = arith.constant 5 : index
    %c0_32 = arith.constant 0 : index
    %c0_33 = arith.constant 0 : index
    %41 = vector.load %arg1[%c5_31, %c0_32, %c0_33] : memref<6x16x128xf32, #tpu.memory_space<vmem>>, vector<1x16x128xf32>
    %42 = vector.shape_cast %41 : vector<1x16x128xf32> to vector<16x128xf32>
    %c0_34 = arith.constant 0 : index
    %c0_35 = arith.constant 0 : index
    %c0_36 = arith.constant 0 : index
    %43 = vector.load %arg2[%c0_34, %c0_35, %c0_36] : memref<3x16x128xf32, #tpu.memory_space<vmem>>, vector<1x16x128xf32>
    %44 = vector.shape_cast %43 : vector<1x16x128xf32> to vector<16x128xf32>
    %c1_37 = arith.constant 1 : index
    %c0_38 = arith.constant 0 : index
    %c0_39 = arith.constant 0 : index
    %45 = vector.load %arg2[%c1_37, %c0_38, %c0_39] : memref<3x16x128xf32, #tpu.memory_space<vmem>>, vector<1x16x128xf32>
    %46 = vector.shape_cast %45 : vector<1x16x128xf32> to vector<16x128xf32>
    %c2_40 = arith.constant 2 : index
    %c0_41 = arith.constant 0 : index
    %c0_42 = arith.constant 0 : index
    %47 = vector.load %arg2[%c2_40, %c0_41, %c0_42] : memref<3x16x128xf32, #tpu.memory_space<vmem>>, vector<1x16x128xf32>
    %48 = vector.shape_cast %47 : vector<1x16x128xf32> to vector<16x128xf32>
    %cst = arith.constant dense<0.000000e+00> : vector<8x128xf32>
    %49 = tpu.matmul %7, %32, %cst {dimension_numbers = #tpu.dot_dimension_numbers<[1], [0], [0], [1], [0, 0, 1, 1], [], []>} : vector<8x16xf32>, vector<16x128xf32>, vector<8x128xf32> -> vector<8x128xf32>
    %50 = arith.addf %49, %27 : vector<8x128xf32>
    %c0_43 = arith.constant 0 : index
    %c0_44 = arith.constant 0 : index
    %c0_45 = arith.constant 0 : index
    %51 = vector.load %arg3[%c0_43, %c0_44, %c0_45] : memref<6x16x128xf32, #tpu.memory_space<vmem>>, vector<1x8x128xf32>
    %52 = vector.shape_cast %51 : vector<1x8x128xf32> to vector<8x128xf32>
    %53 = arith.addf %50, %52 : vector<8x128xf32>
    %cst_46 = arith.constant 5.000000e-01 : f32
    %54 = vector.broadcast %cst_46 : f32 to vector<8x128xf32>
    %55 = arith.mulf %54, %53 : vector<8x128xf32>
    %56 = math.tanh %55 : vector<8x128xf32>
    %57 = arith.mulf %55, %56 : vector<8x128xf32>
    %58 = arith.addf %55, %57 : vector<8x128xf32>
    %c0_47 = arith.constant 0 : index
    %c8 = arith.constant 8 : index
    %c0_48 = arith.constant 0 : index
    %59 = vector.load %arg3[%c0_47, %c8, %c0_48] : memref<6x16x128xf32, #tpu.memory_space<vmem>>, vector<1x8x128xf32>
    %60 = vector.shape_cast %59 : vector<1x8x128xf32> to vector<8x128xf32>
    %61 = arith.subf %60, %50 : vector<8x128xf32>
    %cst_49 = arith.constant 5.000000e-01 : f32
    %62 = vector.broadcast %cst_49 : f32 to vector<8x128xf32>
    %63 = arith.mulf %62, %61 : vector<8x128xf32>
    %64 = math.tanh %63 : vector<8x128xf32>
    %65 = arith.mulf %63, %64 : vector<8x128xf32>
    %66 = arith.addf %63, %65 : vector<8x128xf32>
    %cst_50 = arith.constant dense<0.000000e+00> : vector<8x128xf32>
    %67 = tpu.matmul %7, %34, %cst_50 {dimension_numbers = #tpu.dot_dimension_numbers<[1], [0], [0], [1], [0, 0, 1, 1], [], []>} : vector<8x16xf32>, vector<16x128xf32>, vector<8x128xf32> -> vector<8x128xf32>
    %68 = arith.addf %67, %27 : vector<8x128xf32>
    %c1_51 = arith.constant 1 : index
    %c0_52 = arith.constant 0 : index
    %c0_53 = arith.constant 0 : index
    %69 = vector.load %arg3[%c1_51, %c0_52, %c0_53] : memref<6x16x128xf32, #tpu.memory_space<vmem>>, vector<1x8x128xf32>
    %70 = vector.shape_cast %69 : vector<1x8x128xf32> to vector<8x128xf32>
    %71 = arith.addf %68, %70 : vector<8x128xf32>
    %cst_54 = arith.constant 5.000000e-01 : f32
    %72 = vector.broadcast %cst_54 : f32 to vector<8x128xf32>
    %73 = arith.mulf %72, %71 : vector<8x128xf32>
    %74 = math.tanh %73 : vector<8x128xf32>
    %75 = arith.mulf %73, %74 : vector<8x128xf32>
    %76 = arith.addf %73, %75 : vector<8x128xf32>
    %c1_55 = arith.constant 1 : index
    %c8_56 = arith.constant 8 : index
    %c0_57 = arith.constant 0 : index
    %77 = vector.load %arg3[%c1_55, %c8_56, %c0_57] : memref<6x16x128xf32, #tpu.memory_space<vmem>>, vector<1x8x128xf32>
    %78 = vector.shape_cast %77 : vector<1x8x128xf32> to vector<8x128xf32>
    %79 = arith.subf %78, %68 : vector<8x128xf32>
    %cst_58 = arith.constant 5.000000e-01 : f32
    %80 = vector.broadcast %cst_58 : f32 to vector<8x128xf32>
    %81 = arith.mulf %80, %79 : vector<8x128xf32>
    %82 = math.tanh %81 : vector<8x128xf32>
    %83 = arith.mulf %81, %82 : vector<8x128xf32>
    %84 = arith.addf %81, %83 : vector<8x128xf32>
    %cst_59 = arith.constant dense<0.000000e+00> : vector<8x128xf32>
    %85 = tpu.matmul %7, %36, %cst_59 {dimension_numbers = #tpu.dot_dimension_numbers<[1], [0], [0], [1], [0, 0, 1, 1], [], []>} : vector<8x16xf32>, vector<16x128xf32>, vector<8x128xf32> -> vector<8x128xf32>
    %86 = arith.addf %85, %27 : vector<8x128xf32>
    %c2_60 = arith.constant 2 : index
    %c0_61 = arith.constant 0 : index
    %c0_62 = arith.constant 0 : index
    %87 = vector.load %arg3[%c2_60, %c0_61, %c0_62] : memref<6x16x128xf32, #tpu.memory_space<vmem>>, vector<1x8x128xf32>
    %88 = vector.shape_cast %87 : vector<1x8x128xf32> to vector<8x128xf32>
    %89 = arith.addf %86, %88 : vector<8x128xf32>
    %cst_63 = arith.constant 5.000000e-01 : f32
    %90 = vector.broadcast %cst_63 : f32 to vector<8x128xf32>
    %91 = arith.mulf %90, %89 : vector<8x128xf32>
    %92 = math.tanh %91 : vector<8x128xf32>
    %93 = arith.mulf %91, %92 : vector<8x128xf32>
    %94 = arith.addf %91, %93 : vector<8x128xf32>
    %c2_64 = arith.constant 2 : index
    %c8_65 = arith.constant 8 : index
    %c0_66 = arith.constant 0 : index
    %95 = vector.load %arg3[%c2_64, %c8_65, %c0_66] : memref<6x16x128xf32, #tpu.memory_space<vmem>>, vector<1x8x128xf32>
    %96 = vector.shape_cast %95 : vector<1x8x128xf32> to vector<8x128xf32>
    %97 = arith.subf %96, %86 : vector<8x128xf32>
    %cst_67 = arith.constant 5.000000e-01 : f32
    %98 = vector.broadcast %cst_67 : f32 to vector<8x128xf32>
    %99 = arith.mulf %98, %97 : vector<8x128xf32>
    %100 = math.tanh %99 : vector<8x128xf32>
    %101 = arith.mulf %99, %100 : vector<8x128xf32>
    %102 = arith.addf %99, %101 : vector<8x128xf32>
    %cst_68 = arith.constant dense<0.000000e+00> : vector<8x128xf32>
    %103 = tpu.matmul %7, %38, %cst_68 {dimension_numbers = #tpu.dot_dimension_numbers<[1], [0], [0], [1], [0, 0, 1, 1], [], []>} : vector<8x16xf32>, vector<16x128xf32>, vector<8x128xf32> -> vector<8x128xf32>
    %104 = arith.addf %103, %27 : vector<8x128xf32>
    %c3_69 = arith.constant 3 : index
    %c0_70 = arith.constant 0 : index
    %c0_71 = arith.constant 0 : index
    %105 = vector.load %arg3[%c3_69, %c0_70, %c0_71] : memref<6x16x128xf32, #tpu.memory_space<vmem>>, vector<1x8x128xf32>
    %106 = vector.shape_cast %105 : vector<1x8x128xf32> to vector<8x128xf32>
    %107 = arith.addf %104, %106 : vector<8x128xf32>
    %cst_72 = arith.constant 5.000000e-01 : f32
    %108 = vector.broadcast %cst_72 : f32 to vector<8x128xf32>
    %109 = arith.mulf %108, %107 : vector<8x128xf32>
    %110 = math.tanh %109 : vector<8x128xf32>
    %111 = arith.mulf %109, %110 : vector<8x128xf32>
    %112 = arith.addf %109, %111 : vector<8x128xf32>
    %c3_73 = arith.constant 3 : index
    %c8_74 = arith.constant 8 : index
    %c0_75 = arith.constant 0 : index
    %113 = vector.load %arg3[%c3_73, %c8_74, %c0_75] : memref<6x16x128xf32, #tpu.memory_space<vmem>>, vector<1x8x128xf32>
    %114 = vector.shape_cast %113 : vector<1x8x128xf32> to vector<8x128xf32>
    %115 = arith.subf %114, %104 : vector<8x128xf32>
    %cst_76 = arith.constant 5.000000e-01 : f32
    %116 = vector.broadcast %cst_76 : f32 to vector<8x128xf32>
    %117 = arith.mulf %116, %115 : vector<8x128xf32>
    %118 = math.tanh %117 : vector<8x128xf32>
    %119 = arith.mulf %117, %118 : vector<8x128xf32>
    %120 = arith.addf %117, %119 : vector<8x128xf32>
    %cst_77 = arith.constant dense<0.000000e+00> : vector<8x128xf32>
    %121 = tpu.matmul %7, %40, %cst_77 {dimension_numbers = #tpu.dot_dimension_numbers<[1], [0], [0], [1], [0, 0, 1, 1], [], []>} : vector<8x16xf32>, vector<16x128xf32>, vector<8x128xf32> -> vector<8x128xf32>
    %122 = arith.addf %121, %27 : vector<8x128xf32>
    %c4_78 = arith.constant 4 : index
    %c0_79 = arith.constant 0 : index
    %c0_80 = arith.constant 0 : index
    %123 = vector.load %arg3[%c4_78, %c0_79, %c0_80] : memref<6x16x128xf32, #tpu.memory_space<vmem>>, vector<1x8x128xf32>
    %124 = vector.shape_cast %123 : vector<1x8x128xf32> to vector<8x128xf32>
    %125 = arith.addf %122, %124 : vector<8x128xf32>
    %cst_81 = arith.constant 5.000000e-01 : f32
    %126 = vector.broadcast %cst_81 : f32 to vector<8x128xf32>
    %127 = arith.mulf %126, %125 : vector<8x128xf32>
    %128 = math.tanh %127 : vector<8x128xf32>
    %129 = arith.mulf %127, %128 : vector<8x128xf32>
    %130 = arith.addf %127, %129 : vector<8x128xf32>
    %c4_82 = arith.constant 4 : index
    %c8_83 = arith.constant 8 : index
    %c0_84 = arith.constant 0 : index
    %131 = vector.load %arg3[%c4_82, %c8_83, %c0_84] : memref<6x16x128xf32, #tpu.memory_space<vmem>>, vector<1x8x128xf32>
    %132 = vector.shape_cast %131 : vector<1x8x128xf32> to vector<8x128xf32>
    %133 = arith.subf %132, %122 : vector<8x128xf32>
    %cst_85 = arith.constant 5.000000e-01 : f32
    %134 = vector.broadcast %cst_85 : f32 to vector<8x128xf32>
    %135 = arith.mulf %134, %133 : vector<8x128xf32>
    %136 = math.tanh %135 : vector<8x128xf32>
    %137 = arith.mulf %135, %136 : vector<8x128xf32>
    %138 = arith.addf %135, %137 : vector<8x128xf32>
    %cst_86 = arith.constant dense<0.000000e+00> : vector<8x128xf32>
    %139 = tpu.matmul %7, %42, %cst_86 {dimension_numbers = #tpu.dot_dimension_numbers<[1], [0], [0], [1], [0, 0, 1, 1], [], []>} : vector<8x16xf32>, vector<16x128xf32>, vector<8x128xf32> -> vector<8x128xf32>
    %140 = arith.addf %139, %27 : vector<8x128xf32>
    %c5_87 = arith.constant 5 : index
    %c0_88 = arith.constant 0 : index
    %c0_89 = arith.constant 0 : index
    %141 = vector.load %arg3[%c5_87, %c0_88, %c0_89] : memref<6x16x128xf32, #tpu.memory_space<vmem>>, vector<1x8x128xf32>
    %142 = vector.shape_cast %141 : vector<1x8x128xf32> to vector<8x128xf32>
    %143 = arith.addf %140, %142 : vector<8x128xf32>
    %cst_90 = arith.constant 5.000000e-01 : f32
    %144 = vector.broadcast %cst_90 : f32 to vector<8x128xf32>
    %145 = arith.mulf %144, %143 : vector<8x128xf32>
    %146 = math.tanh %145 : vector<8x128xf32>
    %147 = arith.mulf %145, %146 : vector<8x128xf32>
    %148 = arith.addf %145, %147 : vector<8x128xf32>
    %c5_91 = arith.constant 5 : index
    %c8_92 = arith.constant 8 : index
    %c0_93 = arith.constant 0 : index
    %149 = vector.load %arg3[%c5_91, %c8_92, %c0_93] : memref<6x16x128xf32, #tpu.memory_space<vmem>>, vector<1x8x128xf32>
    %150 = vector.shape_cast %149 : vector<1x8x128xf32> to vector<8x128xf32>
    %151 = arith.subf %150, %140 : vector<8x128xf32>
    %cst_94 = arith.constant 5.000000e-01 : f32
    %152 = vector.broadcast %cst_94 : f32 to vector<8x128xf32>
    %153 = arith.mulf %152, %151 : vector<8x128xf32>
    %154 = math.tanh %153 : vector<8x128xf32>
    %155 = arith.mulf %153, %154 : vector<8x128xf32>
    %156 = arith.addf %153, %155 : vector<8x128xf32>
    %cst_95 = arith.constant dense<0.000000e+00> : vector<8x128xf32>
    %157 = tpu.matmul %1, %32, %cst_95 {dimension_numbers = #tpu.dot_dimension_numbers<[1], [0], [0], [1], [0, 0, 1, 1], [], []>} : vector<8x16xf32>, vector<16x128xf32>, vector<8x128xf32> -> vector<8x128xf32>
    %cst_96 = arith.constant dense<0.000000e+00> : vector<8x128xf32>
    %158 = tpu.matmul %1, %34, %cst_96 {dimension_numbers = #tpu.dot_dimension_numbers<[1], [0], [0], [1], [0, 0, 1, 1], [], []>} : vector<8x16xf32>, vector<16x128xf32>, vector<8x128xf32> -> vector<8x128xf32>
    %159 = arith.addf %157, %158 : vector<8x128xf32>
    %160 = arith.subf %32, %34 : vector<16x128xf32>
    %161 = math.absf %160 : vector<16x128xf32>
    %cst_97 = arith.constant dense<0.000000e+00> : vector<8x128xf32>
    %162 = tpu.matmul %3, %161, %cst_97 {dimension_numbers = #tpu.dot_dimension_numbers<[1], [0], [0], [1], [0, 0, 1, 1], [], []>} : vector<8x16xf32>, vector<16x128xf32>, vector<8x128xf32> -> vector<8x128xf32>
    %163 = arith.addf %159, %162 : vector<8x128xf32>
    %cst_98 = arith.constant dense<0.000000e+00> : vector<8x128xf32>
    %164 = tpu.matmul %5, %44, %cst_98 {dimension_numbers = #tpu.dot_dimension_numbers<[1], [0], [0], [1], [0, 0, 1, 1], [], []>} : vector<8x16xf32>, vector<16x128xf32>, vector<8x128xf32> -> vector<8x128xf32>
    %165 = arith.addf %163, %164 : vector<8x128xf32>
    %166 = arith.addf %165, %24 : vector<8x128xf32>
    %c0_99 = arith.constant 0 : index
    %c0_100 = arith.constant 0 : index
    %c0_101 = arith.constant 0 : index
    %167 = vector.load %arg4[%c0_99, %c0_100, %c0_101] : memref<3x16x128xf32, #tpu.memory_space<vmem>>, vector<1x8x128xf32>
    %168 = vector.shape_cast %167 : vector<1x8x128xf32> to vector<8x128xf32>
    %169 = arith.addf %166, %168 : vector<8x128xf32>
    %cst_102 = arith.constant 5.000000e-01 : f32
    %170 = vector.broadcast %cst_102 : f32 to vector<8x128xf32>
    %171 = arith.mulf %170, %169 : vector<8x128xf32>
    %172 = math.tanh %171 : vector<8x128xf32>
    %173 = arith.mulf %171, %172 : vector<8x128xf32>
    %174 = arith.addf %171, %173 : vector<8x128xf32>
    %c0_103 = arith.constant 0 : index
    %c8_104 = arith.constant 8 : index
    %c0_105 = arith.constant 0 : index
    %175 = vector.load %arg4[%c0_103, %c8_104, %c0_105] : memref<3x16x128xf32, #tpu.memory_space<vmem>>, vector<1x8x128xf32>
    %176 = vector.shape_cast %175 : vector<1x8x128xf32> to vector<8x128xf32>
    %177 = arith.subf %176, %166 : vector<8x128xf32>
    %cst_106 = arith.constant 5.000000e-01 : f32
    %178 = vector.broadcast %cst_106 : f32 to vector<8x128xf32>
    %179 = arith.mulf %178, %177 : vector<8x128xf32>
    %180 = math.tanh %179 : vector<8x128xf32>
    %181 = arith.mulf %179, %180 : vector<8x128xf32>
    %182 = arith.addf %179, %181 : vector<8x128xf32>
    %cst_107 = arith.constant dense<0.000000e+00> : vector<8x128xf32>
    %183 = tpu.matmul %1, %36, %cst_107 {dimension_numbers = #tpu.dot_dimension_numbers<[1], [0], [0], [1], [0, 0, 1, 1], [], []>} : vector<8x16xf32>, vector<16x128xf32>, vector<8x128xf32> -> vector<8x128xf32>
    %cst_108 = arith.constant dense<0.000000e+00> : vector<8x128xf32>
    %184 = tpu.matmul %1, %38, %cst_108 {dimension_numbers = #tpu.dot_dimension_numbers<[1], [0], [0], [1], [0, 0, 1, 1], [], []>} : vector<8x16xf32>, vector<16x128xf32>, vector<8x128xf32> -> vector<8x128xf32>
    %185 = arith.addf %183, %184 : vector<8x128xf32>
    %186 = arith.subf %36, %38 : vector<16x128xf32>
    %187 = math.absf %186 : vector<16x128xf32>
    %cst_109 = arith.constant dense<0.000000e+00> : vector<8x128xf32>
    %188 = tpu.matmul %3, %187, %cst_109 {dimension_numbers = #tpu.dot_dimension_numbers<[1], [0], [0], [1], [0, 0, 1, 1], [], []>} : vector<8x16xf32>, vector<16x128xf32>, vector<8x128xf32> -> vector<8x128xf32>
    %189 = arith.addf %185, %188 : vector<8x128xf32>
    %cst_110 = arith.constant dense<0.000000e+00> : vector<8x128xf32>
    %190 = tpu.matmul %5, %46, %cst_110 {dimension_numbers = #tpu.dot_dimension_numbers<[1], [0], [0], [1], [0, 0, 1, 1], [], []>} : vector<8x16xf32>, vector<16x128xf32>, vector<8x128xf32> -> vector<8x128xf32>
    %191 = arith.addf %189, %190 : vector<8x128xf32>
    %192 = arith.addf %191, %24 : vector<8x128xf32>
    %c1_111 = arith.constant 1 : index
    %c0_112 = arith.constant 0 : index
    %c0_113 = arith.constant 0 : index
    %193 = vector.load %arg4[%c1_111, %c0_112, %c0_113] : memref<3x16x128xf32, #tpu.memory_space<vmem>>, vector<1x8x128xf32>
    %194 = vector.shape_cast %193 : vector<1x8x128xf32> to vector<8x128xf32>
    %195 = arith.addf %192, %194 : vector<8x128xf32>
    %cst_114 = arith.constant 5.000000e-01 : f32
    %196 = vector.broadcast %cst_114 : f32 to vector<8x128xf32>
    %197 = arith.mulf %196, %195 : vector<8x128xf32>
    %198 = math.tanh %197 : vector<8x128xf32>
    %199 = arith.mulf %197, %198 : vector<8x128xf32>
    %200 = arith.addf %197, %199 : vector<8x128xf32>
    %c1_115 = arith.constant 1 : index
    %c8_116 = arith.constant 8 : index
    %c0_117 = arith.constant 0 : index
    %201 = vector.load %arg4[%c1_115, %c8_116, %c0_117] : memref<3x16x128xf32, #tpu.memory_space<vmem>>, vector<1x8x128xf32>
    %202 = vector.shape_cast %201 : vector<1x8x128xf32> to vector<8x128xf32>
    %203 = arith.subf %202, %192 : vector<8x128xf32>
    %cst_118 = arith.constant 5.000000e-01 : f32
    %204 = vector.broadcast %cst_118 : f32 to vector<8x128xf32>
    %205 = arith.mulf %204, %203 : vector<8x128xf32>
    %206 = math.tanh %205 : vector<8x128xf32>
    %207 = arith.mulf %205, %206 : vector<8x128xf32>
    %208 = arith.addf %205, %207 : vector<8x128xf32>
    %cst_119 = arith.constant dense<0.000000e+00> : vector<8x128xf32>
    %209 = tpu.matmul %1, %40, %cst_119 {dimension_numbers = #tpu.dot_dimension_numbers<[1], [0], [0], [1], [0, 0, 1, 1], [], []>} : vector<8x16xf32>, vector<16x128xf32>, vector<8x128xf32> -> vector<8x128xf32>
    %cst_120 = arith.constant dense<0.000000e+00> : vector<8x128xf32>
    %210 = tpu.matmul %1, %42, %cst_120 {dimension_numbers = #tpu.dot_dimension_numbers<[1], [0], [0], [1], [0, 0, 1, 1], [], []>} : vector<8x16xf32>, vector<16x128xf32>, vector<8x128xf32> -> vector<8x128xf32>
    %211 = arith.addf %209, %210 : vector<8x128xf32>
    %212 = arith.subf %40, %42 : vector<16x128xf32>
    %213 = math.absf %212 : vector<16x128xf32>
    %cst_121 = arith.constant dense<0.000000e+00> : vector<8x128xf32>
    %214 = tpu.matmul %3, %213, %cst_121 {dimension_numbers = #tpu.dot_dimension_numbers<[1], [0], [0], [1], [0, 0, 1, 1], [], []>} : vector<8x16xf32>, vector<16x128xf32>, vector<8x128xf32> -> vector<8x128xf32>
    %215 = arith.addf %211, %214 : vector<8x128xf32>
    %cst_122 = arith.constant dense<0.000000e+00> : vector<8x128xf32>
    %216 = tpu.matmul %5, %48, %cst_122 {dimension_numbers = #tpu.dot_dimension_numbers<[1], [0], [0], [1], [0, 0, 1, 1], [], []>} : vector<8x16xf32>, vector<16x128xf32>, vector<8x128xf32> -> vector<8x128xf32>
    %217 = arith.addf %215, %216 : vector<8x128xf32>
    %218 = arith.addf %217, %24 : vector<8x128xf32>
    %c2_123 = arith.constant 2 : index
    %c0_124 = arith.constant 0 : index
    %c0_125 = arith.constant 0 : index
    %219 = vector.load %arg4[%c2_123, %c0_124, %c0_125] : memref<3x16x128xf32, #tpu.memory_space<vmem>>, vector<1x8x128xf32>
    %220 = vector.shape_cast %219 : vector<1x8x128xf32> to vector<8x128xf32>
    %221 = arith.addf %218, %220 : vector<8x128xf32>
    %cst_126 = arith.constant 5.000000e-01 : f32
    %222 = vector.broadcast %cst_126 : f32 to vector<8x128xf32>
    %223 = arith.mulf %222, %221 : vector<8x128xf32>
    %224 = math.tanh %223 : vector<8x128xf32>
    %225 = arith.mulf %223, %224 : vector<8x128xf32>
    %226 = arith.addf %223, %225 : vector<8x128xf32>
    %c2_127 = arith.constant 2 : index
    %c8_128 = arith.constant 8 : index
    %c0_129 = arith.constant 0 : index
    %227 = vector.load %arg4[%c2_127, %c8_128, %c0_129] : memref<3x16x128xf32, #tpu.memory_space<vmem>>, vector<1x8x128xf32>
    %228 = vector.shape_cast %227 : vector<1x8x128xf32> to vector<8x128xf32>
    %229 = arith.subf %228, %218 : vector<8x128xf32>
    %cst_130 = arith.constant 5.000000e-01 : f32
    %230 = vector.broadcast %cst_130 : f32 to vector<8x128xf32>
    %231 = arith.mulf %230, %229 : vector<8x128xf32>
    %232 = math.tanh %231 : vector<8x128xf32>
    %233 = arith.mulf %231, %232 : vector<8x128xf32>
    %234 = arith.addf %231, %233 : vector<8x128xf32>
    %cst_131 = arith.constant dense<0.000000e+00> : vector<8x128xf32>
    %235 = tpu.matmul %16, %58, %cst_131 {dimension_numbers = #tpu.dot_dimension_numbers<[1], [0], [0], [1], [0, 0, 1, 1], [], []>} : vector<8x8xf32>, vector<8x128xf32>, vector<8x128xf32> -> vector<8x128xf32>
    %cst_132 = arith.constant dense<0.000000e+00> : vector<8x128xf32>
    %236 = tpu.matmul %17, %66, %cst_132 {dimension_numbers = #tpu.dot_dimension_numbers<[1], [0], [0], [1], [0, 0, 1, 1], [], []>} : vector<8x8xf32>, vector<8x128xf32>, vector<8x128xf32> -> vector<8x128xf32>
    %237 = arith.addf %235, %236 : vector<8x128xf32>
    %cst_133 = arith.constant dense<0.000000e+00> : vector<8x128xf32>
    %238 = tpu.matmul %16, %76, %cst_133 {dimension_numbers = #tpu.dot_dimension_numbers<[1], [0], [0], [1], [0, 0, 1, 1], [], []>} : vector<8x8xf32>, vector<8x128xf32>, vector<8x128xf32> -> vector<8x128xf32>
    %239 = arith.addf %237, %238 : vector<8x128xf32>
    %cst_134 = arith.constant dense<0.000000e+00> : vector<8x128xf32>
    %240 = tpu.matmul %17, %84, %cst_134 {dimension_numbers = #tpu.dot_dimension_numbers<[1], [0], [0], [1], [0, 0, 1, 1], [], []>} : vector<8x8xf32>, vector<8x128xf32>, vector<8x128xf32> -> vector<8x128xf32>
    %241 = arith.addf %239, %240 : vector<8x128xf32>
    %242 = arith.subf %58, %76 : vector<8x128xf32>
    %243 = math.absf %242 : vector<8x128xf32>
    %cst_135 = arith.constant dense<0.000000e+00> : vector<8x128xf32>
    %244 = tpu.matmul %18, %243, %cst_135 {dimension_numbers = #tpu.dot_dimension_numbers<[1], [0], [0], [1], [0, 0, 1, 1], [], []>} : vector<8x8xf32>, vector<8x128xf32>, vector<8x128xf32> -> vector<8x128xf32>
    %245 = arith.addf %241, %244 : vector<8x128xf32>
    %246 = arith.subf %66, %84 : vector<8x128xf32>
    %247 = math.absf %246 : vector<8x128xf32>
    %cst_136 = arith.constant dense<0.000000e+00> : vector<8x128xf32>
    %248 = tpu.matmul %19, %247, %cst_136 {dimension_numbers = #tpu.dot_dimension_numbers<[1], [0], [0], [1], [0, 0, 1, 1], [], []>} : vector<8x8xf32>, vector<8x128xf32>, vector<8x128xf32> -> vector<8x128xf32>
    %249 = arith.addf %245, %248 : vector<8x128xf32>
    %cst_137 = arith.constant dense<0.000000e+00> : vector<8x128xf32>
    %250 = tpu.matmul %20, %174, %cst_137 {dimension_numbers = #tpu.dot_dimension_numbers<[1], [0], [0], [1], [0, 0, 1, 1], [], []>} : vector<8x8xf32>, vector<8x128xf32>, vector<8x128xf32> -> vector<8x128xf32>
    %251 = arith.addf %249, %250 : vector<8x128xf32>
    %cst_138 = arith.constant dense<0.000000e+00> : vector<8x128xf32>
    %252 = tpu.matmul %21, %182, %cst_138 {dimension_numbers = #tpu.dot_dimension_numbers<[1], [0], [0], [1], [0, 0, 1, 1], [], []>} : vector<8x8xf32>, vector<8x128xf32>, vector<8x128xf32> -> vector<8x128xf32>
    %253 = arith.addf %251, %252 : vector<8x128xf32>
    %254 = arith.addf %253, %30 : vector<8x128xf32>
    %c0_139 = arith.constant 0 : index
    %c0_140 = arith.constant 0 : index
    %c0_141 = arith.constant 0 : index
    %255 = vector.load %arg4[%c0_139, %c0_140, %c0_141] : memref<3x16x128xf32, #tpu.memory_space<vmem>>, vector<1x8x128xf32>
    %256 = vector.shape_cast %255 : vector<1x8x128xf32> to vector<8x128xf32>
    %257 = arith.addf %254, %256 : vector<8x128xf32>
    %c0_142 = arith.constant 0 : index
    %c8_143 = arith.constant 8 : index
    %c0_144 = arith.constant 0 : index
    %258 = vector.load %arg4[%c0_142, %c8_143, %c0_144] : memref<3x16x128xf32, #tpu.memory_space<vmem>>, vector<1x8x128xf32>
    %259 = vector.shape_cast %258 : vector<1x8x128xf32> to vector<8x128xf32>
    %260 = arith.subf %259, %254 : vector<8x128xf32>
    %c0_145 = arith.constant 0 : index
    %c0_146 = arith.constant 0 : index
    %c0_147 = arith.constant 0 : index
    %261 = vector.load %arg7[%c0_145, %c0_146, %c0_147] : memref<3x16x128xf32, #tpu.memory_space<vmem>>, vector<1x8x128xf32>
    %262 = vector.shape_cast %261 : vector<1x8x128xf32> to vector<8x128xf32>
    %263 = vector.shape_cast %257 : vector<8x128xf32> to vector<1x8x128xf32>
    tpu.vector_store %arg7[%c0_145, %c0_146, %c0_147], %263 {strides = array<i32>} : memref<3x16x128xf32, #tpu.memory_space<vmem>>, vector<1x8x128xf32>,
    %c0_148 = arith.constant 0 : index
    %c8_149 = arith.constant 8 : index
    %c0_150 = arith.constant 0 : index
    %264 = vector.load %arg7[%c0_148, %c8_149, %c0_150] : memref<3x16x128xf32, #tpu.memory_space<vmem>>, vector<1x8x128xf32>
    %265 = vector.shape_cast %264 : vector<1x8x128xf32> to vector<8x128xf32>
    %266 = vector.shape_cast %260 : vector<8x128xf32> to vector<1x8x128xf32>
    tpu.vector_store %arg7[%c0_148, %c8_149, %c0_150], %266 {strides = array<i32>} : memref<3x16x128xf32, #tpu.memory_space<vmem>>, vector<1x8x128xf32>,
    %cst_151 = arith.constant 5.000000e-01 : f32
    %267 = vector.broadcast %cst_151 : f32 to vector<8x128xf32>
    %268 = arith.mulf %267, %257 : vector<8x128xf32>
    %269 = math.tanh %268 : vector<8x128xf32>
    %270 = arith.mulf %268, %269 : vector<8x128xf32>
    %271 = arith.addf %268, %270 : vector<8x128xf32>
    %c0_152 = arith.constant 0 : index
    %c0_153 = arith.constant 0 : index
    %c0_154 = arith.constant 0 : index
    %272 = vector.load %arg6[%c0_152, %c0_153, %c0_154] : memref<3x16x128xf32, #tpu.memory_space<vmem>>, vector<1x8x128xf32>
    %273 = vector.shape_cast %272 : vector<1x8x128xf32> to vector<8x128xf32>
    %274 = vector.shape_cast %271 : vector<8x128xf32> to vector<1x8x128xf32>
    tpu.vector_store %arg6[%c0_152, %c0_153, %c0_154], %274 {strides = array<i32>} : memref<3x16x128xf32, #tpu.memory_space<vmem>>, vector<1x8x128xf32>,
    %cst_155 = arith.constant 5.000000e-01 : f32
    %275 = vector.broadcast %cst_155 : f32 to vector<8x128xf32>
    %276 = arith.mulf %275, %260 : vector<8x128xf32>
    %277 = math.tanh %276 : vector<8x128xf32>
    %278 = arith.mulf %276, %277 : vector<8x128xf32>
    %279 = arith.addf %276, %278 : vector<8x128xf32>
    %c0_156 = arith.constant 0 : index
    %c8_157 = arith.constant 8 : index
    %c0_158 = arith.constant 0 : index
    %280 = vector.load %arg6[%c0_156, %c8_157, %c0_158] : memref<3x16x128xf32, #tpu.memory_space<vmem>>, vector<1x8x128xf32>
    %281 = vector.shape_cast %280 : vector<1x8x128xf32> to vector<8x128xf32>
    %282 = vector.shape_cast %279 : vector<8x128xf32> to vector<1x8x128xf32>
    tpu.vector_store %arg6[%c0_156, %c8_157, %c0_158], %282 {strides = array<i32>} : memref<3x16x128xf32, #tpu.memory_space<vmem>>, vector<1x8x128xf32>,
    %cst_159 = arith.constant dense<0.000000e+00> : vector<8x128xf32>
    %283 = tpu.matmul %16, %94, %cst_159 {dimension_numbers = #tpu.dot_dimension_numbers<[1], [0], [0], [1], [0, 0, 1, 1], [], []>} : vector<8x8xf32>, vector<8x128xf32>, vector<8x128xf32> -> vector<8x128xf32>
    %cst_160 = arith.constant dense<0.000000e+00> : vector<8x128xf32>
    %284 = tpu.matmul %17, %102, %cst_160 {dimension_numbers = #tpu.dot_dimension_numbers<[1], [0], [0], [1], [0, 0, 1, 1], [], []>} : vector<8x8xf32>, vector<8x128xf32>, vector<8x128xf32> -> vector<8x128xf32>
    %285 = arith.addf %283, %284 : vector<8x128xf32>
    %cst_161 = arith.constant dense<0.000000e+00> : vector<8x128xf32>
    %286 = tpu.matmul %16, %112, %cst_161 {dimension_numbers = #tpu.dot_dimension_numbers<[1], [0], [0], [1], [0, 0, 1, 1], [], []>} : vector<8x8xf32>, vector<8x128xf32>, vector<8x128xf32> -> vector<8x128xf32>
    %287 = arith.addf %285, %286 : vector<8x128xf32>
    %cst_162 = arith.constant dense<0.000000e+00> : vector<8x128xf32>
    %288 = tpu.matmul %17, %120, %cst_162 {dimension_numbers = #tpu.dot_dimension_numbers<[1], [0], [0], [1], [0, 0, 1, 1], [], []>} : vector<8x8xf32>, vector<8x128xf32>, vector<8x128xf32> -> vector<8x128xf32>
    %289 = arith.addf %287, %288 : vector<8x128xf32>
    %290 = arith.subf %94, %112 : vector<8x128xf32>
    %291 = math.absf %290 : vector<8x128xf32>
    %cst_163 = arith.constant dense<0.000000e+00> : vector<8x128xf32>
    %292 = tpu.matmul %18, %291, %cst_163 {dimension_numbers = #tpu.dot_dimension_numbers<[1], [0], [0], [1], [0, 0, 1, 1], [], []>} : vector<8x8xf32>, vector<8x128xf32>, vector<8x128xf32> -> vector<8x128xf32>
    %293 = arith.addf %289, %292 : vector<8x128xf32>
    %294 = arith.subf %102, %120 : vector<8x128xf32>
    %295 = math.absf %294 : vector<8x128xf32>
    %cst_164 = arith.constant dense<0.000000e+00> : vector<8x128xf32>
    %296 = tpu.matmul %19, %295, %cst_164 {dimension_numbers = #tpu.dot_dimension_numbers<[1], [0], [0], [1], [0, 0, 1, 1], [], []>} : vector<8x8xf32>, vector<8x128xf32>, vector<8x128xf32> -> vector<8x128xf32>
    %297 = arith.addf %293, %296 : vector<8x128xf32>
    %cst_165 = arith.constant dense<0.000000e+00> : vector<8x128xf32>
    %298 = tpu.matmul %20, %200, %cst_165 {dimension_numbers = #tpu.dot_dimension_numbers<[1], [0], [0], [1], [0, 0, 1, 1], [], []>} : vector<8x8xf32>, vector<8x128xf32>, vector<8x128xf32> -> vector<8x128xf32>
    %299 = arith.addf %297, %298 : vector<8x128xf32>
    %cst_166 = arith.constant dense<0.000000e+00> : vector<8x128xf32>
    %300 = tpu.matmul %21, %208, %cst_166 {dimension_numbers = #tpu.dot_dimension_numbers<[1], [0], [0], [1], [0, 0, 1, 1], [], []>} : vector<8x8xf32>, vector<8x128xf32>, vector<8x128xf32> -> vector<8x128xf32>
    %301 = arith.addf %299, %300 : vector<8x128xf32>
    %302 = arith.addf %301, %30 : vector<8x128xf32>
    %c1_167 = arith.constant 1 : index
    %c0_168 = arith.constant 0 : index
    %c0_169 = arith.constant 0 : index
    %303 = vector.load %arg4[%c1_167, %c0_168, %c0_169] : memref<3x16x128xf32, #tpu.memory_space<vmem>>, vector<1x8x128xf32>
    %304 = vector.shape_cast %303 : vector<1x8x128xf32> to vector<8x128xf32>
    %305 = arith.addf %302, %304 : vector<8x128xf32>
    %c1_170 = arith.constant 1 : index
    %c8_171 = arith.constant 8 : index
    %c0_172 = arith.constant 0 : index
    %306 = vector.load %arg4[%c1_170, %c8_171, %c0_172] : memref<3x16x128xf32, #tpu.memory_space<vmem>>, vector<1x8x128xf32>
    %307 = vector.shape_cast %306 : vector<1x8x128xf32> to vector<8x128xf32>
    %308 = arith.subf %307, %302 : vector<8x128xf32>
    %c1_173 = arith.constant 1 : index
    %c0_174 = arith.constant 0 : index
    %c0_175 = arith.constant 0 : index
    %309 = vector.load %arg7[%c1_173, %c0_174, %c0_175] : memref<3x16x128xf32, #tpu.memory_space<vmem>>, vector<1x8x128xf32>
    %310 = vector.shape_cast %309 : vector<1x8x128xf32> to vector<8x128xf32>
    %311 = vector.shape_cast %305 : vector<8x128xf32> to vector<1x8x128xf32>
    tpu.vector_store %arg7[%c1_173, %c0_174, %c0_175], %311 {strides = array<i32>} : memref<3x16x128xf32, #tpu.memory_space<vmem>>, vector<1x8x128xf32>,
    %c1_176 = arith.constant 1 : index
    %c8_177 = arith.constant 8 : index
    %c0_178 = arith.constant 0 : index
    %312 = vector.load %arg7[%c1_176, %c8_177, %c0_178] : memref<3x16x128xf32, #tpu.memory_space<vmem>>, vector<1x8x128xf32>
    %313 = vector.shape_cast %312 : vector<1x8x128xf32> to vector<8x128xf32>
    %314 = vector.shape_cast %308 : vector<8x128xf32> to vector<1x8x128xf32>
    tpu.vector_store %arg7[%c1_176, %c8_177, %c0_178], %314 {strides = array<i32>} : memref<3x16x128xf32, #tpu.memory_space<vmem>>, vector<1x8x128xf32>,
    %cst_179 = arith.constant 5.000000e-01 : f32
    %315 = vector.broadcast %cst_179 : f32 to vector<8x128xf32>
    %316 = arith.mulf %315, %305 : vector<8x128xf32>
    %317 = math.tanh %316 : vector<8x128xf32>
    %318 = arith.mulf %316, %317 : vector<8x128xf32>
    %319 = arith.addf %316, %318 : vector<8x128xf32>
    %c1_180 = arith.constant 1 : index
    %c0_181 = arith.constant 0 : index
    %c0_182 = arith.constant 0 : index
    %320 = vector.load %arg6[%c1_180, %c0_181, %c0_182] : memref<3x16x128xf32, #tpu.memory_space<vmem>>, vector<1x8x128xf32>
    %321 = vector.shape_cast %320 : vector<1x8x128xf32> to vector<8x128xf32>
    %322 = vector.shape_cast %319 : vector<8x128xf32> to vector<1x8x128xf32>
    tpu.vector_store %arg6[%c1_180, %c0_181, %c0_182], %322 {strides = array<i32>} : memref<3x16x128xf32, #tpu.memory_space<vmem>>, vector<1x8x128xf32>,
    %cst_183 = arith.constant 5.000000e-01 : f32
    %323 = vector.broadcast %cst_183 : f32 to vector<8x128xf32>
    %324 = arith.mulf %323, %308 : vector<8x128xf32>
    %325 = math.tanh %324 : vector<8x128xf32>
    %326 = arith.mulf %324, %325 : vector<8x128xf32>
    %327 = arith.addf %324, %326 : vector<8x128xf32>
    %c1_184 = arith.constant 1 : index
    %c8_185 = arith.constant 8 : index
    %c0_186 = arith.constant 0 : index
    %328 = vector.load %arg6[%c1_184, %c8_185, %c0_186] : memref<3x16x128xf32, #tpu.memory_space<vmem>>, vector<1x8x128xf32>
    %329 = vector.shape_cast %328 : vector<1x8x128xf32> to vector<8x128xf32>
    %330 = vector.shape_cast %327 : vector<8x128xf32> to vector<1x8x128xf32>
    tpu.vector_store %arg6[%c1_184, %c8_185, %c0_186], %330 {strides = array<i32>} : memref<3x16x128xf32, #tpu.memory_space<vmem>>, vector<1x8x128xf32>,
    %cst_187 = arith.constant dense<0.000000e+00> : vector<8x128xf32>
    %331 = tpu.matmul %16, %130, %cst_187 {dimension_numbers = #tpu.dot_dimension_numbers<[1], [0], [0], [1], [0, 0, 1, 1], [], []>} : vector<8x8xf32>, vector<8x128xf32>, vector<8x128xf32> -> vector<8x128xf32>
    %cst_188 = arith.constant dense<0.000000e+00> : vector<8x128xf32>
    %332 = tpu.matmul %17, %138, %cst_188 {dimension_numbers = #tpu.dot_dimension_numbers<[1], [0], [0], [1], [0, 0, 1, 1], [], []>} : vector<8x8xf32>, vector<8x128xf32>, vector<8x128xf32> -> vector<8x128xf32>
    %333 = arith.addf %331, %332 : vector<8x128xf32>
    %cst_189 = arith.constant dense<0.000000e+00> : vector<8x128xf32>
    %334 = tpu.matmul %16, %148, %cst_189 {dimension_numbers = #tpu.dot_dimension_numbers<[1], [0], [0], [1], [0, 0, 1, 1], [], []>} : vector<8x8xf32>, vector<8x128xf32>, vector<8x128xf32> -> vector<8x128xf32>
    %335 = arith.addf %333, %334 : vector<8x128xf32>
    %cst_190 = arith.constant dense<0.000000e+00> : vector<8x128xf32>
    %336 = tpu.matmul %17, %156, %cst_190 {dimension_numbers = #tpu.dot_dimension_numbers<[1], [0], [0], [1], [0, 0, 1, 1], [], []>} : vector<8x8xf32>, vector<8x128xf32>, vector<8x128xf32> -> vector<8x128xf32>
    %337 = arith.addf %335, %336 : vector<8x128xf32>
    %338 = arith.subf %130, %148 : vector<8x128xf32>
    %339 = math.absf %338 : vector<8x128xf32>
    %cst_191 = arith.constant dense<0.000000e+00> : vector<8x128xf32>
    %340 = tpu.matmul %18, %339, %cst_191 {dimension_numbers = #tpu.dot_dimension_numbers<[1], [0], [0], [1], [0, 0, 1, 1], [], []>} : vector<8x8xf32>, vector<8x128xf32>, vector<8x128xf32> -> vector<8x128xf32>
    %341 = arith.addf %337, %340 : vector<8x128xf32>
    %342 = arith.subf %138, %156 : vector<8x128xf32>
    %343 = math.absf %342 : vector<8x128xf32>
    %cst_192 = arith.constant dense<0.000000e+00> : vector<8x128xf32>
    %344 = tpu.matmul %19, %343, %cst_192 {dimension_numbers = #tpu.dot_dimension_numbers<[1], [0], [0], [1], [0, 0, 1, 1], [], []>} : vector<8x8xf32>, vector<8x128xf32>, vector<8x128xf32> -> vector<8x128xf32>
    %345 = arith.addf %341, %344 : vector<8x128xf32>
    %cst_193 = arith.constant dense<0.000000e+00> : vector<8x128xf32>
    %346 = tpu.matmul %20, %226, %cst_193 {dimension_numbers = #tpu.dot_dimension_numbers<[1], [0], [0], [1], [0, 0, 1, 1], [], []>} : vector<8x8xf32>, vector<8x128xf32>, vector<8x128xf32> -> vector<8x128xf32>
    %347 = arith.addf %345, %346 : vector<8x128xf32>
    %cst_194 = arith.constant dense<0.000000e+00> : vector<8x128xf32>
    %348 = tpu.matmul %21, %234, %cst_194 {dimension_numbers = #tpu.dot_dimension_numbers<[1], [0], [0], [1], [0, 0, 1, 1], [], []>} : vector<8x8xf32>, vector<8x128xf32>, vector<8x128xf32> -> vector<8x128xf32>
    %349 = arith.addf %347, %348 : vector<8x128xf32>
    %350 = arith.addf %349, %30 : vector<8x128xf32>
    %c2_195 = arith.constant 2 : index
    %c0_196 = arith.constant 0 : index
    %c0_197 = arith.constant 0 : index
    %351 = vector.load %arg4[%c2_195, %c0_196, %c0_197] : memref<3x16x128xf32, #tpu.memory_space<vmem>>, vector<1x8x128xf32>
    %352 = vector.shape_cast %351 : vector<1x8x128xf32> to vector<8x128xf32>
    %353 = arith.addf %350, %352 : vector<8x128xf32>
    %c2_198 = arith.constant 2 : index
    %c8_199 = arith.constant 8 : index
    %c0_200 = arith.constant 0 : index
    %354 = vector.load %arg4[%c2_198, %c8_199, %c0_200] : memref<3x16x128xf32, #tpu.memory_space<vmem>>, vector<1x8x128xf32>
    %355 = vector.shape_cast %354 : vector<1x8x128xf32> to vector<8x128xf32>
    %356 = arith.subf %355, %350 : vector<8x128xf32>
    %c2_201 = arith.constant 2 : index
    %c0_202 = arith.constant 0 : index
    %c0_203 = arith.constant 0 : index
    %357 = vector.load %arg7[%c2_201, %c0_202, %c0_203] : memref<3x16x128xf32, #tpu.memory_space<vmem>>, vector<1x8x128xf32>
    %358 = vector.shape_cast %357 : vector<1x8x128xf32> to vector<8x128xf32>
    %359 = vector.shape_cast %353 : vector<8x128xf32> to vector<1x8x128xf32>
    tpu.vector_store %arg7[%c2_201, %c0_202, %c0_203], %359 {strides = array<i32>} : memref<3x16x128xf32, #tpu.memory_space<vmem>>, vector<1x8x128xf32>,
    %c2_204 = arith.constant 2 : index
    %c8_205 = arith.constant 8 : index
    %c0_206 = arith.constant 0 : index
    %360 = vector.load %arg7[%c2_204, %c8_205, %c0_206] : memref<3x16x128xf32, #tpu.memory_space<vmem>>, vector<1x8x128xf32>
    %361 = vector.shape_cast %360 : vector<1x8x128xf32> to vector<8x128xf32>
    %362 = vector.shape_cast %356 : vector<8x128xf32> to vector<1x8x128xf32>
    tpu.vector_store %arg7[%c2_204, %c8_205, %c0_206], %362 {strides = array<i32>} : memref<3x16x128xf32, #tpu.memory_space<vmem>>, vector<1x8x128xf32>,
    %cst_207 = arith.constant 5.000000e-01 : f32
    %363 = vector.broadcast %cst_207 : f32 to vector<8x128xf32>
    %364 = arith.mulf %363, %353 : vector<8x128xf32>
    %365 = math.tanh %364 : vector<8x128xf32>
    %366 = arith.mulf %364, %365 : vector<8x128xf32>
    %367 = arith.addf %364, %366 : vector<8x128xf32>
    %c2_208 = arith.constant 2 : index
    %c0_209 = arith.constant 0 : index
    %c0_210 = arith.constant 0 : index
    %368 = vector.load %arg6[%c2_208, %c0_209, %c0_210] : memref<3x16x128xf32, #tpu.memory_space<vmem>>, vector<1x8x128xf32>
    %369 = vector.shape_cast %368 : vector<1x8x128xf32> to vector<8x128xf32>
    %370 = vector.shape_cast %367 : vector<8x128xf32> to vector<1x8x128xf32>
    tpu.vector_store %arg6[%c2_208, %c0_209, %c0_210], %370 {strides = array<i32>} : memref<3x16x128xf32, #tpu.memory_space<vmem>>, vector<1x8x128xf32>,
    %cst_211 = arith.constant 5.000000e-01 : f32
    %371 = vector.broadcast %cst_211 : f32 to vector<8x128xf32>
    %372 = arith.mulf %371, %356 : vector<8x128xf32>
    %373 = math.tanh %372 : vector<8x128xf32>
    %374 = arith.mulf %372, %373 : vector<8x128xf32>
    %375 = arith.addf %372, %374 : vector<8x128xf32>
    %c2_212 = arith.constant 2 : index
    %c8_213 = arith.constant 8 : index
    %c0_214 = arith.constant 0 : index
    %376 = vector.load %arg6[%c2_212, %c8_213, %c0_214] : memref<3x16x128xf32, #tpu.memory_space<vmem>>, vector<1x8x128xf32>
    %377 = vector.shape_cast %376 : vector<1x8x128xf32> to vector<8x128xf32>
    %378 = vector.shape_cast %375 : vector<8x128xf32> to vector<1x8x128xf32>
    tpu.vector_store %arg6[%c2_212, %c8_213, %c0_214], %378 {strides = array<i32>} : memref<3x16x128xf32, #tpu.memory_space<vmem>>, vector<1x8x128xf32>,
    return
  }
  func.func @transform_0(%arg0: i32) -> (i32, i32, i32) {
    %c0_i32 = arith.constant 0 : i32
    %c0_i32_0 = arith.constant 0 : i32
    %c0_i32_1 = arith.constant 0 : i32
    return %c0_i32, %c0_i32_0, %arg0 : i32, i32, i32
  }
  func.func @transform_1(%arg0: i32) -> (i32, i32, i32) {
    %c0_i32 = arith.constant 0 : i32
    %c0_i32_0 = arith.constant 0 : i32
    %c0_i32_1 = arith.constant 0 : i32
    return %c0_i32, %c0_i32_0, %arg0 : i32, i32, i32
  }
  func.func @transform_2(%arg0: i32) -> (i32, i32, i32) {
    %c0_i32 = arith.constant 0 : i32
    %c0_i32_0 = arith.constant 0 : i32
    %c0_i32_1 = arith.constant 0 : i32
    return %c0_i32, %c0_i32_0, %arg0 : i32, i32, i32
  }
  func.func @transform_3(%arg0: i32) -> (i32, i32, i32) {
    %c0_i32 = arith.constant 0 : i32
    %c0_i32_0 = arith.constant 0 : i32
    %c0_i32_1 = arith.constant 0 : i32
    return %c0_i32, %c0_i32_0, %arg0 : i32, i32, i32
  }
  func.func @transform_4(%arg0: i32) -> (i32, i32, i32) {
    %c0_i32 = arith.constant 0 : i32
    %c0_i32_0 = arith.constant 0 : i32
    %c0_i32_1 = arith.constant 0 : i32
    %c0_i32_2 = arith.constant 0 : i32
    return %c0_i32, %c0_i32_0, %c0_i32_1 : i32, i32, i32
  }
  func.func @transform_5(%arg0: i32) -> (i32, i32, i32) {
    %c0_i32 = arith.constant 0 : i32
    %c0_i32_0 = arith.constant 0 : i32
    %c0_i32_1 = arith.constant 0 : i32
    return %c0_i32, %c0_i32_0, %arg0 : i32, i32, i32
  }
  func.func @transform_6(%arg0: i32) -> (i32, i32, i32) {
    %c0_i32 = arith.constant 0 : i32
    %c0_i32_0 = arith.constant 0 : i32
    %c0_i32_1 = arith.constant 0 : i32
    return %c0_i32, %c0_i32_0, %arg0 : i32, i32, i32
  }
}

</mosaic_0001>

<llo_original>
// kernel: resnet_block_forward_pfb.1
$region0: #{resnet_block_forward_pfb.1}
  #allocation0 [shape = 'u32[]', space=smem, size = 0x4, offset = 0x4, fixed_abs, tag = 'smem constant byte address 0x4 - core index']
  #allocation1 [shape = 'u32[144,128]{1,0:T(1,128)}', space=vmem, size = 0x12000, scoped, tag = 'internal scratch']
  %s0 = inlined_call_operand.hbm [shape: f32[6,16,256], index: 0, kind: input, shape index: {}]
  %s1 = inlined_call_operand.hbm [shape: f32[3,16,256], index: 1, kind: input, shape index: {}]
  %s2 = inlined_call_operand.hbm [shape: f32[6,16,256], index: 2, kind: input, shape index: {}]
  %s3 = inlined_call_operand.hbm [shape: f32[3,16,256], index: 3, kind: input, shape index: {}]
  %s4 = inlined_call_operand.hbm [shape: f32[8,8,16], index: 4, kind: input, shape index: {}]
  %s5 = inlined_call_operand.hbm [shape: f32[3,16,256], index: 5, kind: output, shape index: {0}]
  %s6 = inlined_call_operand.hbm [shape: f32[3,16,256], index: 6, kind: output, shape index: {1}]
  %7 = xla_tuple %s5, %s6
  %s8 = sld [smem:[#allocation0]]
  $region81: #{resnet_block_forward_pfb.1} parent=0
    _
  %s10 = ssub.s32 1, %s8
  %s11 = scalar_select 0, %s10, %s8
  $region1: #{resnet_block_forward_pfb.1} parent=0
    #allocation2 [shape = 'u8[98304]{0}', space=vmem, size = 0x18000, scoped, tag = 'input window, operand 0']
    #allocation3 [shape = 's32[2]{0}', space=sflag, size = 0x8, scoped, tag = 'scoped memory for resnet_block_forward_pfb.1']
    #allocation4 [shape = 's32[2]{0}', space=sflag, size = 0x8, scoped, tag = 'scoped memory for resnet_block_forward_pfb.1']
    #allocation5 [shape = 'u8[49152]{0}', space=vmem, size = 0xc000, scoped, tag = 'input window, operand 1']
    #allocation6 [shape = 's32[2]{0}', space=sflag, size = 0x8, scoped, tag = 'scoped memory for resnet_block_forward_pfb.1']
    #allocation7 [shape = 'u8[98304]{0}', space=vmem, size = 0x18000, scoped, tag = 'input window, operand 2']
    #allocation8 [shape = 'u8[49152]{0}', space=vmem, size = 0xc000, scoped, tag = 'input window, operand 3']
    #allocation9 [shape = 's32[2]{0}', space=sflag, size = 0x8, scoped, tag = 'scoped memory for resnet_block_forward_pfb.1']
    #allocation10 [shape = 'u8[32768]{0}', space=vmem, size = 0x8000, scoped, tag = 'input window, operand 4, single buffered']
    #allocation11 [shape = 'u8[49152]{0}', space=vmem, size = 0xc000, scoped, tag = 'output window, operand 0']
    #allocation12 [shape = 'u8[49152]{0}', space=vmem, size = 0xc000, scoped, tag = 'output window, operand 1']
    #allocation13 [shape = 's32[2]{0}', space=sflag, size = 0x8, scoped, tag = 'scoped memory for resnet_block_forward_pfb.1']
    %12 = vsyncpa [#allocation3], 0
    %s13 = scalar_lea.sflag [#allocation3], 1
    %14 = vsyncpa %s13, 0
    %15 = vsyncpa [#allocation6], 0
    %s16 = scalar_lea.sflag [#allocation6], 1
    %17 = vsyncpa %s16, 0
    %18 = vsyncpa [#allocation9], 0
    %s19 = scalar_lea.sflag [#allocation9], 1
    %20 = vsyncpa %s19, 0
    %21 = vsyncpa [#allocation4], 0
    %s22 = scalar_lea.sflag [#allocation4], 1
    %23 = vsyncpa %s22, 0
    %24 = vsyncpa [#allocation13], 0
    %s25 = scalar_lea.sflag [#allocation13], 1
    %26 = vsyncpa %s25, 0
    loop: start=0, step=1, limit=4
    $region2: #{resnet_block_forward_pfb.1} parent=1 // loop_pre_header
      _
    $region3: #{resnet_block_forward_pfb.1} parent=1 // loop_header
      %s28 = sphi 0, %s32
      %p29 = scmp.ge.s32.totalorder %s28, 4
      %s38 = sphi 0, %s40
      %s41 = sphi 0, %s38
      %s42 = sphi 0, %s41
      %s58 = sphi 0, %s42
      %s64 = sphi 0, %s66
      %s67 = sphi 0, %s64
      %s68 = sphi 0, %s67
      %s84 = sphi 0, %s68
      %s90 = sphi 0, %s92
      %s93 = sphi 0, %s90
      %s94 = sphi 0, %s93
      %s110 = sphi 0, %s94
      %s116 = sphi 0, %s118
      %s119 = sphi 0, %s116
      %s120 = sphi 0, %s119
      %s136 = sphi 0, %s120
      %s140 = sphi 0, %s140
      %s142 = sphi 0, %s140
      %s143 = sphi 0, %s142
      %s157 = sphi 0, %s143
      %s163 = sphi 0, %s165
      %s166 = sphi 0, %s163
      %s167 = sphi 0, %s166
      %s183 = sphi 0, %s167
      %s189 = sphi 0, %s191
      %s192 = sphi 0, %s189
      %s193 = sphi 0, %s192
      %s209 = sphi 0, %s193
    $region4: #{resnet_block_forward_pfb.1} parent=1 // loop_header_branch
      %31 = sbr.rel (%p29) target = $region8
    $region5: #{resnet_block_forward_pfb.1} parent=1 // loop_body
      %s33 = ssub.s32 %s28, 1
      %s34 = ssub.s32 %s28, 2
      %s35 = sadd.s32 %s28, 1
      %s36 = ssub.s32 %s28, %s35
      %p37 = scmp.eq.s32.totalorder %s36, 0
      %s39 = sadd.s32 %s38, 1
      %s40 = scalar_select %p37, %s38, %s39
      %p43 = pneg %p37
      %p44 = scmp.eq.s32.totalorder %s28, 1
      %p45 = por %p43, %p44
      %p46 = scmp.ne.s32.totalorder %s38, %s41
      %p47 = scmp.eq.s32.totalorder %s28, 0
      %p48 = por %p46, %p47
      %p49 = scmp.ne.s32.totalorder %s38, %s41
      %p50 = scmp.eq.s32.totalorder %s33, 1
      %p51 = por %p49, %p50
      %p52 = scmp.ne.s32.totalorder %s41, %s42
      %p53 = scmp.eq.s32.totalorder %s33, 0
      %p54 = por %p52, %p53
      %p55 = scmp.ne.s32.totalorder %s41, %s42
      %p56 = scmp.eq.s32.totalorder %s34, 1
      %p57 = por %p55, %p56
      %p59 = scmp.ne.s32.totalorder %s42, %s58
      %p60 = scmp.eq.s32.totalorder %s34, 0
      %p61 = por %p59, %p60
      %s62 = ssub.s32 %s28, %s35
      %p63 = scmp.eq.s32.totalorder %s62, 0
      %s65 = sadd.s32 %s64, 1
      %s66 = scalar_select %p63, %s64, %s65
      %p69 = pneg %p63
      %p70 = scmp.eq.s32.totalorder %s28, 1
      %p71 = por %p69, %p70
      %p72 = scmp.ne.s32.totalorder %s64, %s67
      %p73 = scmp.eq.s32.totalorder %s28, 0
      %p74 = por %p72, %p73
      %p75 = scmp.ne.s32.totalorder %s64, %s67
      %p76 = scmp.eq.s32.totalorder %s33, 1
      %p77 = por %p75, %p76
      %p78 = scmp.ne.s32.totalorder %s67, %s68
      %p79 = scmp.eq.s32.totalorder %s33, 0
      %p80 = por %p78, %p79
      %p81 = scmp.ne.s32.totalorder %s67, %s68
      %p82 = scmp.eq.s32.totalorder %s34, 1
      %p83 = por %p81, %p82
      %p85 = scmp.ne.s32.totalorder %s68, %s84
      %p86 = scmp.eq.s32.totalorder %s34, 0
      %p87 = por %p85, %p86
      %s88 = ssub.s32 %s28, %s35
      %p89 = scmp.eq.s32.totalorder %s88, 0
      %s91 = sadd.s32 %s90, 1
      %s92 = scalar_select %p89, %s90, %s91
      %p95 = pneg %p89
      %p96 = scmp.eq.s32.totalorder %s28, 1
      %p97 = por %p95, %p96
      %p98 = scmp.ne.s32.totalorder %s90, %s93
      %p99 = scmp.eq.s32.totalorder %s28, 0
      %p100 = por %p98, %p99
      %p101 = scmp.ne.s32.totalorder %s90, %s93
      %p102 = scmp.eq.s32.totalorder %s33, 1
      %p103 = por %p101, %p102
      %p104 = scmp.ne.s32.totalorder %s93, %s94
      %p105 = scmp.eq.s32.totalorder %s33, 0
      %p106 = por %p104, %p105
      %p107 = scmp.ne.s32.totalorder %s93, %s94
      %p108 = scmp.eq.s32.totalorder %s34, 1
      %p109 = por %p107, %p108
      %p111 = scmp.ne.s32.totalorder %s94, %s110
      %p112 = scmp.eq.s32.totalorder %s34, 0
      %p113 = por %p111, %p112
      %s114 = ssub.s32 %s28, %s35
      %p115 = scmp.eq.s32.totalorder %s114, 0
      %s117 = sadd.s32 %s116, 1
      %s118 = scalar_select %p115, %s116, %s117
      %p121 = pneg %p115
      %p122 = scmp.eq.s32.totalorder %s28, 1
      %p123 = por %p121, %p122
      %p124 = scmp.ne.s32.totalorder %s116, %s119
      %p125 = scmp.eq.s32.totalorder %s28, 0
      %p126 = por %p124, %p125
      %p127 = scmp.ne.s32.totalorder %s116, %s119
      %p128 = scmp.eq.s32.totalorder %s33, 1
      %p129 = por %p127, %p128
      %p130 = scmp.ne.s32.totalorder %s119, %s120
      %p131 = scmp.eq.s32.totalorder %s33, 0
      %p132 = por %p130, %p131
      %p133 = scmp.ne.s32.totalorder %s119, %s120
      %p134 = scmp.eq.s32.totalorder %s34, 1
      %p135 = por %p133, %p134
      %p137 = scmp.ne.s32.totalorder %s120, %s136
      %p138 = scmp.eq.s32.totalorder %s34, 0
      %p139 = por %p137, %p138
      %s141 = sadd.s32 %s140, 1
      %p144 = scmp.eq.s32.totalorder %s28, 1
      %p145 = scmp.ne.s32.totalorder %s140, %s142
      %p146 = scmp.eq.s32.totalorder %s28, 0
      %p147 = por %p145, %p146
      %p148 = scmp.ne.s32.totalorder %s140, %s142
      %p149 = scmp.eq.s32.totalorder %s33, 1
      %p150 = por %p148, %p149
      %p151 = scmp.ne.s32.totalorder %s142, %s143
      %p152 = scmp.eq.s32.totalorder %s33, 0
      %p153 = por %p151, %p152
      %p154 = scmp.ne.s32.totalorder %s142, %s143
      %p155 = scmp.eq.s32.totalorder %s34, 1
      %p156 = por %p154, %p155
      %p158 = scmp.ne.s32.totalorder %s143, %s157
      %p159 = scmp.eq.s32.totalorder %s34, 0
      %p160 = por %p158, %p159
      %s161 = ssub.s32 %s28, %s35
      %p162 = scmp.eq.s32.totalorder %s161, 0
      %s164 = sadd.s32 %s163, 1
      %s165 = scalar_select %p162, %s163, %s164
      %p168 = pneg %p162
      %p169 = scmp.eq.s32.totalorder %s28, 1
      %p170 = por %p168, %p169
      %p171 = scmp.ne.s32.totalorder %s163, %s166
      %p172 = scmp.eq.s32.totalorder %s28, 0
      %p173 = por %p171, %p172
      %p174 = scmp.ne.s32.totalorder %s163, %s166
      %p175 = scmp.eq.s32.totalorder %s33, 1
      %p176 = por %p174, %p175
      %p177 = scmp.ne.s32.totalorder %s166, %s167
      %p178 = scmp.eq.s32.totalorder %s33, 0
      %p179 = por %p177, %p178
      %p180 = scmp.ne.s32.totalorder %s166, %s167
      %p181 = scmp.eq.s32.totalorder %s34, 1
      %p182 = por %p180, %p181
      %p184 = scmp.ne.s32.totalorder %s167, %s183
      %p185 = scmp.eq.s32.totalorder %s34, 0
      %p186 = por %p184, %p185
      %s187 = ssub.s32 %s28, %s35
      %p188 = scmp.eq.s32.totalorder %s187, 0
      %s190 = sadd.s32 %s189, 1
      %s191 = scalar_select %p188, %s189, %s190
      %p194 = pneg %p188
      %p195 = scmp.eq.s32.totalorder %s28, 1
      %p196 = por %p194, %p195
      %p197 = scmp.ne.s32.totalorder %s189, %s192
      %p198 = scmp.eq.s32.totalorder %s28, 0
      %p199 = por %p197, %p198
      %p200 = scmp.ne.s32.totalorder %s189, %s192
      %p201 = scmp.eq.s32.totalorder %s33, 1
      %p202 = por %p200, %p201
      %p203 = scmp.ne.s32.totalorder %s192, %s193
      %p204 = scmp.eq.s32.totalorder %s33, 0
      %p205 = por %p203, %p204
      %p206 = scmp.ne.s32.totalorder %s192, %s193
      %p207 = scmp.eq.s32.totalorder %s34, 1
      %p208 = por %p206, %p207
      %p210 = scmp.ne.s32.totalorder %s193, %s209
      %p211 = scmp.eq.s32.totalorder %s34, 0
      %p212 = por %p210, %p211
      %p213 = scmp.le.s32.totalorder 1, %s28
      %p214 = scmp.lt.s32.totalorder %s28, 3
      %p215 = pnand %p213, %p214
      %p216 = pneg %p215
      // Predicated region
      $region9: #{resnet_block_forward_pfb.1} parent=5 // pred_check
        _
      $region10: #{resnet_block_forward_pfb.1} parent=5 // pred_check_branch
        %218 = sbr.rel (%p215) target = $region12
      $region11: #{resnet_block_forward_pfb.1} parent=5 // pred_region
        %s219 = ssub.s32 %s28, 1
        // Predicated region
        $region13: #{resnet_block_forward_pfb.1} parent=11 // pred_check
          %p220 = pneg %p153
        $region14: #{resnet_block_forward_pfb.1} parent=11 // pred_check_branch
          %222 = sbr.rel (%p220) target = $region16
        $region15: #{resnet_block_forward_pfb.1} parent=11 // pred_region
          %s224 = ssub.s32 1024, 1024
          %225 = vsyncadd [#allocation9], %s224
          %s226 = sshll.u32 [#allocation10], 4
          %s227 = int_to_ptr.vmem [resolvable:$true] %s226
          %232 = dma.hbm_to_vmem [thread:$0]  %s4, 1024, %s227, [#allocation9], 128, 128, 8
        $region16: #{resnet_block_forward_pfb.1} parent=11 // pred_fallthru
          _
      $region12: #{resnet_block_forward_pfb.1} parent=5 // pred_fallthru
        _
      %p233 = scmp.lt.s32.totalorder %s28, 2
      // Predicated region
      $region17: #{resnet_block_forward_pfb.1} parent=5 // pred_check
        %p234 = pneg %p233
      $region18: #{resnet_block_forward_pfb.1} parent=5 // pred_check_branch
        %236 = sbr.rel (%p234) target = $region20
      $region19: #{resnet_block_forward_pfb.1} parent=5 // pred_region
        // Predicated region
        $region21: #{resnet_block_forward_pfb.1} parent=19 // pred_check
          %p237 = pneg %p48
        $region22: #{resnet_block_forward_pfb.1} parent=19 // pred_check_branch
          %239 = sbr.rel (%p237) target = $region24
        $region23: #{resnet_block_forward_pfb.1} parent=19 // pred_region
          %s240 = sand.u32 %s38, 1
          %s241 = scalar_lea.sflag [#allocation3], %s240
          %s242 = sand.u32 %s38, 1
          %s243 = smul.addr %s242, 96
          %s244 = scalar_lea.vmem [#allocation2], %s243
          %s246 = ssub.s32 1536, 1536
          %247 = vsyncadd %s241, %s246
          %s248 = smul.addr %s28, 128
          %s249 = scalar_lea.hbm %s0, %s248
          %s250 = sshll.u32 %s244, 4
          %s251 = int_to_ptr.vmem [resolvable:$true] %s250
          %256 = dma.hbm_to_vmem [thread:$0]  %s249, 1536, %s251, %s241, 256, 128, 8
        $region24: #{resnet_block_forward_pfb.1} parent=19 // pred_fallthru
          _
        // Predicated region
        $region25: #{resnet_block_forward_pfb.1} parent=19 // pred_check
          %p257 = pneg %p74
        $region26: #{resnet_block_forward_pfb.1} parent=19 // pred_check_branch
          %259 = sbr.rel (%p257) target = $region28
        $region27: #{resnet_block_forward_pfb.1} parent=19 // pred_region
          %s260 = sand.u32 %s28, 1
          %s261 = scalar_lea.sflag [#allocation6], %s260
          %s262 = sand.u32 %s64, 1
          %s263 = smul.addr %s262, 48
          %s264 = scalar_lea.vmem [#allocation5], %s263
          %s266 = ssub.s32 768, 768
          %267 = vsyncadd %s261, %s266
          %s268 = smul.addr %s28, 128
          %s269 = scalar_lea.hbm %s1, %s268
          %s270 = sshll.u32 %s264, 4
          %s271 = int_to_ptr.vmem [resolvable:$true] %s270
          %276 = dma.hbm_to_vmem [thread:$0]  %s269, 768, %s271, %s261, 256, 128, 8
        $region28: #{resnet_block_forward_pfb.1} parent=19 // pred_fallthru
          _
        // Predicated region
        $region29: #{resnet_block_forward_pfb.1} parent=19 // pred_check
          %p277 = pneg %p100
        $region30: #{resnet_block_forward_pfb.1} parent=19 // pred_check_branch
          %279 = sbr.rel (%p277) target = $region32
        $region31: #{resnet_block_forward_pfb.1} parent=19 // pred_region
          %s280 = sand.u32 %s28, 1
          %s281 = scalar_lea.sflag [#allocation6], %s280
          %s282 = sand.u32 %s90, 1
          %s283 = smul.addr %s282, 96
          %s284 = scalar_lea.vmem [#allocation7], %s283
          %s286 = ssub.s32 1536, 1536
          %287 = vsyncadd %s281, %s286
          %s288 = smul.addr %s28, 128
          %s289 = scalar_lea.hbm %s2, %s288
          %s290 = sshll.u32 %s284, 4
          %s291 = int_to_ptr.vmem [resolvable:$true] %s290
          %296 = dma.hbm_to_vmem [thread:$0]  %s289, 1536, %s291, %s281, 256, 128, 8
        $region32: #{resnet_block_forward_pfb.1} parent=19 // pred_fallthru
          _
        // Predicated region
        $region33: #{resnet_block_forward_pfb.1} parent=19 // pred_check
          %p297 = pneg %p126
        $region34: #{resnet_block_forward_pfb.1} parent=19 // pred_check_branch
          %299 = sbr.rel (%p297) target = $region36
        $region35: #{resnet_block_forward_pfb.1} parent=19 // pred_region
          %s300 = sand.u32 %s28, 1
          %s301 = scalar_lea.sflag [#allocation9], %s300
          %s302 = sand.u32 %s116, 1
          %s303 = smul.addr %s302, 48
          %s304 = scalar_lea.vmem [#allocation8], %s303
          %s306 = ssub.s32 768, 768
          %307 = vsyncadd %s301, %s306
          %s308 = smul.addr %s28, 128
          %s309 = scalar_lea.hbm %s3, %s308
          %s310 = sshll.u32 %s304, 4
          %s311 = int_to_ptr.vmem [resolvable:$true] %s310
          %316 = dma.hbm_to_vmem [thread:$0]  %s309, 768, %s311, %s301, 256, 128, 8
        $region36: #{resnet_block_forward_pfb.1} parent=19 // pred_fallthru
          _
      $region20: #{resnet_block_forward_pfb.1} parent=5 // pred_fallthru
        _
      %p317 = scmp.le.s32.totalorder 1, %s28
      %p318 = scmp.lt.s32.totalorder %s28, 3
      %p319 = pnand %p317, %p318
      %p320 = pneg %p319
      // Predicated region
      $region37: #{resnet_block_forward_pfb.1} parent=5 // pred_check
        _
      $region38: #{resnet_block_forward_pfb.1} parent=5 // pred_check_branch
        %322 = sbr.rel (%p319) target = $region40
      $region39: #{resnet_block_forward_pfb.1} parent=5 // pred_region
        %s323 = ssub.s32 %s28, 1
        %s324 = sand.u32 %s41, 1
        %s325 = scalar_lea.sflag [#allocation3], %s324
        %s326 = sand.u32 %s41, 1
        %s327 = smul.addr %s326, 96
        %s328 = scalar_lea.vmem [#allocation2], %s327
        // Predicated region
        $region41: #{resnet_block_forward_pfb.1} parent=39 // pred_check
          %p329 = pneg %p54
        $region42: #{resnet_block_forward_pfb.1} parent=39 // pred_check_branch
          %331 = sbr.rel (%p329) target = $region44
        $region43: #{resnet_block_forward_pfb.1} parent=39 // pred_region
          %332 = dma.done %s325, 1536
        $region44: #{resnet_block_forward_pfb.1} parent=39 // pred_fallthru
          _
        %s333 = sand.u32 %s33, 1
        %s334 = scalar_lea.sflag [#allocation6], %s333
        %s335 = sand.u32 %s67, 1
        %s336 = smul.addr %s335, 48
        %s337 = scalar_lea.vmem [#allocation5], %s336
        // Predicated region
        $region45: #{resnet_block_forward_pfb.1} parent=39 // pred_check
          %p338 = pneg %p80
        $region46: #{resnet_block_forward_pfb.1} parent=39 // pred_check_branch
          %340 = sbr.rel (%p338) target = $region48
        $region47: #{resnet_block_forward_pfb.1} parent=39 // pred_region
          %341 = dma.done %s334, 768
        $region48: #{resnet_block_forward_pfb.1} parent=39 // pred_fallthru
          _
        %s342 = sand.u32 %s33, 1
        %s343 = scalar_lea.sflag [#allocation6], %s342
        %s344 = sand.u32 %s93, 1
        %s345 = smul.addr %s344, 96
        %s346 = scalar_lea.vmem [#allocation7], %s345
        // Predicated region
        $region49: #{resnet_block_forward_pfb.1} parent=39 // pred_check
          %p347 = pneg %p106
        $region50: #{resnet_block_forward_pfb.1} parent=39 // pred_check_branch
          %349 = sbr.rel (%p347) target = $region52
        $region51: #{resnet_block_forward_pfb.1} parent=39 // pred_region
          %350 = dma.done %s343, 1536
        $region52: #{resnet_block_forward_pfb.1} parent=39 // pred_fallthru
          _
        %s351 = sand.u32 %s33, 1
        %s352 = scalar_lea.sflag [#allocation9], %s351
        %s353 = sand.u32 %s119, 1
        %s354 = smul.addr %s353, 48
        %s355 = scalar_lea.vmem [#allocation8], %s354
        // Predicated region
        $region53: #{resnet_block_forward_pfb.1} parent=39 // pred_check
          %p356 = pneg %p132
        $region54: #{resnet_block_forward_pfb.1} parent=39 // pred_check_branch
          %358 = sbr.rel (%p356) target = $region56
        $region55: #{resnet_block_forward_pfb.1} parent=39 // pred_region
          %359 = dma.done %s352, 768
        $region56: #{resnet_block_forward_pfb.1} parent=39 // pred_fallthru
          _
        // Predicated region
        $region57: #{resnet_block_forward_pfb.1} parent=39 // pred_check
          %p360 = pneg %p153
        $region58: #{resnet_block_forward_pfb.1} parent=39 // pred_check_branch
          %362 = sbr.rel (%p360) target = $region60
        $region59: #{resnet_block_forward_pfb.1} parent=39 // pred_region
          %363 = dma.done [#allocation9], 1024
        $region60: #{resnet_block_forward_pfb.1} parent=39 // pred_fallthru
          _
        %s364 = sand.u32 %s41, 1
        %s365 = scalar_lea.sflag [#allocation3], %s364
        %s366 = sand.u32 %s41, 1
        %s367 = smul.addr %s366, 96
        %s368 = scalar_lea.vmem [#allocation2], %s367
        %p369 = pneg %p54
        %p370 = pneg %p51
        %s371 = sand.u32 %s33, 1
        %s372 = scalar_lea.sflag [#allocation6], %s371
        %s373 = sand.u32 %s67, 1
        %s374 = smul.addr %s373, 48
        %s375 = scalar_lea.vmem [#allocation5], %s374
        %p376 = pneg %p80
        %p377 = pneg %p77
        %s378 = sand.u32 %s33, 1
        %s379 = scalar_lea.sflag [#allocation6], %s378
        %s380 = sand.u32 %s93, 1
        %s381 = smul.addr %s380, 96
        %s382 = scalar_lea.vmem [#allocation7], %s381
        %p383 = pneg %p106
        %p384 = pneg %p103
        %s385 = sand.u32 %s33, 1
        %s386 = scalar_lea.sflag [#allocation9], %s385
        %s387 = sand.u32 %s119, 1
        %s388 = smul.addr %s387, 48
        %s389 = scalar_lea.vmem [#allocation8], %s388
        %p390 = pneg %p132
        %p391 = pneg %p129
        %p392 = pneg %p153
        %p393 = pneg %p150
        %p394 = pneg %p179
        %p395 = pneg %p176
        %s396 = sand.u32 %s166, 1
        %s397 = scalar_lea.sflag [#allocation4], %s396
        %s398 = sand.u32 %s166, 1
        %s399 = smul.addr %s398, 48
        %s400 = scalar_lea.vmem [#allocation11], %s399
        %p401 = pneg %p205
        %p402 = pneg %p202
        %s403 = sand.u32 %s192, 1
        %s404 = scalar_lea.sflag [#allocation13], %s403
        %s405 = sand.u32 %s192, 1
        %s406 = smul.addr %s405, 48
        %s407 = scalar_lea.vmem [#allocation12], %s406
        %v408 = vld [vmem:[#allocation10] sm:$0xff]
        %s409 = scalar_lea.vmem [#allocation10], 8
        %v410 = vld [vmem:[%s409] sm:$0xff]
        %s411 = scalar_lea.vmem [#allocation10], 16
        %v412 = vld [vmem:[%s411] sm:$0xff]
        %s413 = scalar_lea.vmem [#allocation10], 24
        %v414 = vld [vmem:[%s413] sm:$0xff]
        %s415 = scalar_lea.vmem [#allocation10], 32
        %v416 = vld [vmem:[%s415] sm:$0xff]
        %s417 = scalar_lea.vmem [#allocation10], 40
        %v418 = vld [vmem:[%s417] sm:$0xff]
        %s419 = scalar_lea.vmem [#allocation10], 48
        %v420 = vld [vmem:[%s419] sm:$0xff]
        %s421 = scalar_lea.vmem [#allocation10], 56
        %v422 = vld [vmem:[%s421] sm:$0xff]
        %424 = vset.pattern.permute.xlu0 0
        %425 = vperm.xlu0 %424, %v422
        %v426 = vpop.permute.xlu0 %425
        %428 = vset.pattern.permute.xlu0 1
        %429 = vperm.xlu0 %428, %v422
        %v430 = vpop.permute.xlu0 %429
        %432 = vset.pattern.permute.xlu0 2
        %433 = vperm.xlu0 %432, %v422
        %v434 = vpop.permute.xlu0 %433
        %v436 = vld [vmem:[%s328] sm:$0xff]
        %v437 = vld [vmem:[%s328 + $0x8] sm:$0xff]
        %s438 = scalar_lea.vmem %s328, 16 [#allocation2]
        %v439 = vld [vmem:[%s438] sm:$0xff]
        %v440 = vld [vmem:[%s438 + $0x8] sm:$0xff]
        %s441 = scalar_lea.vmem %s328, 32 [#allocation2]
        %v442 = vld [vmem:[%s441] sm:$0xff]
        %v443 = vld [vmem:[%s441 + $0x8] sm:$0xff]
        %s444 = scalar_lea.vmem %s328, 48 [#allocation2]
        %v445 = vld [vmem:[%s444] sm:$0xff]
        %v446 = vld [vmem:[%s444 + $0x8] sm:$0xff]
        %s447 = scalar_lea.vmem %s328, 64 [#allocation2]
        %v448 = vld [vmem:[%s447] sm:$0xff]
        %v449 = vld [vmem:[%s447 + $0x8] sm:$0xff]
        %s450 = scalar_lea.vmem %s328, 80 [#allocation2]
        %v451 = vld [vmem:[%s450] sm:$0xff]
        %v452 = vld [vmem:[%s450 + $0x8] sm:$0xff]
        %v453 = vld [vmem:[%s337] sm:$0xff]
        %v454 = vld [vmem:[%s337 + $0x8] sm:$0xff]
        %s455 = scalar_lea.vmem %s337, 16 [#allocation5]
        %v456 = vld [vmem:[%s455] sm:$0xff]
        %v457 = vld [vmem:[%s455 + $0x8] sm:$0xff]
        %s458 = scalar_lea.vmem %s337, 32 [#allocation5]
        %v459 = vld [vmem:[%s458] sm:$0xff]
        %v460 = vld [vmem:[%s458 + $0x8] sm:$0xff]
        %vm461 = vcmask 130048
        %v463 = vsel %vm461, %v414, 0
        %465 = vmatprep.subr.mxu0 0.0
        %466 = vmatpush1.msra.mxu0 0.0
        %467 = vmatprep.subr.mxu0 0.0
        %468 = vmatpush1.msra.mxu0 0.0
        %469 = vmatprep.subr.mxu0 0.0
        %470 = vmatpush1.msra.mxu0 0.0
        %471 = vmatprep.subr.mxu0 0.0
        %472 = vmatpush1.msra.mxu0 0.0
        %473 = vmatprep.subr.mxu0 0.0
        %474 = vmatpush1.msra.mxu0 0.0
        %475 = vmatprep.subr.mxu0 0.0
        %476 = vmatpush1.msra.mxu0 0.0
        %477 = vmatprep.subr.mxu0 0.0
        %478 = vmatpush1.msra.mxu0 0.0
        %479 = vmatprep.subr.mxu0 0.0
        %480 = vmatpush1.msra.mxu0 0.0
        %481 = vmatprep.subr.mxu0 0.0
        %482 = vmatpush1.msra.mxu0 0.0
        %483 = vmatprep.subr.mxu0 0.0
        %484 = vmatpush1.msra.mxu0 0.0
        %485 = vmatprep.subr.mxu0 0.0
        %486 = vmatpush1.msra.mxu0 0.0
        %487 = vmatprep.subr.mxu0 0.0
        %488 = vmatpush1.msra.mxu0 0.0
        %489 = vmatprep.subr.mxu0 0.0
        %490 = vmatpush1.msra.mxu0 0.0
        %491 = vmatprep.subr.mxu0 0.0
        %492 = vmatpush1.msra.mxu0 0.0
        %493 = vmatprep.subr.mxu0 0.0
        %494 = vmatpush1.msra.mxu0 %v437
        %495 = vmatprep.subr.mxu0 0.0
        %496 = vmatpush1.msra.mxu0 %v436
        %497 = vmatprep.subr.mxu0 0.0
        %498 = vmatpush2.msra.mxu0 0.0
        %499 = vmatprep.subr.mxu0 0.0
        %500 = vmatpush2.msra.mxu0 0.0
        %501 = vmatprep.subr.mxu0 0.0
        %502 = vmatpush2.msra.mxu0 0.0
        %503 = vmatprep.subr.mxu0 0.0
        %504 = vmatpush2.msra.mxu0 0.0
        %505 = vmatprep.subr.mxu0 0.0
        %506 = vmatpush2.msra.mxu0 0.0
        %507 = vmatprep.subr.mxu0 0.0
        %508 = vmatpush2.msra.mxu0 0.0
        %509 = vmatprep.subr.mxu0 0.0
        %510 = vmatpush2.msra.mxu0 0.0
        %511 = vmatprep.subr.mxu0 0.0
        %512 = vmatpush2.msra.mxu0 0.0
        %513 = vmatprep.subr.mxu0 0.0
        %514 = vmatpush2.msra.mxu0 0.0
        %515 = vmatprep.subr.mxu0 0.0
        %516 = vmatpush2.msra.mxu0 0.0
        %517 = vmatprep.subr.mxu0 0.0
        %518 = vmatpush2.msra.mxu0 0.0
        %519 = vmatprep.subr.mxu0 0.0
        %520 = vmatpush2.msra.mxu0 0.0
        %521 = vmatprep.subr.mxu0 0.0
        %522 = vmatpush2.msra.mxu0 0.0
        %523 = vmatprep.subr.mxu0 0.0
        %524 = vmatpush2.msra.mxu0 0.0
        %525 = vmatprep.subr.mxu0 0.0
        %526 = vmatpush2.msra.mxu0 0.0
        %527 = vmatprep.subr.mxu0 0.0
        %528 = vmatpush2.msra.mxu0 0.0
        %529 = vmatprep.mubr.f32.mxu0 0.0
        %530 = vmatmul.mubr.f32.gmra.mxu0 %v463
        %v531 = vpop.f32.mrf.mxu0
        %v532 = vadd.f32 %v430, %v531
        %v533 = vpop.f32.mrf.mxu0
        %534 = vdwg.mxu0
        %v535 = vld [vmem:[%s346] sm:$0xff]
        %v536 = vadd.f32 %v532, %v535
        %v537 = vmul.f32 %v536, 0.5
        %v538 = vtanh.pop %v537
        %v539 = vmul.f32 %v537, %v538
        %v540 = vadd.f32 %v537, %v539
        %v541 = vld [vmem:[%s346 + $0x8] sm:$0xff]
        %v542 = vsub.f32 %v541, %v532
        %v543 = vmul.f32 %v542, 0.5
        %v544 = vtanh.pop %v543
        %v545 = vmul.f32 %v543, %v544
        %v546 = vadd.f32 %v543, %v545
        %547 = vmatprep.subr.mxu0 0.0
        %548 = vmatpush1.msra.mxu0 0.0
        %549 = vmatprep.subr.mxu0 0.0
        %550 = vmatpush1.msra.mxu0 0.0
        %551 = vmatprep.subr.mxu0 0.0
        %552 = vmatpush1.msra.mxu0 0.0
        %553 = vmatprep.subr.mxu0 0.0
        %554 = vmatpush1.msra.mxu0 0.0
        %555 = vmatprep.subr.mxu0 0.0
        %556 = vmatpush1.msra.mxu0 0.0
        %557 = vmatprep.subr.mxu0 0.0
        %558 = vmatpush1.msra.mxu0 0.0
        %559 = vmatprep.subr.mxu0 0.0
        %560 = vmatpush1.msra.mxu0 0.0
        %561 = vmatprep.subr.mxu0 0.0
        %562 = vmatpush1.msra.mxu0 0.0
        %563 = vmatprep.subr.mxu0 0.0
        %564 = vmatpush1.msra.mxu0 0.0
        %565 = vmatprep.subr.mxu0 0.0
        %566 = vmatpush1.msra.mxu0 0.0
        %567 = vmatprep.subr.mxu0 0.0
        %568 = vmatpush1.msra.mxu0 0.0
        %569 = vmatprep.subr.mxu0 0.0
        %570 = vmatpush1.msra.mxu0 0.0
        %571 = vmatprep.subr.mxu0 0.0
        %572 = vmatpush1.msra.mxu0 0.0
        %573 = vmatprep.subr.mxu0 0.0
        %574 = vmatpush1.msra.mxu0 0.0
        %575 = vmatprep.subr.mxu0 0.0
        %576 = vmatpush1.msra.mxu0 %v440
        %577 = vmatprep.subr.mxu0 0.0
        %578 = vmatpush1.msra.mxu0 %v439
        %579 = vmatprep.subr.mxu0 0.0
        %580 = vmatpush2.msra.mxu0 0.0
        %581 = vmatprep.subr.mxu0 0.0
        %582 = vmatpush2.msra.mxu0 0.0
        %583 = vmatprep.subr.mxu0 0.0
        %584 = vmatpush2.msra.mxu0 0.0
        %585 = vmatprep.subr.mxu0 0.0
        %586 = vmatpush2.msra.mxu0 0.0
        %587 = vmatprep.subr.mxu0 0.0
        %588 = vmatpush2.msra.mxu0 0.0
        %589 = vmatprep.subr.mxu0 0.0
        %590 = vmatpush2.msra.mxu0 0.0
        %591 = vmatprep.subr.mxu0 0.0
        %592 = vmatpush2.msra.mxu0 0.0
        %593 = vmatprep.subr.mxu0 0.0
        %594 = vmatpush2.msra.mxu0 0.0
        %595 = vmatprep.subr.mxu0 0.0
        %596 = vmatpush2.msra.mxu0 0.0
        %597 = vmatprep.subr.mxu0 0.0
        %598 = vmatpush2.msra.mxu0 0.0
        %599 = vmatprep.subr.mxu0 0.0
        %600 = vmatpush2.msra.mxu0 0.0
        %601 = vmatprep.subr.mxu0 0.0
        %602 = vmatpush2.msra.mxu0 0.0
        %603 = vmatprep.subr.mxu0 0.0
        %604 = vmatpush2.msra.mxu0 0.0
        %605 = vmatprep.subr.mxu0 0.0
        %606 = vmatpush2.msra.mxu0 0.0
        %607 = vmatprep.subr.mxu0 0.0
        %608 = vmatpush2.msra.mxu0 0.0
        %609 = vmatprep.subr.mxu0 0.0
        %610 = vmatpush2.msra.mxu0 0.0
        %611 = vmatprep.mubr.f32.mxu0 0.0
        %612 = vmatmul.mubr.f32.gmra.mxu0 %v463
        %v613 = vpop.f32.mrf.mxu0
        %v614 = vadd.f32 %v430, %v613
        %v615 = vpop.f32.mrf.mxu0
        %616 = vdwg.mxu0
        %s617 = scalar_lea.vmem %s346, 16 [#allocation7]
        %v618 = vld [vmem:[%s617] sm:$0xff]
        %v619 = vadd.f32 %v614, %v618
        %v620 = vmul.f32 %v619, 0.5
        %v621 = vtanh.pop %v620
        %v622 = vmul.f32 %v620, %v621
        %v623 = vadd.f32 %v620, %v622
        %v624 = vld [vmem:[%s617 + $0x8] sm:$0xff]
        %v625 = vsub.f32 %v624, %v614
        %v626 = vmul.f32 %v625, 0.5
        %v627 = vtanh.pop %v626
        %v628 = vmul.f32 %v626, %v627
        %v629 = vadd.f32 %v626, %v628
        %630 = vmatprep.subr.mxu0 0.0
        %631 = vmatpush1.msra.mxu0 0.0
        %632 = vmatprep.subr.mxu0 0.0
        %633 = vmatpush1.msra.mxu0 0.0
        %634 = vmatprep.subr.mxu0 0.0
        %635 = vmatpush1.msra.mxu0 0.0
        %636 = vmatprep.subr.mxu0 0.0
        %637 = vmatpush1.msra.mxu0 0.0
        %638 = vmatprep.subr.mxu0 0.0
        %639 = vmatpush1.msra.mxu0 0.0
        %640 = vmatprep.subr.mxu0 0.0
        %641 = vmatpush1.msra.mxu0 0.0
        %642 = vmatprep.subr.mxu0 0.0
        %643 = vmatpush1.msra.mxu0 0.0
        %644 = vmatprep.subr.mxu0 0.0
        %645 = vmatpush1.msra.mxu0 0.0
        %646 = vmatprep.subr.mxu0 0.0
        %647 = vmatpush1.msra.mxu0 0.0
        %648 = vmatprep.subr.mxu0 0.0
        %649 = vmatpush1.msra.mxu0 0.0
        %650 = vmatprep.subr.mxu0 0.0
        %651 = vmatpush1.msra.mxu0 0.0
        %652 = vmatprep.subr.mxu0 0.0
        %653 = vmatpush1.msra.mxu0 0.0
        %654 = vmatprep.subr.mxu0 0.0
        %655 = vmatpush1.msra.mxu0 0.0
        %656 = vmatprep.subr.mxu0 0.0
        %657 = vmatpush1.msra.mxu0 0.0
        %658 = vmatprep.subr.mxu0 0.0
        %659 = vmatpush1.msra.mxu0 %v443
        %660 = vmatprep.subr.mxu0 0.0
        %661 = vmatpush1.msra.mxu0 %v442
        %662 = vmatprep.subr.mxu0 0.0
        %663 = vmatpush2.msra.mxu0 0.0
        %664 = vmatprep.subr.mxu0 0.0
        %665 = vmatpush2.msra.mxu0 0.0
        %666 = vmatprep.subr.mxu0 0.0
        %667 = vmatpush2.msra.mxu0 0.0
        %668 = vmatprep.subr.mxu0 0.0
        %669 = vmatpush2.msra.mxu0 0.0
        %670 = vmatprep.subr.mxu0 0.0
        %671 = vmatpush2.msra.mxu0 0.0
        %672 = vmatprep.subr.mxu0 0.0
        %673 = vmatpush2.msra.mxu0 0.0
        %674 = vmatprep.subr.mxu0 0.0
        %675 = vmatpush2.msra.mxu0 0.0
        %676 = vmatprep.subr.mxu0 0.0
        %677 = vmatpush2.msra.mxu0 0.0
        %678 = vmatprep.subr.mxu0 0.0
        %679 = vmatpush2.msra.mxu0 0.0
        %680 = vmatprep.subr.mxu0 0.0
        %681 = vmatpush2.msra.mxu0 0.0
        %682 = vmatprep.subr.mxu0 0.0
        %683 = vmatpush2.msra.mxu0 0.0
        %684 = vmatprep.subr.mxu0 0.0
        %685 = vmatpush2.msra.mxu0 0.0
        %686 = vmatprep.subr.mxu0 0.0
        %687 = vmatpush2.msra.mxu0 0.0
        %688 = vmatprep.subr.mxu0 0.0
        %689 = vmatpush2.msra.mxu0 0.0
        %690 = vmatprep.subr.mxu0 0.0
        %691 = vmatpush2.msra.mxu0 0.0
        %692 = vmatprep.subr.mxu0 0.0
        %693 = vmatpush2.msra.mxu0 0.0
        %694 = vmatprep.mubr.f32.mxu0 0.0
        %695 = vmatmul.mubr.f32.gmra.mxu0 %v463
        %v696 = vpop.f32.mrf.mxu0
        %v697 = vadd.f32 %v430, %v696
        %v698 = vpop.f32.mrf.mxu0
        %699 = vdwg.mxu0
        %s700 = scalar_lea.vmem %s346, 32 [#allocation7]
        %v701 = vld [vmem:[%s700] sm:$0xff]
        %v702 = vadd.f32 %v697, %v701
        %v703 = vmul.f32 %v702, 0.5
        %v704 = vtanh.pop %v703
        %v705 = vmul.f32 %v703, %v704
        %v706 = vadd.f32 %v703, %v705
        %v707 = vld [vmem:[%s700 + $0x8] sm:$0xff]
        %v708 = vsub.f32 %v707, %v697
        %v709 = vmul.f32 %v708, 0.5
        %v710 = vtanh.pop %v709
        %v711 = vmul.f32 %v709, %v710
        %v712 = vadd.f32 %v709, %v711
        %713 = vmatprep.subr.mxu0 0.0
        %714 = vmatpush1.msra.mxu0 0.0
        %715 = vmatprep.subr.mxu0 0.0
        %716 = vmatpush1.msra.mxu0 0.0
        %717 = vmatprep.subr.mxu0 0.0
        %718 = vmatpush1.msra.mxu0 0.0
        %719 = vmatprep.subr.mxu0 0.0
        %720 = vmatpush1.msra.mxu0 0.0
        %721 = vmatprep.subr.mxu0 0.0
        %722 = vmatpush1.msra.mxu0 0.0
        %723 = vmatprep.subr.mxu0 0.0
        %724 = vmatpush1.msra.mxu0 0.0
        %725 = vmatprep.subr.mxu0 0.0
        %726 = vmatpush1.msra.mxu0 0.0
        %727 = vmatprep.subr.mxu0 0.0
        %728 = vmatpush1.msra.mxu0 0.0
        %729 = vmatprep.subr.mxu0 0.0
        %730 = vmatpush1.msra.mxu0 0.0
        %731 = vmatprep.subr.mxu0 0.0
        %732 = vmatpush1.msra.mxu0 0.0
        %733 = vmatprep.subr.mxu0 0.0
        %734 = vmatpush1.msra.mxu0 0.0
        %735 = vmatprep.subr.mxu0 0.0
        %736 = vmatpush1.msra.mxu0 0.0
        %737 = vmatprep.subr.mxu0 0.0
        %738 = vmatpush1.msra.mxu0 0.0
        %739 = vmatprep.subr.mxu0 0.0
        %740 = vmatpush1.msra.mxu0 0.0
        %741 = vmatprep.subr.mxu0 0.0
        %742 = vmatpush1.msra.mxu0 %v446
        %743 = vmatprep.subr.mxu0 0.0
        %744 = vmatpush1.msra.mxu0 %v445
        %745 = vmatprep.subr.mxu0 0.0
        %746 = vmatpush2.msra.mxu0 0.0
        %747 = vmatprep.subr.mxu0 0.0
        %748 = vmatpush2.msra.mxu0 0.0
        %749 = vmatprep.subr.mxu0 0.0
        %750 = vmatpush2.msra.mxu0 0.0
        %751 = vmatprep.subr.mxu0 0.0
        %752 = vmatpush2.msra.mxu0 0.0
        %753 = vmatprep.subr.mxu0 0.0
        %754 = vmatpush2.msra.mxu0 0.0
        %755 = vmatprep.subr.mxu0 0.0
        %756 = vmatpush2.msra.mxu0 0.0
        %757 = vmatprep.subr.mxu0 0.0
        %758 = vmatpush2.msra.mxu0 0.0
        %759 = vmatprep.subr.mxu0 0.0
        %760 = vmatpush2.msra.mxu0 0.0
        %761 = vmatprep.subr.mxu0 0.0
        %762 = vmatpush2.msra.mxu0 0.0
        %763 = vmatprep.subr.mxu0 0.0
        %764 = vmatpush2.msra.mxu0 0.0
        %765 = vmatprep.subr.mxu0 0.0
        %766 = vmatpush2.msra.mxu0 0.0
        %767 = vmatprep.subr.mxu0 0.0
        %768 = vmatpush2.msra.mxu0 0.0
        %769 = vmatprep.subr.mxu0 0.0
        %770 = vmatpush2.msra.mxu0 0.0
        %771 = vmatprep.subr.mxu0 0.0
        %772 = vmatpush2.msra.mxu0 0.0
        %773 = vmatprep.subr.mxu0 0.0
        %774 = vmatpush2.msra.mxu0 0.0
        %775 = vmatprep.subr.mxu0 0.0
        %776 = vmatpush2.msra.mxu0 0.0
        %777 = vmatprep.mubr.f32.mxu0 0.0
        %778 = vmatmul.mubr.f32.gmra.mxu0 %v463
        %v779 = vpop.f32.mrf.mxu0
        %v780 = vadd.f32 %v430, %v779
        %v781 = vpop.f32.mrf.mxu0
        %782 = vdwg.mxu0
        %s783 = scalar_lea.vmem %s346, 48 [#allocation7]
        %v784 = vld [vmem:[%s783] sm:$0xff]
        %v785 = vadd.f32 %v780, %v784
        %v786 = vmul.f32 %v785, 0.5
        %v787 = vtanh.pop %v786
        %v788 = vmul.f32 %v786, %v787
        %v789 = vadd.f32 %v786, %v788
        %v790 = vld [vmem:[%s783 + $0x8] sm:$0xff]
        %v791 = vsub.f32 %v790, %v780
        %v792 = vmul.f32 %v791, 0.5
        %v793 = vtanh.pop %v792
        %v794 = vmul.f32 %v792, %v793
        %v795 = vadd.f32 %v792, %v794
        %796 = vmatprep.subr.mxu0 0.0
        %797 = vmatpush1.msra.mxu0 0.0
        %798 = vmatprep.subr.mxu0 0.0
        %799 = vmatpush1.msra.mxu0 0.0
        %800 = vmatprep.subr.mxu0 0.0
        %801 = vmatpush1.msra.mxu0 0.0
        %802 = vmatprep.subr.mxu0 0.0
        %803 = vmatpush1.msra.mxu0 0.0
        %804 = vmatprep.subr.mxu0 0.0
        %805 = vmatpush1.msra.mxu0 0.0
        %806 = vmatprep.subr.mxu0 0.0
        %807 = vmatpush1.msra.mxu0 0.0
        %808 = vmatprep.subr.mxu0 0.0
        %809 = vmatpush1.msra.mxu0 0.0
        %810 = vmatprep.subr.mxu0 0.0
        %811 = vmatpush1.msra.mxu0 0.0
        %812 = vmatprep.subr.mxu0 0.0
        %813 = vmatpush1.msra.mxu0 0.0
        %814 = vmatprep.subr.mxu0 0.0
        %815 = vmatpush1.msra.mxu0 0.0
        %816 = vmatprep.subr.mxu0 0.0
        %817 = vmatpush1.msra.mxu0 0.0
        %818 = vmatprep.subr.mxu0 0.0
        %819 = vmatpush1.msra.mxu0 0.0
        %820 = vmatprep.subr.mxu0 0.0
        %821 = vmatpush1.msra.mxu0 0.0
        %822 = vmatprep.subr.mxu0 0.0
        %823 = vmatpush1.msra.mxu0 0.0
        %824 = vmatprep.subr.mxu0 0.0
        %825 = vmatpush1.msra.mxu0 %v449
        %826 = vmatprep.subr.mxu0 0.0
        %827 = vmatpush1.msra.mxu0 %v448
        %828 = vmatprep.subr.mxu0 0.0
        %829 = vmatpush2.msra.mxu0 0.0
        %830 = vmatprep.subr.mxu0 0.0
        %831 = vmatpush2.msra.mxu0 0.0
        %832 = vmatprep.subr.mxu0 0.0
        %833 = vmatpush2.msra.mxu0 0.0
        %834 = vmatprep.subr.mxu0 0.0
        %835 = vmatpush2.msra.mxu0 0.0
        %836 = vmatprep.subr.mxu0 0.0
        %837 = vmatpush2.msra.mxu0 0.0
        %838 = vmatprep.subr.mxu0 0.0
        %839 = vmatpush2.msra.mxu0 0.0
        %840 = vmatprep.subr.mxu0 0.0
        %841 = vmatpush2.msra.mxu0 0.0
        %842 = vmatprep.subr.mxu0 0.0
        %843 = vmatpush2.msra.mxu0 0.0
        %844 = vmatprep.subr.mxu0 0.0
        %845 = vmatpush2.msra.mxu0 0.0
        %846 = vmatprep.subr.mxu0 0.0
        %847 = vmatpush2.msra.mxu0 0.0
        %848 = vmatprep.subr.mxu0 0.0
        %849 = vmatpush2.msra.mxu0 0.0
        %850 = vmatprep.subr.mxu0 0.0
        %851 = vmatpush2.msra.mxu0 0.0
        %852 = vmatprep.subr.mxu0 0.0
        %853 = vmatpush2.msra.mxu0 0.0
        %854 = vmatprep.subr.mxu0 0.0
        %855 = vmatpush2.msra.mxu0 0.0
        %856 = vmatprep.subr.mxu0 0.0
        %857 = vmatpush2.msra.mxu0 0.0
        %858 = vmatprep.subr.mxu0 0.0
        %859 = vmatpush2.msra.mxu0 0.0
        %860 = vmatprep.mubr.f32.mxu0 0.0
        %861 = vmatmul.mubr.f32.gmra.mxu0 %v463
        %v862 = vpop.f32.mrf.mxu0
        %v863 = vadd.f32 %v430, %v862
        %v864 = vpop.f32.mrf.mxu0
        %865 = vdwg.mxu0
        %s866 = scalar_lea.vmem %s346, 64 [#allocation7]
        %v867 = vld [vmem:[%s866] sm:$0xff]
        %v868 = vadd.f32 %v863, %v867
        %v869 = vmul.f32 %v868, 0.5
        %v870 = vtanh.pop %v869
        %v871 = vmul.f32 %v869, %v870
        %v872 = vadd.f32 %v869, %v871
        %v873 = vld [vmem:[%s866 + $0x8] sm:$0xff]
        %v874 = vsub.f32 %v873, %v863
        %v875 = vmul.f32 %v874, 0.5
        %v876 = vtanh.pop %v875
        %v877 = vmul.f32 %v875, %v876
        %v878 = vadd.f32 %v875, %v877
        %879 = vmatprep.subr.mxu0 0.0
        %880 = vmatpush1.msra.mxu0 0.0
        %881 = vmatprep.subr.mxu0 0.0
        %882 = vmatpush1.msra.mxu0 0.0
        %883 = vmatprep.subr.mxu0 0.0
        %884 = vmatpush1.msra.mxu0 0.0
        %885 = vmatprep.subr.mxu0 0.0
        %886 = vmatpush1.msra.mxu0 0.0
        %887 = vmatprep.subr.mxu0 0.0
        %888 = vmatpush1.msra.mxu0 0.0
        %889 = vmatprep.subr.mxu0 0.0
        %890 = vmatpush1.msra.mxu0 0.0
        %891 = vmatprep.subr.mxu0 0.0
        %892 = vmatpush1.msra.mxu0 0.0
        %893 = vmatprep.subr.mxu0 0.0
        %894 = vmatpush1.msra.mxu0 0.0
        %895 = vmatprep.subr.mxu0 0.0
        %896 = vmatpush1.msra.mxu0 0.0
        %897 = vmatprep.subr.mxu0 0.0
        %898 = vmatpush1.msra.mxu0 0.0
        %899 = vmatprep.subr.mxu0 0.0
        %900 = vmatpush1.msra.mxu0 0.0
        %901 = vmatprep.subr.mxu0 0.0
        %902 = vmatpush1.msra.mxu0 0.0
        %903 = vmatprep.subr.mxu0 0.0
        %904 = vmatpush1.msra.mxu0 0.0
        %905 = vmatprep.subr.mxu0 0.0
        %906 = vmatpush1.msra.mxu0 0.0
        %907 = vmatprep.subr.mxu0 0.0
        %908 = vmatpush1.msra.mxu0 %v452
        %909 = vmatprep.subr.mxu0 0.0
        %910 = vmatpush1.msra.mxu0 %v451
        %911 = vmatprep.subr.mxu0 0.0
        %912 = vmatpush2.msra.mxu0 0.0
        %913 = vmatprep.subr.mxu0 0.0
        %914 = vmatpush2.msra.mxu0 0.0
        %915 = vmatprep.subr.mxu0 0.0
        %916 = vmatpush2.msra.mxu0 0.0
        %917 = vmatprep.subr.mxu0 0.0
        %918 = vmatpush2.msra.mxu0 0.0
        %919 = vmatprep.subr.mxu0 0.0
        %920 = vmatpush2.msra.mxu0 0.0
        %921 = vmatprep.subr.mxu0 0.0
        %922 = vmatpush2.msra.mxu0 0.0
        %923 = vmatprep.subr.mxu0 0.0
        %924 = vmatpush2.msra.mxu0 0.0
        %925 = vmatprep.subr.mxu0 0.0
        %926 = vmatpush2.msra.mxu0 0.0
        %927 = vmatprep.subr.mxu0 0.0
        %928 = vmatpush2.msra.mxu0 0.0
        %929 = vmatprep.subr.mxu0 0.0
        %930 = vmatpush2.msra.mxu0 0.0
        %931 = vmatprep.subr.mxu0 0.0
        %932 = vmatpush2.msra.mxu0 0.0
        %933 = vmatprep.subr.mxu0 0.0
        %934 = vmatpush2.msra.mxu0 0.0
        %935 = vmatprep.subr.mxu0 0.0
        %936 = vmatpush2.msra.mxu0 0.0
        %937 = vmatprep.subr.mxu0 0.0
        %938 = vmatpush2.msra.mxu0 0.0
        %939 = vmatprep.subr.mxu0 0.0
        %940 = vmatpush2.msra.mxu0 0.0
        %941 = vmatprep.subr.mxu0 0.0
        %942 = vmatpush2.msra.mxu0 0.0
        %943 = vmatprep.mubr.f32.mxu0 0.0
        %944 = vmatmul.mubr.f32.gmra.mxu0 %v463
        %v945 = vpop.f32.mrf.mxu0
        %v946 = vadd.f32 %v430, %v945
        %v947 = vpop.f32.mrf.mxu0
        %948 = vdwg.mxu0
        %s949 = scalar_lea.vmem %s346, 80 [#allocation7]
        %v950 = vld [vmem:[%s949] sm:$0xff]
        %v951 = vadd.f32 %v946, %v950
        %v952 = vmul.f32 %v951, 0.5
        %v953 = vtanh.pop %v952
        %v954 = vmul.f32 %v952, %v953
        %v955 = vadd.f32 %v952, %v954
        %v956 = vld [vmem:[%s949 + $0x8] sm:$0xff]
        %v957 = vsub.f32 %v956, %v946
        %v958 = vmul.f32 %v957, 0.5
        %v959 = vtanh.pop %v958
        %v960 = vmul.f32 %v958, %v959
        %v961 = vadd.f32 %v958, %v960
        %v963 = vsel %vm461, %v408, 0
        %965 = vmatprep.subr.mxu0 0.0
        %966 = vmatpush1.msra.mxu0 0.0
        %967 = vmatprep.subr.mxu0 0.0
        %968 = vmatpush1.msra.mxu0 0.0
        %969 = vmatprep.subr.mxu0 0.0
        %970 = vmatpush1.msra.mxu0 0.0
        %971 = vmatprep.subr.mxu0 0.0
        %972 = vmatpush1.msra.mxu0 0.0
        %973 = vmatprep.subr.mxu0 0.0
        %974 = vmatpush1.msra.mxu0 0.0
        %975 = vmatprep.subr.mxu0 0.0
        %976 = vmatpush1.msra.mxu0 0.0
        %977 = vmatprep.subr.mxu0 0.0
        %978 = vmatpush1.msra.mxu0 0.0
        %979 = vmatprep.subr.mxu0 0.0
        %980 = vmatpush1.msra.mxu0 0.0
        %981 = vmatprep.subr.mxu0 0.0
        %982 = vmatpush1.msra.mxu0 0.0
        %983 = vmatprep.subr.mxu0 0.0
        %984 = vmatpush1.msra.mxu0 0.0
        %985 = vmatprep.subr.mxu0 0.0
        %986 = vmatpush1.msra.mxu0 0.0
        %987 = vmatprep.subr.mxu0 0.0
        %988 = vmatpush1.msra.mxu0 0.0
        %989 = vmatprep.subr.mxu0 0.0
        %990 = vmatpush1.msra.mxu0 0.0
        %991 = vmatprep.subr.mxu0 0.0
        %992 = vmatpush1.msra.mxu0 0.0
        %993 = vmatprep.subr.mxu0 0.0
        %994 = vmatpush1.msra.mxu0 %v440
        %995 = vmatprep.subr.mxu0 0.0
        %996 = vmatpush1.msra.mxu0 %v439
        %997 = vmatprep.subr.mxu0 0.0
        %998 = vmatpush2.msra.mxu0 0.0
        %999 = vmatprep.subr.mxu0 0.0
        %1000 = vmatpush2.msra.mxu0 0.0
        %1001 = vmatprep.subr.mxu0 0.0
        %1002 = vmatpush2.msra.mxu0 0.0
        %1003 = vmatprep.subr.mxu0 0.0
        %1004 = vmatpush2.msra.mxu0 0.0
        %1005 = vmatprep.subr.mxu0 0.0
        %1006 = vmatpush2.msra.mxu0 0.0
        %1007 = vmatprep.subr.mxu0 0.0
        %1008 = vmatpush2.msra.mxu0 0.0
        %1009 = vmatprep.subr.mxu0 0.0
        %1010 = vmatpush2.msra.mxu0 0.0
        %1011 = vmatprep.subr.mxu0 0.0
        %1012 = vmatpush2.msra.mxu0 0.0
        %1013 = vmatprep.subr.mxu0 0.0
        %1014 = vmatpush2.msra.mxu0 0.0
        %1015 = vmatprep.subr.mxu0 0.0
        %1016 = vmatpush2.msra.mxu0 0.0
        %1017 = vmatprep.subr.mxu0 0.0
        %1018 = vmatpush2.msra.mxu0 0.0
        %1019 = vmatprep.subr.mxu0 0.0
        %1020 = vmatpush2.msra.mxu0 0.0
        %1021 = vmatprep.subr.mxu0 0.0
        %1022 = vmatpush2.msra.mxu0 0.0
        %1023 = vmatprep.subr.mxu0 0.0
        %1024 = vmatpush2.msra.mxu0 0.0
        %1025 = vmatprep.subr.mxu0 0.0
        %1026 = vmatpush2.msra.mxu0 0.0
        %1027 = vmatprep.subr.mxu0 0.0
        %1028 = vmatpush2.msra.mxu0 0.0
        %1029 = vmatprep.mubr.f32.mxu0 0.0
        %1030 = vmatmul.mubr.f32.gmra.mxu0 %v963
        %v1031 = vpop.f32.mrf.mxu0
        %v1032 = vadd.f32 0.0, %v1031
        %v1033 = vpop.f32.mrf.mxu0
        %1034 = vdwg.mxu0
        %1035 = vmatprep.subr.mxu0 0.0
        %1036 = vmatpush1.msra.mxu0 0.0
        %1037 = vmatprep.subr.mxu0 0.0
        %1038 = vmatpush1.msra.mxu0 0.0
        %1039 = vmatprep.subr.mxu0 0.0
        %1040 = vmatpush1.msra.mxu0 0.0
        %1041 = vmatprep.subr.mxu0 0.0
        %1042 = vmatpush1.msra.mxu0 0.0
        %1043 = vmatprep.subr.mxu0 0.0
        %1044 = vmatpush1.msra.mxu0 0.0
        %1045 = vmatprep.subr.mxu0 0.0
        %1046 = vmatpush1.msra.mxu0 0.0
        %1047 = vmatprep.subr.mxu0 0.0
        %1048 = vmatpush1.msra.mxu0 0.0
        %1049 = vmatprep.subr.mxu0 0.0
        %1050 = vmatpush1.msra.mxu0 0.0
        %1051 = vmatprep.subr.mxu0 0.0
        %1052 = vmatpush1.msra.mxu0 0.0
        %1053 = vmatprep.subr.mxu0 0.0
        %1054 = vmatpush1.msra.mxu0 0.0
        %1055 = vmatprep.subr.mxu0 0.0
        %1056 = vmatpush1.msra.mxu0 0.0
        %1057 = vmatprep.subr.mxu0 0.0
        %1058 = vmatpush1.msra.mxu0 0.0
        %1059 = vmatprep.subr.mxu0 0.0
        %1060 = vmatpush1.msra.mxu0 0.0
        %1061 = vmatprep.subr.mxu0 0.0
        %1062 = vmatpush1.msra.mxu0 0.0
        %1063 = vmatprep.subr.mxu0 0.0
        %1064 = vmatpush1.msra.mxu0 %v437
        %1065 = vmatprep.subr.mxu0 0.0
        %1066 = vmatpush1.msra.mxu0 %v436
        %1067 = vmatprep.subr.mxu0 0.0
        %1068 = vmatpush2.msra.mxu0 0.0
        %1069 = vmatprep.subr.mxu0 0.0
        %1070 = vmatpush2.msra.mxu0 0.0
        %1071 = vmatprep.subr.mxu0 0.0
        %1072 = vmatpush2.msra.mxu0 0.0
        %1073 = vmatprep.subr.mxu0 0.0
        %1074 = vmatpush2.msra.mxu0 0.0
        %1075 = vmatprep.subr.mxu0 0.0
        %1076 = vmatpush2.msra.mxu0 0.0
        %1077 = vmatprep.subr.mxu0 0.0
        %1078 = vmatpush2.msra.mxu0 0.0
        %1079 = vmatprep.subr.mxu0 0.0
        %1080 = vmatpush2.msra.mxu0 0.0
        %1081 = vmatprep.subr.mxu0 0.0
        %1082 = vmatpush2.msra.mxu0 0.0
        %1083 = vmatprep.subr.mxu0 0.0
        %1084 = vmatpush2.msra.mxu0 0.0
        %1085 = vmatprep.subr.mxu0 0.0
        %1086 = vmatpush2.msra.mxu0 0.0
        %1087 = vmatprep.subr.mxu0 0.0
        %1088 = vmatpush2.msra.mxu0 0.0
        %1089 = vmatprep.subr.mxu0 0.0
        %1090 = vmatpush2.msra.mxu0 0.0
        %1091 = vmatprep.subr.mxu0 0.0
        %1092 = vmatpush2.msra.mxu0 0.0
        %1093 = vmatprep.subr.mxu0 0.0
        %1094 = vmatpush2.msra.mxu0 0.0
        %1095 = vmatprep.subr.mxu0 0.0
        %1096 = vmatpush2.msra.mxu0 0.0
        %1097 = vmatprep.subr.mxu0 0.0
        %1098 = vmatpush2.msra.mxu0 0.0
        %1099 = vmatprep.mubr.f32.mxu0 0.0
        %1100 = vmatmul.mubr.f32.gmra.mxu0 %v963
        %v1101 = vpop.f32.mrf.mxu0
        %v1102 = vadd.f32 %v1032, %v1101
        %v1103 = vpop.f32.mrf.mxu0
        %1104 = vdwg.mxu0
        %v1105 = vsub.f32 %v436, %v439
        %v1106 = vsub.f32 %v437, %v440
        %v1107 = vand.u32 2147483647, %v1105
        %v1108 = vand.u32 2147483647, %v1106
        %v1110 = vsel %vm461, %v410, 0
        %1112 = vmatprep.subr.mxu0 0.0
        %1113 = vmatpush1.msra.mxu0 0.0
        %1114 = vmatprep.subr.mxu0 0.0
        %1115 = vmatpush1.msra.mxu0 0.0
        %1116 = vmatprep.subr.mxu0 0.0
        %1117 = vmatpush1.msra.mxu0 0.0
        %1118 = vmatprep.subr.mxu0 0.0
        %1119 = vmatpush1.msra.mxu0 0.0
        %1120 = vmatprep.subr.mxu0 0.0
        %1121 = vmatpush1.msra.mxu0 0.0
        %1122 = vmatprep.subr.mxu0 0.0
        %1123 = vmatpush1.msra.mxu0 0.0
        %1124 = vmatprep.subr.mxu0 0.0
        %1125 = vmatpush1.msra.mxu0 0.0
        %1126 = vmatprep.subr.mxu0 0.0
        %1127 = vmatpush1.msra.mxu0 0.0
        %1128 = vmatprep.subr.mxu0 0.0
        %1129 = vmatpush1.msra.mxu0 0.0
        %1130 = vmatprep.subr.mxu0 0.0
        %1131 = vmatpush1.msra.mxu0 0.0
        %1132 = vmatprep.subr.mxu0 0.0
        %1133 = vmatpush1.msra.mxu0 0.0
        %1134 = vmatprep.subr.mxu0 0.0
        %1135 = vmatpush1.msra.mxu0 0.0
        %1136 = vmatprep.subr.mxu0 0.0
        %1137 = vmatpush1.msra.mxu0 0.0
        %1138 = vmatprep.subr.mxu0 0.0
        %1139 = vmatpush1.msra.mxu0 0.0
        %1140 = vmatprep.subr.mxu0 0.0
        %1141 = vmatpush1.msra.mxu0 %v1108
        %1142 = vmatprep.subr.mxu0 0.0
        %1143 = vmatpush1.msra.mxu0 %v1107
        %1144 = vmatprep.subr.mxu0 0.0
        %1145 = vmatpush2.msra.mxu0 0.0
        %1146 = vmatprep.subr.mxu0 0.0
        %1147 = vmatpush2.msra.mxu0 0.0
        %1148 = vmatprep.subr.mxu0 0.0
        %1149 = vmatpush2.msra.mxu0 0.0
        %1150 = vmatprep.subr.mxu0 0.0
        %1151 = vmatpush2.msra.mxu0 0.0
        %1152 = vmatprep.subr.mxu0 0.0
        %1153 = vmatpush2.msra.mxu0 0.0
        %1154 = vmatprep.subr.mxu0 0.0
        %1155 = vmatpush2.msra.mxu0 0.0
        %1156 = vmatprep.subr.mxu0 0.0
        %1157 = vmatpush2.msra.mxu0 0.0
        %1158 = vmatprep.subr.mxu0 0.0
        %1159 = vmatpush2.msra.mxu0 0.0
        %1160 = vmatprep.subr.mxu0 0.0
        %1161 = vmatpush2.msra.mxu0 0.0
        %1162 = vmatprep.subr.mxu0 0.0
        %1163 = vmatpush2.msra.mxu0 0.0
        %1164 = vmatprep.subr.mxu0 0.0
        %1165 = vmatpush2.msra.mxu0 0.0
        %1166 = vmatprep.subr.mxu0 0.0
        %1167 = vmatpush2.msra.mxu0 0.0
        %1168 = vmatprep.subr.mxu0 0.0
        %1169 = vmatpush2.msra.mxu0 0.0
        %1170 = vmatprep.subr.mxu0 0.0
        %1171 = vmatpush2.msra.mxu0 0.0
        %1172 = vmatprep.subr.mxu0 0.0
        %1173 = vmatpush2.msra.mxu0 0.0
        %1174 = vmatprep.subr.mxu0 0.0
        %1175 = vmatpush2.msra.mxu0 0.0
        %1176 = vmatprep.mubr.f32.mxu0 0.0
        %1177 = vmatmul.mubr.f32.gmra.mxu0 %v1110
        %v1178 = vpop.f32.mrf.mxu0
        %v1179 = vadd.f32 0.0, %v1178
        %v1180 = vpop.f32.mrf.mxu0
        %1181 = vdwg.mxu0
        %v1182 = vadd.f32 %v1102, %v1179
        %v1184 = vsel %vm461, %v412, 0
        %1186 = vmatprep.subr.mxu0 0.0
        %1187 = vmatpush1.msra.mxu0 0.0
        %1188 = vmatprep.subr.mxu0 0.0
        %1189 = vmatpush1.msra.mxu0 0.0
        %1190 = vmatprep.subr.mxu0 0.0
        %1191 = vmatpush1.msra.mxu0 0.0
        %1192 = vmatprep.subr.mxu0 0.0
        %1193 = vmatpush1.msra.mxu0 0.0
        %1194 = vmatprep.subr.mxu0 0.0
        %1195 = vmatpush1.msra.mxu0 0.0
        %1196 = vmatprep.subr.mxu0 0.0
        %1197 = vmatpush1.msra.mxu0 0.0
        %1198 = vmatprep.subr.mxu0 0.0
        %1199 = vmatpush1.msra.mxu0 0.0
        %1200 = vmatprep.subr.mxu0 0.0
        %1201 = vmatpush1.msra.mxu0 0.0
        %1202 = vmatprep.subr.mxu0 0.0
        %1203 = vmatpush1.msra.mxu0 0.0
        %1204 = vmatprep.subr.mxu0 0.0
        %1205 = vmatpush1.msra.mxu0 0.0
        %1206 = vmatprep.subr.mxu0 0.0
        %1207 = vmatpush1.msra.mxu0 0.0
        %1208 = vmatprep.subr.mxu0 0.0
        %1209 = vmatpush1.msra.mxu0 0.0
        %1210 = vmatprep.subr.mxu0 0.0
        %1211 = vmatpush1.msra.mxu0 0.0
        %1212 = vmatprep.subr.mxu0 0.0
        %1213 = vmatpush1.msra.mxu0 0.0
        %1214 = vmatprep.subr.mxu0 0.0
        %1215 = vmatpush1.msra.mxu0 %v454
        %1216 = vmatprep.subr.mxu0 0.0
        %1217 = vmatpush1.msra.mxu0 %v453
        %1218 = vmatprep.subr.mxu0 0.0
        %1219 = vmatpush2.msra.mxu0 0.0
        %1220 = vmatprep.subr.mxu0 0.0
        %1221 = vmatpush2.msra.mxu0 0.0
        %1222 = vmatprep.subr.mxu0 0.0
        %1223 = vmatpush2.msra.mxu0 0.0
        %1224 = vmatprep.subr.mxu0 0.0
        %1225 = vmatpush2.msra.mxu0 0.0
        %1226 = vmatprep.subr.mxu0 0.0
        %1227 = vmatpush2.msra.mxu0 0.0
        %1228 = vmatprep.subr.mxu0 0.0
        %1229 = vmatpush2.msra.mxu0 0.0
        %1230 = vmatprep.subr.mxu0 0.0
        %1231 = vmatpush2.msra.mxu0 0.0
        %1232 = vmatprep.subr.mxu0 0.0
        %1233 = vmatpush2.msra.mxu0 0.0
        %1234 = vmatprep.subr.mxu0 0.0
        %1235 = vmatpush2.msra.mxu0 0.0
        %1236 = vmatprep.subr.mxu0 0.0
        %1237 = vmatpush2.msra.mxu0 0.0
        %1238 = vmatprep.subr.mxu0 0.0
        %1239 = vmatpush2.msra.mxu0 0.0
        %1240 = vmatprep.subr.mxu0 0.0
        %1241 = vmatpush2.msra.mxu0 0.0
        %1242 = vmatprep.subr.mxu0 0.0
        %1243 = vmatpush2.msra.mxu0 0.0
        %1244 = vmatprep.subr.mxu0 0.0
        %1245 = vmatpush2.msra.mxu0 0.0
        %1246 = vmatprep.subr.mxu0 0.0
        %1247 = vmatpush2.msra.mxu0 0.0
        %1248 = vmatprep.subr.mxu0 0.0
        %1249 = vmatpush2.msra.mxu0 0.0
        %1250 = vmatprep.mubr.f32.mxu0 0.0
        %1251 = vmatmul.mubr.f32.gmra.mxu0 %v1184
        %v1252 = vpop.f32.mrf.mxu0
        %v1253 = vadd.f32 0.0, %v1252
        %v1254 = vpop.f32.mrf.mxu0
        %1255 = vdwg.mxu0
        %v1256 = vadd.f32 %v1182, %v1253
        %v1257 = vadd.f32 %v1256, %v426
        %v1258 = vld [vmem:[%s355] sm:$0xff]
        %v1259 = vadd.f32 %v1257, %v1258
        %v1260 = vmul.f32 %v1259, 0.5
        %v1261 = vtanh.pop %v1260
        %v1262 = vmul.f32 %v1260, %v1261
        %v1263 = vadd.f32 %v1260, %v1262
        %v1264 = vld [vmem:[%s355 + $0x8] sm:$0xff]
        %v1265 = vsub.f32 %v1264, %v1257
        %v1266 = vmul.f32 %v1265, 0.5
        %v1267 = vtanh.pop %v1266
        %v1268 = vmul.f32 %v1266, %v1267
        %v1269 = vadd.f32 %v1266, %v1268
        %1270 = vmatprep.subr.mxu0 0.0
        %1271 = vmatpush1.msra.mxu0 0.0
        %1272 = vmatprep.subr.mxu0 0.0
        %1273 = vmatpush1.msra.mxu0 0.0
        %1274 = vmatprep.subr.mxu0 0.0
        %1275 = vmatpush1.msra.mxu0 0.0
        %1276 = vmatprep.subr.mxu0 0.0
        %1277 = vmatpush1.msra.mxu0 0.0
        %1278 = vmatprep.subr.mxu0 0.0
        %1279 = vmatpush1.msra.mxu0 0.0
        %1280 = vmatprep.subr.mxu0 0.0
        %1281 = vmatpush1.msra.mxu0 0.0
        %1282 = vmatprep.subr.mxu0 0.0
        %1283 = vmatpush1.msra.mxu0 0.0
        %1284 = vmatprep.subr.mxu0 0.0
        %1285 = vmatpush1.msra.mxu0 0.0
        %1286 = vmatprep.subr.mxu0 0.0
        %1287 = vmatpush1.msra.mxu0 0.0
        %1288 = vmatprep.subr.mxu0 0.0
        %1289 = vmatpush1.msra.mxu0 0.0
        %1290 = vmatprep.subr.mxu0 0.0
        %1291 = vmatpush1.msra.mxu0 0.0
        %1292 = vmatprep.subr.mxu0 0.0
        %1293 = vmatpush1.msra.mxu0 0.0
        %1294 = vmatprep.subr.mxu0 0.0
        %1295 = vmatpush1.msra.mxu0 0.0
        %1296 = vmatprep.subr.mxu0 0.0
        %1297 = vmatpush1.msra.mxu0 0.0
        %1298 = vmatprep.subr.mxu0 0.0
        %1299 = vmatpush1.msra.mxu0 %v446
        %1300 = vmatprep.subr.mxu0 0.0
        %1301 = vmatpush1.msra.mxu0 %v445
        %1302 = vmatprep.subr.mxu0 0.0
        %1303 = vmatpush2.msra.mxu0 0.0
        %1304 = vmatprep.subr.mxu0 0.0
        %1305 = vmatpush2.msra.mxu0 0.0
        %1306 = vmatprep.subr.mxu0 0.0
        %1307 = vmatpush2.msra.mxu0 0.0
        %1308 = vmatprep.subr.mxu0 0.0
        %1309 = vmatpush2.msra.mxu0 0.0
        %1310 = vmatprep.subr.mxu0 0.0
        %1311 = vmatpush2.msra.mxu0 0.0
        %1312 = vmatprep.subr.mxu0 0.0
        %1313 = vmatpush2.msra.mxu0 0.0
        %1314 = vmatprep.subr.mxu0 0.0
        %1315 = vmatpush2.msra.mxu0 0.0
        %1316 = vmatprep.subr.mxu0 0.0
        %1317 = vmatpush2.msra.mxu0 0.0
        %1318 = vmatprep.subr.mxu0 0.0
        %1319 = vmatpush2.msra.mxu0 0.0
        %1320 = vmatprep.subr.mxu0 0.0
        %1321 = vmatpush2.msra.mxu0 0.0
        %1322 = vmatprep.subr.mxu0 0.0
        %1323 = vmatpush2.msra.mxu0 0.0
        %1324 = vmatprep.subr.mxu0 0.0
        %1325 = vmatpush2.msra.mxu0 0.0
        %1326 = vmatprep.subr.mxu0 0.0
        %1327 = vmatpush2.msra.mxu0 0.0
        %1328 = vmatprep.subr.mxu0 0.0
        %1329 = vmatpush2.msra.mxu0 0.0
        %1330 = vmatprep.subr.mxu0 0.0
        %1331 = vmatpush2.msra.mxu0 0.0
        %1332 = vmatprep.subr.mxu0 0.0
        %1333 = vmatpush2.msra.mxu0 0.0
        %1334 = vmatprep.mubr.f32.mxu0 0.0
        %1335 = vmatmul.mubr.f32.gmra.mxu0 %v963
        %v1336 = vpop.f32.mrf.mxu0
        %v1337 = vadd.f32 0.0, %v1336
        %v1338 = vpop.f32.mrf.mxu0
        %1339 = vdwg.mxu0
        %1340 = vmatprep.subr.mxu0 0.0
        %1341 = vmatpush1.msra.mxu0 0.0
        %1342 = vmatprep.subr.mxu0 0.0
        %1343 = vmatpush1.msra.mxu0 0.0
        %1344 = vmatprep.subr.mxu0 0.0
        %1345 = vmatpush1.msra.mxu0 0.0
        %1346 = vmatprep.subr.mxu0 0.0
        %1347 = vmatpush1.msra.mxu0 0.0
        %1348 = vmatprep.subr.mxu0 0.0
        %1349 = vmatpush1.msra.mxu0 0.0
        %1350 = vmatprep.subr.mxu0 0.0
        %1351 = vmatpush1.msra.mxu0 0.0
        %1352 = vmatprep.subr.mxu0 0.0
        %1353 = vmatpush1.msra.mxu0 0.0
        %1354 = vmatprep.subr.mxu0 0.0
        %1355 = vmatpush1.msra.mxu0 0.0
        %1356 = vmatprep.subr.mxu0 0.0
        %1357 = vmatpush1.msra.mxu0 0.0
        %1358 = vmatprep.subr.mxu0 0.0
        %1359 = vmatpush1.msra.mxu0 0.0
        %1360 = vmatprep.subr.mxu0 0.0
        %1361 = vmatpush1.msra.mxu0 0.0
        %1362 = vmatprep.subr.mxu0 0.0
        %1363 = vmatpush1.msra.mxu0 0.0
        %1364 = vmatprep.subr.mxu0 0.0
        %1365 = vmatpush1.msra.mxu0 0.0
        %1366 = vmatprep.subr.mxu0 0.0
        %1367 = vmatpush1.msra.mxu0 0.0
        %1368 = vmatprep.subr.mxu0 0.0
        %1369 = vmatpush1.msra.mxu0 %v443
        %1370 = vmatprep.subr.mxu0 0.0
        %1371 = vmatpush1.msra.mxu0 %v442
        %1372 = vmatprep.subr.mxu0 0.0
        %1373 = vmatpush2.msra.mxu0 0.0
        %1374 = vmatprep.subr.mxu0 0.0
        %1375 = vmatpush2.msra.mxu0 0.0
        %1376 = vmatprep.subr.mxu0 0.0
        %1377 = vmatpush2.msra.mxu0 0.0
        %1378 = vmatprep.subr.mxu0 0.0
        %1379 = vmatpush2.msra.mxu0 0.0
        %1380 = vmatprep.subr.mxu0 0.0
        %1381 = vmatpush2.msra.mxu0 0.0
        %1382 = vmatprep.subr.mxu0 0.0
        %1383 = vmatpush2.msra.mxu0 0.0
        %1384 = vmatprep.subr.mxu0 0.0
        %1385 = vmatpush2.msra.mxu0 0.0
        %1386 = vmatprep.subr.mxu0 0.0
        %1387 = vmatpush2.msra.mxu0 0.0
        %1388 = vmatprep.subr.mxu0 0.0
        %1389 = vmatpush2.msra.mxu0 0.0
        %1390 = vmatprep.subr.mxu0 0.0
        %1391 = vmatpush2.msra.mxu0 0.0
        %1392 = vmatprep.subr.mxu0 0.0
        %1393 = vmatpush2.msra.mxu0 0.0
        %1394 = vmatprep.subr.mxu0 0.0
        %1395 = vmatpush2.msra.mxu0 0.0
        %1396 = vmatprep.subr.mxu0 0.0
        %1397 = vmatpush2.msra.mxu0 0.0
        %1398 = vmatprep.subr.mxu0 0.0
        %1399 = vmatpush2.msra.mxu0 0.0
        %1400 = vmatprep.subr.mxu0 0.0
        %1401 = vmatpush2.msra.mxu0 0.0
        %1402 = vmatprep.subr.mxu0 0.0
        %1403 = vmatpush2.msra.mxu0 0.0
        %1404 = vmatprep.mubr.f32.mxu0 0.0
        %1405 = vmatmul.mubr.f32.gmra.mxu0 %v963
        %v1406 = vpop.f32.mrf.mxu0
        %v1407 = vadd.f32 %v1337, %v1406
        %v1408 = vpop.f32.mrf.mxu0
        %1409 = vdwg.mxu0
        %v1410 = vsub.f32 %v442, %v445
        %v1411 = vsub.f32 %v443, %v446
        %v1412 = vand.u32 2147483647, %v1410
        %v1413 = vand.u32 2147483647, %v1411
        %1414 = vmatprep.subr.mxu0 0.0
        %1415 = vmatpush1.msra.mxu0 0.0
        %1416 = vmatprep.subr.mxu0 0.0
        %1417 = vmatpush1.msra.mxu0 0.0
        %1418 = vmatprep.subr.mxu0 0.0
        %1419 = vmatpush1.msra.mxu0 0.0
        %1420 = vmatprep.subr.mxu0 0.0
        %1421 = vmatpush1.msra.mxu0 0.0
        %1422 = vmatprep.subr.mxu0 0.0
        %1423 = vmatpush1.msra.mxu0 0.0
        %1424 = vmatprep.subr.mxu0 0.0
        %1425 = vmatpush1.msra.mxu0 0.0
        %1426 = vmatprep.subr.mxu0 0.0
        %1427 = vmatpush1.msra.mxu0 0.0
        %1428 = vmatprep.subr.mxu0 0.0
        %1429 = vmatpush1.msra.mxu0 0.0
        %1430 = vmatprep.subr.mxu0 0.0
        %1431 = vmatpush1.msra.mxu0 0.0
        %1432 = vmatprep.subr.mxu0 0.0
        %1433 = vmatpush1.msra.mxu0 0.0
        %1434 = vmatprep.subr.mxu0 0.0
        %1435 = vmatpush1.msra.mxu0 0.0
        %1436 = vmatprep.subr.mxu0 0.0
        %1437 = vmatpush1.msra.mxu0 0.0
        %1438 = vmatprep.subr.mxu0 0.0
        %1439 = vmatpush1.msra.mxu0 0.0
        %1440 = vmatprep.subr.mxu0 0.0
        %1441 = vmatpush1.msra.mxu0 0.0
        %1442 = vmatprep.subr.mxu0 0.0
        %1443 = vmatpush1.msra.mxu0 %v1413
        %1444 = vmatprep.subr.mxu0 0.0
        %1445 = vmatpush1.msra.mxu0 %v1412
        %1446 = vmatprep.subr.mxu0 0.0
        %1447 = vmatpush2.msra.mxu0 0.0
        %1448 = vmatprep.subr.mxu0 0.0
        %1449 = vmatpush2.msra.mxu0 0.0
        %1450 = vmatprep.subr.mxu0 0.0
        %1451 = vmatpush2.msra.mxu0 0.0
        %1452 = vmatprep.subr.mxu0 0.0
        %1453 = vmatpush2.msra.mxu0 0.0
        %1454 = vmatprep.subr.mxu0 0.0
        %1455 = vmatpush2.msra.mxu0 0.0
        %1456 = vmatprep.subr.mxu0 0.0
        %1457 = vmatpush2.msra.mxu0 0.0
        %1458 = vmatprep.subr.mxu0 0.0
        %1459 = vmatpush2.msra.mxu0 0.0
        %1460 = vmatprep.subr.mxu0 0.0
        %1461 = vmatpush2.msra.mxu0 0.0
        %1462 = vmatprep.subr.mxu0 0.0
        %1463 = vmatpush2.msra.mxu0 0.0
        %1464 = vmatprep.subr.mxu0 0.0
        %1465 = vmatpush2.msra.mxu0 0.0
        %1466 = vmatprep.subr.mxu0 0.0
        %1467 = vmatpush2.msra.mxu0 0.0
        %1468 = vmatprep.subr.mxu0 0.0
        %1469 = vmatpush2.msra.mxu0 0.0
        %1470 = vmatprep.subr.mxu0 0.0
        %1471 = vmatpush2.msra.mxu0 0.0
        %1472 = vmatprep.subr.mxu0 0.0
        %1473 = vmatpush2.msra.mxu0 0.0
        %1474 = vmatprep.subr.mxu0 0.0
        %1475 = vmatpush2.msra.mxu0 0.0
        %1476 = vmatprep.subr.mxu0 0.0
        %1477 = vmatpush2.msra.mxu0 0.0
        %1478 = vmatprep.mubr.f32.mxu0 0.0
        %1479 = vmatmul.mubr.f32.gmra.mxu0 %v1110
        %v1480 = vpop.f32.mrf.mxu0
        %v1481 = vadd.f32 0.0, %v1480
        %v1482 = vpop.f32.mrf.mxu0
        %1483 = vdwg.mxu0
        %v1484 = vadd.f32 %v1407, %v1481
        %1485 = vmatprep.subr.mxu0 0.0
        %1486 = vmatpush1.msra.mxu0 0.0
        %1487 = vmatprep.subr.mxu0 0.0
        %1488 = vmatpush1.msra.mxu0 0.0
        %1489 = vmatprep.subr.mxu0 0.0
        %1490 = vmatpush1.msra.mxu0 0.0
        %1491 = vmatprep.subr.mxu0 0.0
        %1492 = vmatpush1.msra.mxu0 0.0
        %1493 = vmatprep.subr.mxu0 0.0
        %1494 = vmatpush1.msra.mxu0 0.0
        %1495 = vmatprep.subr.mxu0 0.0
        %1496 = vmatpush1.msra.mxu0 0.0
        %1497 = vmatprep.subr.mxu0 0.0
        %1498 = vmatpush1.msra.mxu0 0.0
        %1499 = vmatprep.subr.mxu0 0.0
        %1500 = vmatpush1.msra.mxu0 0.0
        %1501 = vmatprep.subr.mxu0 0.0
        %1502 = vmatpush1.msra.mxu0 0.0
        %1503 = vmatprep.subr.mxu0 0.0
        %1504 = vmatpush1.msra.mxu0 0.0
        %1505 = vmatprep.subr.mxu0 0.0
        %1506 = vmatpush1.msra.mxu0 0.0
        %1507 = vmatprep.subr.mxu0 0.0
        %1508 = vmatpush1.msra.mxu0 0.0
        %1509 = vmatprep.subr.mxu0 0.0
        %1510 = vmatpush1.msra.mxu0 0.0
        %1511 = vmatprep.subr.mxu0 0.0
        %1512 = vmatpush1.msra.mxu0 0.0
        %1513 = vmatprep.subr.mxu0 0.0
        %1514 = vmatpush1.msra.mxu0 %v457
        %1515 = vmatprep.subr.mxu0 0.0
        %1516 = vmatpush1.msra.mxu0 %v456
        %1517 = vmatprep.subr.mxu0 0.0
        %1518 = vmatpush2.msra.mxu0 0.0
        %1519 = vmatprep.subr.mxu0 0.0
        %1520 = vmatpush2.msra.mxu0 0.0
        %1521 = vmatprep.subr.mxu0 0.0
        %1522 = vmatpush2.msra.mxu0 0.0
        %1523 = vmatprep.subr.mxu0 0.0
        %1524 = vmatpush2.msra.mxu0 0.0
        %1525 = vmatprep.subr.mxu0 0.0
        %1526 = vmatpush2.msra.mxu0 0.0
        %1527 = vmatprep.subr.mxu0 0.0
        %1528 = vmatpush2.msra.mxu0 0.0
        %1529 = vmatprep.subr.mxu0 0.0
        %1530 = vmatpush2.msra.mxu0 0.0
        %1531 = vmatprep.subr.mxu0 0.0
        %1532 = vmatpush2.msra.mxu0 0.0
        %1533 = vmatprep.subr.mxu0 0.0
        %1534 = vmatpush2.msra.mxu0 0.0
        %1535 = vmatprep.subr.mxu0 0.0
        %1536 = vmatpush2.msra.mxu0 0.0
        %1537 = vmatprep.subr.mxu0 0.0
        %1538 = vmatpush2.msra.mxu0 0.0
        %1539 = vmatprep.subr.mxu0 0.0
        %1540 = vmatpush2.msra.mxu0 0.0
        %1541 = vmatprep.subr.mxu0 0.0
        %1542 = vmatpush2.msra.mxu0 0.0
        %1543 = vmatprep.subr.mxu0 0.0
        %1544 = vmatpush2.msra.mxu0 0.0
        %1545 = vmatprep.subr.mxu0 0.0
        %1546 = vmatpush2.msra.mxu0 0.0
        %1547 = vmatprep.subr.mxu0 0.0
        %1548 = vmatpush2.msra.mxu0 0.0
        %1549 = vmatprep.mubr.f32.mxu0 0.0
        %1550 = vmatmul.mubr.f32.gmra.mxu0 %v1184
        %v1551 = vpop.f32.mrf.mxu0
        %v1552 = vadd.f32 0.0, %v1551
        %v1553 = vpop.f32.mrf.mxu0
        %1554 = vdwg.mxu0
        %v1555 = vadd.f32 %v1484, %v1552
        %v1556 = vadd.f32 %v1555, %v426
        %s1557 = scalar_lea.vmem %s355, 16 [#allocation8]
        %v1558 = vld [vmem:[%s1557] sm:$0xff]
        %v1559 = vadd.f32 %v1556, %v1558
        %v1560 = vmul.f32 %v1559, 0.5
        %v1561 = vtanh.pop %v1560
        %v1562 = vmul.f32 %v1560, %v1561
        %v1563 = vadd.f32 %v1560, %v1562
        %v1564 = vld [vmem:[%s1557 + $0x8] sm:$0xff]
        %v1565 = vsub.f32 %v1564, %v1556
        %v1566 = vmul.f32 %v1565, 0.5
        %v1567 = vtanh.pop %v1566
        %v1568 = vmul.f32 %v1566, %v1567
        %v1569 = vadd.f32 %v1566, %v1568
        %1570 = vmatprep.subr.mxu0 0.0
        %1571 = vmatpush1.msra.mxu0 0.0
        %1572 = vmatprep.subr.mxu0 0.0
        %1573 = vmatpush1.msra.mxu0 0.0
        %1574 = vmatprep.subr.mxu0 0.0
        %1575 = vmatpush1.msra.mxu0 0.0
        %1576 = vmatprep.subr.mxu0 0.0
        %1577 = vmatpush1.msra.mxu0 0.0
        %1578 = vmatprep.subr.mxu0 0.0
        %1579 = vmatpush1.msra.mxu0 0.0
        %1580 = vmatprep.subr.mxu0 0.0
        %1581 = vmatpush1.msra.mxu0 0.0
        %1582 = vmatprep.subr.mxu0 0.0
        %1583 = vmatpush1.msra.mxu0 0.0
        %1584 = vmatprep.subr.mxu0 0.0
        %1585 = vmatpush1.msra.mxu0 0.0
        %1586 = vmatprep.subr.mxu0 0.0
        %1587 = vmatpush1.msra.mxu0 0.0
        %1588 = vmatprep.subr.mxu0 0.0
        %1589 = vmatpush1.msra.mxu0 0.0
        %1590 = vmatprep.subr.mxu0 0.0
        %1591 = vmatpush1.msra.mxu0 0.0
        %1592 = vmatprep.subr.mxu0 0.0
        %1593 = vmatpush1.msra.mxu0 0.0
        %1594 = vmatprep.subr.mxu0 0.0
        %1595 = vmatpush1.msra.mxu0 0.0
        %1596 = vmatprep.subr.mxu0 0.0
        %1597 = vmatpush1.msra.mxu0 0.0
        %1598 = vmatprep.subr.mxu0 0.0
        %1599 = vmatpush1.msra.mxu0 %v452
        %1600 = vmatprep.subr.mxu0 0.0
        %1601 = vmatpush1.msra.mxu0 %v451
        %1602 = vmatprep.subr.mxu0 0.0
        %1603 = vmatpush2.msra.mxu0 0.0
        %1604 = vmatprep.subr.mxu0 0.0
        %1605 = vmatpush2.msra.mxu0 0.0
        %1606 = vmatprep.subr.mxu0 0.0
        %1607 = vmatpush2.msra.mxu0 0.0
        %1608 = vmatprep.subr.mxu0 0.0
        %1609 = vmatpush2.msra.mxu0 0.0
        %1610 = vmatprep.subr.mxu0 0.0
        %1611 = vmatpush2.msra.mxu0 0.0
        %1612 = vmatprep.subr.mxu0 0.0
        %1613 = vmatpush2.msra.mxu0 0.0
        %1614 = vmatprep.subr.mxu0 0.0
        %1615 = vmatpush2.msra.mxu0 0.0
        %1616 = vmatprep.subr.mxu0 0.0
        %1617 = vmatpush2.msra.mxu0 0.0
        %1618 = vmatprep.subr.mxu0 0.0
        %1619 = vmatpush2.msra.mxu0 0.0
        %1620 = vmatprep.subr.mxu0 0.0
        %1621 = vmatpush2.msra.mxu0 0.0
        %1622 = vmatprep.subr.mxu0 0.0
        %1623 = vmatpush2.msra.mxu0 0.0
        %1624 = vmatprep.subr.mxu0 0.0
        %1625 = vmatpush2.msra.mxu0 0.0
        %1626 = vmatprep.subr.mxu0 0.0
        %1627 = vmatpush2.msra.mxu0 0.0
        %1628 = vmatprep.subr.mxu0 0.0
        %1629 = vmatpush2.msra.mxu0 0.0
        %1630 = vmatprep.subr.mxu0 0.0
        %1631 = vmatpush2.msra.mxu0 0.0
        %1632 = vmatprep.subr.mxu0 0.0
        %1633 = vmatpush2.msra.mxu0 0.0
        %1634 = vmatprep.mubr.f32.mxu0 0.0
        %1635 = vmatmul.mubr.f32.gmra.mxu0 %v963
        %v1636 = vpop.f32.mrf.mxu0
        %v1637 = vadd.f32 0.0, %v1636
        %v1638 = vpop.f32.mrf.mxu0
        %1639 = vdwg.mxu0
        %1640 = vmatprep.subr.mxu0 0.0
        %1641 = vmatpush1.msra.mxu0 0.0
        %1642 = vmatprep.subr.mxu0 0.0
        %1643 = vmatpush1.msra.mxu0 0.0
        %1644 = vmatprep.subr.mxu0 0.0
        %1645 = vmatpush1.msra.mxu0 0.0
        %1646 = vmatprep.subr.mxu0 0.0
        %1647 = vmatpush1.msra.mxu0 0.0
        %1648 = vmatprep.subr.mxu0 0.0
        %1649 = vmatpush1.msra.mxu0 0.0
        %1650 = vmatprep.subr.mxu0 0.0
        %1651 = vmatpush1.msra.mxu0 0.0
        %1652 = vmatprep.subr.mxu0 0.0
        %1653 = vmatpush1.msra.mxu0 0.0
        %1654 = vmatprep.subr.mxu0 0.0
        %1655 = vmatpush1.msra.mxu0 0.0
        %1656 = vmatprep.subr.mxu0 0.0
        %1657 = vmatpush1.msra.mxu0 0.0
        %1658 = vmatprep.subr.mxu0 0.0
        %1659 = vmatpush1.msra.mxu0 0.0
        %1660 = vmatprep.subr.mxu0 0.0
        %1661 = vmatpush1.msra.mxu0 0.0
        %1662 = vmatprep.subr.mxu0 0.0
        %1663 = vmatpush1.msra.mxu0 0.0
        %1664 = vmatprep.subr.mxu0 0.0
        %1665 = vmatpush1.msra.mxu0 0.0
        %1666 = vmatprep.subr.mxu0 0.0
        %1667 = vmatpush1.msra.mxu0 0.0
        %1668 = vmatprep.subr.mxu0 0.0
        %1669 = vmatpush1.msra.mxu0 %v449
        %1670 = vmatprep.subr.mxu0 0.0
        %1671 = vmatpush1.msra.mxu0 %v448
        %1672 = vmatprep.subr.mxu0 0.0
        %1673 = vmatpush2.msra.mxu0 0.0
        %1674 = vmatprep.subr.mxu0 0.0
        %1675 = vmatpush2.msra.mxu0 0.0
        %1676 = vmatprep.subr.mxu0 0.0
        %1677 = vmatpush2.msra.mxu0 0.0
        %1678 = vmatprep.subr.mxu0 0.0
        %1679 = vmatpush2.msra.mxu0 0.0
        %1680 = vmatprep.subr.mxu0 0.0
        %1681 = vmatpush2.msra.mxu0 0.0
        %1682 = vmatprep.subr.mxu0 0.0
        %1683 = vmatpush2.msra.mxu0 0.0
        %1684 = vmatprep.subr.mxu0 0.0
        %1685 = vmatpush2.msra.mxu0 0.0
        %1686 = vmatprep.subr.mxu0 0.0
        %1687 = vmatpush2.msra.mxu0 0.0
        %1688 = vmatprep.subr.mxu0 0.0
        %1689 = vmatpush2.msra.mxu0 0.0
        %1690 = vmatprep.subr.mxu0 0.0
        %1691 = vmatpush2.msra.mxu0 0.0
        %1692 = vmatprep.subr.mxu0 0.0
        %1693 = vmatpush2.msra.mxu0 0.0
        %1694 = vmatprep.subr.mxu0 0.0
        %1695 = vmatpush2.msra.mxu0 0.0
        %1696 = vmatprep.subr.mxu0 0.0
        %1697 = vmatpush2.msra.mxu0 0.0
        %1698 = vmatprep.subr.mxu0 0.0
        %1699 = vmatpush2.msra.mxu0 0.0
        %1700 = vmatprep.subr.mxu0 0.0
        %1701 = vmatpush2.msra.mxu0 0.0
        %1702 = vmatprep.subr.mxu0 0.0
        %1703 = vmatpush2.msra.mxu0 0.0
        %1704 = vmatprep.mubr.f32.mxu0 0.0
        %1705 = vmatmul.mubr.f32.gmra.mxu0 %v963
        %v1706 = vpop.f32.mrf.mxu0
        %v1707 = vadd.f32 %v1637, %v1706
        %v1708 = vpop.f32.mrf.mxu0
        %1709 = vdwg.mxu0
        %v1710 = vsub.f32 %v448, %v451
        %v1711 = vsub.f32 %v449, %v452
        %v1712 = vand.u32 2147483647, %v1710
        %v1713 = vand.u32 2147483647, %v1711
        %1714 = vmatprep.subr.mxu0 0.0
        %1715 = vmatpush1.msra.mxu0 0.0
        %1716 = vmatprep.subr.mxu0 0.0
        %1717 = vmatpush1.msra.mxu0 0.0
        %1718 = vmatprep.subr.mxu0 0.0
        %1719 = vmatpush1.msra.mxu0 0.0
        %1720 = vmatprep.subr.mxu0 0.0
        %1721 = vmatpush1.msra.mxu0 0.0
        %1722 = vmatprep.subr.mxu0 0.0
        %1723 = vmatpush1.msra.mxu0 0.0
        %1724 = vmatprep.subr.mxu0 0.0
        %1725 = vmatpush1.msra.mxu0 0.0
        %1726 = vmatprep.subr.mxu0 0.0
        %1727 = vmatpush1.msra.mxu0 0.0
        %1728 = vmatprep.subr.mxu0 0.0
        %1729 = vmatpush1.msra.mxu0 0.0
        %1730 = vmatprep.subr.mxu0 0.0
        %1731 = vmatpush1.msra.mxu0 0.0
        %1732 = vmatprep.subr.mxu0 0.0
        %1733 = vmatpush1.msra.mxu0 0.0
        %1734 = vmatprep.subr.mxu0 0.0
        %1735 = vmatpush1.msra.mxu0 0.0
        %1736 = vmatprep.subr.mxu0 0.0
        %1737 = vmatpush1.msra.mxu0 0.0
        %1738 = vmatprep.subr.mxu0 0.0
        %1739 = vmatpush1.msra.mxu0 0.0
        %1740 = vmatprep.subr.mxu0 0.0
        %1741 = vmatpush1.msra.mxu0 0.0
        %1742 = vmatprep.subr.mxu0 0.0
        %1743 = vmatpush1.msra.mxu0 %v1713
        %1744 = vmatprep.subr.mxu0 0.0
        %1745 = vmatpush1.msra.mxu0 %v1712
        %1746 = vmatprep.subr.mxu0 0.0
        %1747 = vmatpush2.msra.mxu0 0.0
        %1748 = vmatprep.subr.mxu0 0.0
        %1749 = vmatpush2.msra.mxu0 0.0
        %1750 = vmatprep.subr.mxu0 0.0
        %1751 = vmatpush2.msra.mxu0 0.0
        %1752 = vmatprep.subr.mxu0 0.0
        %1753 = vmatpush2.msra.mxu0 0.0
        %1754 = vmatprep.subr.mxu0 0.0
        %1755 = vmatpush2.msra.mxu0 0.0
        %1756 = vmatprep.subr.mxu0 0.0
        %1757 = vmatpush2.msra.mxu0 0.0
        %1758 = vmatprep.subr.mxu0 0.0
        %1759 = vmatpush2.msra.mxu0 0.0
        %1760 = vmatprep.subr.mxu0 0.0
        %1761 = vmatpush2.msra.mxu0 0.0
        %1762 = vmatprep.subr.mxu0 0.0
        %1763 = vmatpush2.msra.mxu0 0.0
        %1764 = vmatprep.subr.mxu0 0.0
        %1765 = vmatpush2.msra.mxu0 0.0
        %1766 = vmatprep.subr.mxu0 0.0
        %1767 = vmatpush2.msra.mxu0 0.0
        %1768 = vmatprep.subr.mxu0 0.0
        %1769 = vmatpush2.msra.mxu0 0.0
        %1770 = vmatprep.subr.mxu0 0.0
        %1771 = vmatpush2.msra.mxu0 0.0
        %1772 = vmatprep.subr.mxu0 0.0
        %1773 = vmatpush2.msra.mxu0 0.0
        %1774 = vmatprep.subr.mxu0 0.0
        %1775 = vmatpush2.msra.mxu0 0.0
        %1776 = vmatprep.subr.mxu0 0.0
        %1777 = vmatpush2.msra.mxu0 0.0
        %1778 = vmatprep.mubr.f32.mxu0 0.0
        %1779 = vmatmul.mubr.f32.gmra.mxu0 %v1110
        %v1780 = vpop.f32.mrf.mxu0
        %v1781 = vadd.f32 0.0, %v1780
        %v1782 = vpop.f32.mrf.mxu0
        %1783 = vdwg.mxu0
        %v1784 = vadd.f32 %v1707, %v1781
        %1785 = vmatprep.subr.mxu0 0.0
        %1786 = vmatpush1.msra.mxu0 0.0
        %1787 = vmatprep.subr.mxu0 0.0
        %1788 = vmatpush1.msra.mxu0 0.0
        %1789 = vmatprep.subr.mxu0 0.0
        %1790 = vmatpush1.msra.mxu0 0.0
        %1791 = vmatprep.subr.mxu0 0.0
        %1792 = vmatpush1.msra.mxu0 0.0
        %1793 = vmatprep.subr.mxu0 0.0
        %1794 = vmatpush1.msra.mxu0 0.0
        %1795 = vmatprep.subr.mxu0 0.0
        %1796 = vmatpush1.msra.mxu0 0.0
        %1797 = vmatprep.subr.mxu0 0.0
        %1798 = vmatpush1.msra.mxu0 0.0
        %1799 = vmatprep.subr.mxu0 0.0
        %1800 = vmatpush1.msra.mxu0 0.0
        %1801 = vmatprep.subr.mxu0 0.0
        %1802 = vmatpush1.msra.mxu0 0.0
        %1803 = vmatprep.subr.mxu0 0.0
        %1804 = vmatpush1.msra.mxu0 0.0
        %1805 = vmatprep.subr.mxu0 0.0
        %1806 = vmatpush1.msra.mxu0 0.0
        %1807 = vmatprep.subr.mxu0 0.0
        %1808 = vmatpush1.msra.mxu0 0.0
        %1809 = vmatprep.subr.mxu0 0.0
        %1810 = vmatpush1.msra.mxu0 0.0
        %1811 = vmatprep.subr.mxu0 0.0
        %1812 = vmatpush1.msra.mxu0 0.0
        %1813 = vmatprep.subr.mxu0 0.0
        %1814 = vmatpush1.msra.mxu0 %v460
        %1815 = vmatprep.subr.mxu0 0.0
        %1816 = vmatpush1.msra.mxu0 %v459
        %1817 = vmatprep.subr.mxu0 0.0
        %1818 = vmatpush2.msra.mxu0 0.0
        %1819 = vmatprep.subr.mxu0 0.0
        %1820 = vmatpush2.msra.mxu0 0.0
        %1821 = vmatprep.subr.mxu0 0.0
        %1822 = vmatpush2.msra.mxu0 0.0
        %1823 = vmatprep.subr.mxu0 0.0
        %1824 = vmatpush2.msra.mxu0 0.0
        %1825 = vmatprep.subr.mxu0 0.0
        %1826 = vmatpush2.msra.mxu0 0.0
        %1827 = vmatprep.subr.mxu0 0.0
        %1828 = vmatpush2.msra.mxu0 0.0
        %1829 = vmatprep.subr.mxu0 0.0
        %1830 = vmatpush2.msra.mxu0 0.0
        %1831 = vmatprep.subr.mxu0 0.0
        %1832 = vmatpush2.msra.mxu0 0.0
        %1833 = vmatprep.subr.mxu0 0.0
        %1834 = vmatpush2.msra.mxu0 0.0
        %1835 = vmatprep.subr.mxu0 0.0
        %1836 = vmatpush2.msra.mxu0 0.0
        %1837 = vmatprep.subr.mxu0 0.0
        %1838 = vmatpush2.msra.mxu0 0.0
        %1839 = vmatprep.subr.mxu0 0.0
        %1840 = vmatpush2.msra.mxu0 0.0
        %1841 = vmatprep.subr.mxu0 0.0
        %1842 = vmatpush2.msra.mxu0 0.0
        %1843 = vmatprep.subr.mxu0 0.0
        %1844 = vmatpush2.msra.mxu0 0.0
        %1845 = vmatprep.subr.mxu0 0.0
        %1846 = vmatpush2.msra.mxu0 0.0
        %1847 = vmatprep.subr.mxu0 0.0
        %1848 = vmatpush2.msra.mxu0 0.0
        %1849 = vmatprep.mubr.f32.mxu0 0.0
        %1850 = vmatmul.mubr.f32.gmra.mxu0 %v1184
        %v1851 = vpop.f32.mrf.mxu0
        %v1852 = vadd.f32 0.0, %v1851
        %v1853 = vpop.f32.mrf.mxu0
        %1854 = vdwg.mxu0
        %v1855 = vadd.f32 %v1784, %v1852
        %v1856 = vadd.f32 %v1855, %v426
        %s1857 = scalar_lea.vmem %s355, 32 [#allocation8]
        %v1858 = vld [vmem:[%s1857] sm:$0xff]
        %v1859 = vadd.f32 %v1856, %v1858
        %v1860 = vmul.f32 %v1859, 0.5
        %v1861 = vtanh.pop %v1860
        %v1862 = vmul.f32 %v1860, %v1861
        %v1863 = vadd.f32 %v1860, %v1862
        %v1864 = vld [vmem:[%s1857 + $0x8] sm:$0xff]
        %v1865 = vsub.f32 %v1864, %v1856
        %v1866 = vmul.f32 %v1865, 0.5
        %v1867 = vtanh.pop %v1866
        %v1868 = vmul.f32 %v1866, %v1867
        %v1869 = vadd.f32 %v1866, %v1868
        %1871 = vrot.lane.b32.xlu0 %v416, 120
        %v1872 = vpop.permute.xlu0 %1871
        %vm1873 = vcmask 64512
        %v1874 = vsel %vm1873, %v1872, 0
        %1876 = vmatprep.subr.mxu0 0.0
        %1877 = vmatpush1.msra.mxu0 0.0
        %1878 = vmatprep.subr.mxu0 0.0
        %1879 = vmatpush1.msra.mxu0 0.0
        %1880 = vmatprep.subr.mxu0 0.0
        %1881 = vmatpush1.msra.mxu0 0.0
        %1882 = vmatprep.subr.mxu0 0.0
        %1883 = vmatpush1.msra.mxu0 0.0
        %1884 = vmatprep.subr.mxu0 0.0
        %1885 = vmatpush1.msra.mxu0 0.0
        %1886 = vmatprep.subr.mxu0 0.0
        %1887 = vmatpush1.msra.mxu0 0.0
        %1888 = vmatprep.subr.mxu0 0.0
        %1889 = vmatpush1.msra.mxu0 0.0
        %1890 = vmatprep.subr.mxu0 0.0
        %1891 = vmatpush1.msra.mxu0 0.0
        %1892 = vmatprep.subr.mxu0 0.0
        %1893 = vmatpush1.msra.mxu0 0.0
        %1894 = vmatprep.subr.mxu0 0.0
        %1895 = vmatpush1.msra.mxu0 0.0
        %1896 = vmatprep.subr.mxu0 0.0
        %1897 = vmatpush1.msra.mxu0 0.0
        %1898 = vmatprep.subr.mxu0 0.0
        %1899 = vmatpush1.msra.mxu0 0.0
        %1900 = vmatprep.subr.mxu0 0.0
        %1901 = vmatpush1.msra.mxu0 0.0
        %1902 = vmatprep.subr.mxu0 0.0
        %1903 = vmatpush1.msra.mxu0 0.0
        %1904 = vmatprep.subr.mxu0 0.0
        %1905 = vmatpush1.msra.mxu0 0.0
        %1906 = vmatprep.subr.mxu0 0.0
        %1907 = vmatpush1.msra.mxu0 %v546
        %1908 = vmatprep.subr.mxu0 0.0
        %1909 = vmatpush2.msra.mxu0 0.0
        %1910 = vmatprep.subr.mxu0 0.0
        %1911 = vmatpush2.msra.mxu0 0.0
        %1912 = vmatprep.subr.mxu0 0.0
        %1913 = vmatpush2.msra.mxu0 0.0
        %1914 = vmatprep.subr.mxu0 0.0
        %1915 = vmatpush2.msra.mxu0 0.0
        %1916 = vmatprep.subr.mxu0 0.0
        %1917 = vmatpush2.msra.mxu0 0.0
        %1918 = vmatprep.subr.mxu0 0.0
        %1919 = vmatpush2.msra.mxu0 0.0
        %1920 = vmatprep.subr.mxu0 0.0
        %1921 = vmatpush2.msra.mxu0 0.0
        %1922 = vmatprep.subr.mxu0 0.0
        %1923 = vmatpush2.msra.mxu0 0.0
        %1924 = vmatprep.subr.mxu0 0.0
        %1925 = vmatpush2.msra.mxu0 0.0
        %1926 = vmatprep.subr.mxu0 0.0
        %1927 = vmatpush2.msra.mxu0 0.0
        %1928 = vmatprep.subr.mxu0 0.0
        %1929 = vmatpush2.msra.mxu0 0.0
        %1930 = vmatprep.subr.mxu0 0.0
        %1931 = vmatpush2.msra.mxu0 0.0
        %1932 = vmatprep.subr.mxu0 0.0
        %1933 = vmatpush2.msra.mxu0 0.0
        %1934 = vmatprep.subr.mxu0 0.0
        %1935 = vmatpush2.msra.mxu0 0.0
        %1936 = vmatprep.subr.mxu0 0.0
        %1937 = vmatpush2.msra.mxu0 0.0
        %1938 = vmatprep.subr.mxu0 0.0
        %1939 = vmatpush2.msra.mxu0 0.0
        %1940 = vmatprep.mubr.f32.mxu0 0.0
        %1941 = vmatmul.mubr.f32.gmra.mxu0 %v1874
        %v1942 = vpop.f32.mrf.mxu0
        %v1943 = vadd.f32 0.0, %v1942
        %v1944 = vpop.f32.mrf.mxu0
        %1945 = vdwg.mxu0
        %v1946 = vsel %vm1873, %v416, 0
        %1948 = vmatprep.subr.mxu0 0.0
        %1949 = vmatpush1.msra.mxu0 0.0
        %1950 = vmatprep.subr.mxu0 0.0
        %1951 = vmatpush1.msra.mxu0 0.0
        %1952 = vmatprep.subr.mxu0 0.0
        %1953 = vmatpush1.msra.mxu0 0.0
        %1954 = vmatprep.subr.mxu0 0.0
        %1955 = vmatpush1.msra.mxu0 0.0
        %1956 = vmatprep.subr.mxu0 0.0
        %1957 = vmatpush1.msra.mxu0 0.0
        %1958 = vmatprep.subr.mxu0 0.0
        %1959 = vmatpush1.msra.mxu0 0.0
        %1960 = vmatprep.subr.mxu0 0.0
        %1961 = vmatpush1.msra.mxu0 0.0
        %1962 = vmatprep.subr.mxu0 0.0
        %1963 = vmatpush1.msra.mxu0 0.0
        %1964 = vmatprep.subr.mxu0 0.0
        %1965 = vmatpush1.msra.mxu0 0.0
        %1966 = vmatprep.subr.mxu0 0.0
        %1967 = vmatpush1.msra.mxu0 0.0
        %1968 = vmatprep.subr.mxu0 0.0
        %1969 = vmatpush1.msra.mxu0 0.0
        %1970 = vmatprep.subr.mxu0 0.0
        %1971 = vmatpush1.msra.mxu0 0.0
        %1972 = vmatprep.subr.mxu0 0.0
        %1973 = vmatpush1.msra.mxu0 0.0
        %1974 = vmatprep.subr.mxu0 0.0
        %1975 = vmatpush1.msra.mxu0 0.0
        %1976 = vmatprep.subr.mxu0 0.0
        %1977 = vmatpush1.msra.mxu0 0.0
        %1978 = vmatprep.subr.mxu0 0.0
        %1979 = vmatpush1.msra.mxu0 %v540
        %1980 = vmatprep.subr.mxu0 0.0
        %1981 = vmatpush2.msra.mxu0 0.0
        %1982 = vmatprep.subr.mxu0 0.0
        %1983 = vmatpush2.msra.mxu0 0.0
        %1984 = vmatprep.subr.mxu0 0.0
        %1985 = vmatpush2.msra.mxu0 0.0
        %1986 = vmatprep.subr.mxu0 0.0
        %1987 = vmatpush2.msra.mxu0 0.0
        %1988 = vmatprep.subr.mxu0 0.0
        %1989 = vmatpush2.msra.mxu0 0.0
        %1990 = vmatprep.subr.mxu0 0.0
        %1991 = vmatpush2.msra.mxu0 0.0
        %1992 = vmatprep.subr.mxu0 0.0
        %1993 = vmatpush2.msra.mxu0 0.0
        %1994 = vmatprep.subr.mxu0 0.0
        %1995 = vmatpush2.msra.mxu0 0.0
        %1996 = vmatprep.subr.mxu0 0.0
        %1997 = vmatpush2.msra.mxu0 0.0
        %1998 = vmatprep.subr.mxu0 0.0
        %1999 = vmatpush2.msra.mxu0 0.0
        %2000 = vmatprep.subr.mxu0 0.0
        %2001 = vmatpush2.msra.mxu0 0.0
        %2002 = vmatprep.subr.mxu0 0.0
        %2003 = vmatpush2.msra.mxu0 0.0
        %2004 = vmatprep.subr.mxu0 0.0
        %2005 = vmatpush2.msra.mxu0 0.0
        %2006 = vmatprep.subr.mxu0 0.0
        %2007 = vmatpush2.msra.mxu0 0.0
        %2008 = vmatprep.subr.mxu0 0.0
        %2009 = vmatpush2.msra.mxu0 0.0
        %2010 = vmatprep.subr.mxu0 0.0
        %2011 = vmatpush2.msra.mxu0 0.0
        %2012 = vmatprep.mubr.f32.mxu0 0.0
        %2013 = vmatmul.mubr.f32.gmra.mxu0 %v1946
        %v2014 = vpop.f32.mrf.mxu0
        %v2015 = vadd.f32 %v1943, %v2014
        %v2016 = vpop.f32.mrf.mxu0
        %2017 = vdwg.mxu0
        %2018 = vmatprep.subr.mxu0 0.0
        %2019 = vmatpush1.msra.mxu0 0.0
        %2020 = vmatprep.subr.mxu0 0.0
        %2021 = vmatpush1.msra.mxu0 0.0
        %2022 = vmatprep.subr.mxu0 0.0
        %2023 = vmatpush1.msra.mxu0 0.0
        %2024 = vmatprep.subr.mxu0 0.0
        %2025 = vmatpush1.msra.mxu0 0.0
        %2026 = vmatprep.subr.mxu0 0.0
        %2027 = vmatpush1.msra.mxu0 0.0
        %2028 = vmatprep.subr.mxu0 0.0
        %2029 = vmatpush1.msra.mxu0 0.0
        %2030 = vmatprep.subr.mxu0 0.0
        %2031 = vmatpush1.msra.mxu0 0.0
        %2032 = vmatprep.subr.mxu0 0.0
        %2033 = vmatpush1.msra.mxu0 0.0
        %2034 = vmatprep.subr.mxu0 0.0
        %2035 = vmatpush1.msra.mxu0 0.0
        %2036 = vmatprep.subr.mxu0 0.0
        %2037 = vmatpush1.msra.mxu0 0.0
        %2038 = vmatprep.subr.mxu0 0.0
        %2039 = vmatpush1.msra.mxu0 0.0
        %2040 = vmatprep.subr.mxu0 0.0
        %2041 = vmatpush1.msra.mxu0 0.0
        %2042 = vmatprep.subr.mxu0 0.0
        %2043 = vmatpush1.msra.mxu0 0.0
        %2044 = vmatprep.subr.mxu0 0.0
        %2045 = vmatpush1.msra.mxu0 0.0
        %2046 = vmatprep.subr.mxu0 0.0
        %2047 = vmatpush1.msra.mxu0 0.0
        %2048 = vmatprep.subr.mxu0 0.0
        %2049 = vmatpush1.msra.mxu0 %v623
        %2050 = vmatprep.subr.mxu0 0.0
        %2051 = vmatpush2.msra.mxu0 0.0
        %2052 = vmatprep.subr.mxu0 0.0
        %2053 = vmatpush2.msra.mxu0 0.0
        %2054 = vmatprep.subr.mxu0 0.0
        %2055 = vmatpush2.msra.mxu0 0.0
        %2056 = vmatprep.subr.mxu0 0.0
        %2057 = vmatpush2.msra.mxu0 0.0
        %2058 = vmatprep.subr.mxu0 0.0
        %2059 = vmatpush2.msra.mxu0 0.0
        %2060 = vmatprep.subr.mxu0 0.0
        %2061 = vmatpush2.msra.mxu0 0.0
        %2062 = vmatprep.subr.mxu0 0.0
        %2063 = vmatpush2.msra.mxu0 0.0
        %2064 = vmatprep.subr.mxu0 0.0
        %2065 = vmatpush2.msra.mxu0 0.0
        %2066 = vmatprep.subr.mxu0 0.0
        %2067 = vmatpush2.msra.mxu0 0.0
        %2068 = vmatprep.subr.mxu0 0.0
        %2069 = vmatpush2.msra.mxu0 0.0
        %2070 = vmatprep.subr.mxu0 0.0
        %2071 = vmatpush2.msra.mxu0 0.0
        %2072 = vmatprep.subr.mxu0 0.0
        %2073 = vmatpush2.msra.mxu0 0.0
        %2074 = vmatprep.subr.mxu0 0.0
        %2075 = vmatpush2.msra.mxu0 0.0
        %2076 = vmatprep.subr.mxu0 0.0
        %2077 = vmatpush2.msra.mxu0 0.0
        %2078 = vmatprep.subr.mxu0 0.0
        %2079 = vmatpush2.msra.mxu0 0.0
        %2080 = vmatprep.subr.mxu0 0.0
        %2081 = vmatpush2.msra.mxu0 0.0
        %2082 = vmatprep.mubr.f32.mxu0 0.0
        %2083 = vmatmul.mubr.f32.gmra.mxu0 %v1946
        %v2084 = vpop.f32.mrf.mxu0
        %v2085 = vadd.f32 0.0, %v2084
        %v2086 = vpop.f32.mrf.mxu0
        %2087 = vdwg.mxu0
        %v2088 = vadd.f32 %v2015, %v2085
        %2089 = vmatprep.subr.mxu0 0.0
        %2090 = vmatpush1.msra.mxu0 0.0
        %2091 = vmatprep.subr.mxu0 0.0
        %2092 = vmatpush1.msra.mxu0 0.0
        %2093 = vmatprep.subr.mxu0 0.0
        %2094 = vmatpush1.msra.mxu0 0.0
        %2095 = vmatprep.subr.mxu0 0.0
        %2096 = vmatpush1.msra.mxu0 0.0
        %2097 = vmatprep.subr.mxu0 0.0
        %2098 = vmatpush1.msra.mxu0 0.0
        %2099 = vmatprep.subr.mxu0 0.0
        %2100 = vmatpush1.msra.mxu0 0.0
        %2101 = vmatprep.subr.mxu0 0.0
        %2102 = vmatpush1.msra.mxu0 0.0
        %2103 = vmatprep.subr.mxu0 0.0
        %2104 = vmatpush1.msra.mxu0 0.0
        %2105 = vmatprep.subr.mxu0 0.0
        %2106 = vmatpush1.msra.mxu0 0.0
        %2107 = vmatprep.subr.mxu0 0.0
        %2108 = vmatpush1.msra.mxu0 0.0
        %2109 = vmatprep.subr.mxu0 0.0
        %2110 = vmatpush1.msra.mxu0 0.0
        %2111 = vmatprep.subr.mxu0 0.0
        %2112 = vmatpush1.msra.mxu0 0.0
        %2113 = vmatprep.subr.mxu0 0.0
        %2114 = vmatpush1.msra.mxu0 0.0
        %2115 = vmatprep.subr.mxu0 0.0
        %2116 = vmatpush1.msra.mxu0 0.0
        %2117 = vmatprep.subr.mxu0 0.0
        %2118 = vmatpush1.msra.mxu0 0.0
        %2119 = vmatprep.subr.mxu0 0.0
        %2120 = vmatpush1.msra.mxu0 %v629
        %2121 = vmatprep.subr.mxu0 0.0
        %2122 = vmatpush2.msra.mxu0 0.0
        %2123 = vmatprep.subr.mxu0 0.0
        %2124 = vmatpush2.msra.mxu0 0.0
        %2125 = vmatprep.subr.mxu0 0.0
        %2126 = vmatpush2.msra.mxu0 0.0
        %2127 = vmatprep.subr.mxu0 0.0
        %2128 = vmatpush2.msra.mxu0 0.0
        %2129 = vmatprep.subr.mxu0 0.0
        %2130 = vmatpush2.msra.mxu0 0.0
        %2131 = vmatprep.subr.mxu0 0.0
        %2132 = vmatpush2.msra.mxu0 0.0
        %2133 = vmatprep.subr.mxu0 0.0
        %2134 = vmatpush2.msra.mxu0 0.0
        %2135 = vmatprep.subr.mxu0 0.0
        %2136 = vmatpush2.msra.mxu0 0.0
        %2137 = vmatprep.subr.mxu0 0.0
        %2138 = vmatpush2.msra.mxu0 0.0
        %2139 = vmatprep.subr.mxu0 0.0
        %2140 = vmatpush2.msra.mxu0 0.0
        %2141 = vmatprep.subr.mxu0 0.0
        %2142 = vmatpush2.msra.mxu0 0.0
        %2143 = vmatprep.subr.mxu0 0.0
        %2144 = vmatpush2.msra.mxu0 0.0
        %2145 = vmatprep.subr.mxu0 0.0
        %2146 = vmatpush2.msra.mxu0 0.0
        %2147 = vmatprep.subr.mxu0 0.0
        %2148 = vmatpush2.msra.mxu0 0.0
        %2149 = vmatprep.subr.mxu0 0.0
        %2150 = vmatpush2.msra.mxu0 0.0
        %2151 = vmatprep.subr.mxu0 0.0
        %2152 = vmatpush2.msra.mxu0 0.0
        %2153 = vmatprep.mubr.f32.mxu0 0.0
        %2154 = vmatmul.mubr.f32.gmra.mxu0 %v1874
        %v2155 = vpop.f32.mrf.mxu0
        %v2156 = vadd.f32 0.0, %v2155
        %v2157 = vpop.f32.mrf.mxu0
        %2158 = vdwg.mxu0
        %v2159 = vadd.f32 %v2088, %v2156
        %v2160 = vsub.f32 %v540, %v623
        %v2161 = vand.u32 2147483647, %v2160
        %v2163 = vsel %vm1873, %v418, 0
        %2165 = vmatprep.subr.mxu0 0.0
        %2166 = vmatpush1.msra.mxu0 0.0
        %2167 = vmatprep.subr.mxu0 0.0
        %2168 = vmatpush1.msra.mxu0 0.0
        %2169 = vmatprep.subr.mxu0 0.0
        %2170 = vmatpush1.msra.mxu0 0.0
        %2171 = vmatprep.subr.mxu0 0.0
        %2172 = vmatpush1.msra.mxu0 0.0
        %2173 = vmatprep.subr.mxu0 0.0
        %2174 = vmatpush1.msra.mxu0 0.0
        %2175 = vmatprep.subr.mxu0 0.0
        %2176 = vmatpush1.msra.mxu0 0.0
        %2177 = vmatprep.subr.mxu0 0.0
        %2178 = vmatpush1.msra.mxu0 0.0
        %2179 = vmatprep.subr.mxu0 0.0
        %2180 = vmatpush1.msra.mxu0 0.0
        %2181 = vmatprep.subr.mxu0 0.0
        %2182 = vmatpush1.msra.mxu0 0.0
        %2183 = vmatprep.subr.mxu0 0.0
        %2184 = vmatpush1.msra.mxu0 0.0
        %2185 = vmatprep.subr.mxu0 0.0
        %2186 = vmatpush1.msra.mxu0 0.0
        %2187 = vmatprep.subr.mxu0 0.0
        %2188 = vmatpush1.msra.mxu0 0.0
        %2189 = vmatprep.subr.mxu0 0.0
        %2190 = vmatpush1.msra.mxu0 0.0
        %2191 = vmatprep.subr.mxu0 0.0
        %2192 = vmatpush1.msra.mxu0 0.0
        %2193 = vmatprep.subr.mxu0 0.0
        %2194 = vmatpush1.msra.mxu0 0.0
        %2195 = vmatprep.subr.mxu0 0.0
        %2196 = vmatpush1.msra.mxu0 %v2161
        %2197 = vmatprep.subr.mxu0 0.0
        %2198 = vmatpush2.msra.mxu0 0.0
        %2199 = vmatprep.subr.mxu0 0.0
        %2200 = vmatpush2.msra.mxu0 0.0
        %2201 = vmatprep.subr.mxu0 0.0
        %2202 = vmatpush2.msra.mxu0 0.0
        %2203 = vmatprep.subr.mxu0 0.0
        %2204 = vmatpush2.msra.mxu0 0.0
        %2205 = vmatprep.subr.mxu0 0.0
        %2206 = vmatpush2.msra.mxu0 0.0
        %2207 = vmatprep.subr.mxu0 0.0
        %2208 = vmatpush2.msra.mxu0 0.0
        %2209 = vmatprep.subr.mxu0 0.0
        %2210 = vmatpush2.msra.mxu0 0.0
        %2211 = vmatprep.subr.mxu0 0.0
        %2212 = vmatpush2.msra.mxu0 0.0
        %2213 = vmatprep.subr.mxu0 0.0
        %2214 = vmatpush2.msra.mxu0 0.0
        %2215 = vmatprep.subr.mxu0 0.0
        %2216 = vmatpush2.msra.mxu0 0.0
        %2217 = vmatprep.subr.mxu0 0.0
        %2218 = vmatpush2.msra.mxu0 0.0
        %2219 = vmatprep.subr.mxu0 0.0
        %2220 = vmatpush2.msra.mxu0 0.0
        %2221 = vmatprep.subr.mxu0 0.0
        %2222 = vmatpush2.msra.mxu0 0.0
        %2223 = vmatprep.subr.mxu0 0.0
        %2224 = vmatpush2.msra.mxu0 0.0
        %2225 = vmatprep.subr.mxu0 0.0
        %2226 = vmatpush2.msra.mxu0 0.0
        %2227 = vmatprep.subr.mxu0 0.0
        %2228 = vmatpush2.msra.mxu0 0.0
        %2229 = vmatprep.mubr.f32.mxu0 0.0
        %2230 = vmatmul.mubr.f32.gmra.mxu0 %v2163
        %v2231 = vpop.f32.mrf.mxu0
        %v2232 = vadd.f32 0.0, %v2231
        %v2233 = vpop.f32.mrf.mxu0
        %2234 = vdwg.mxu0
        %v2235 = vadd.f32 %v2159, %v2232
        %v2236 = vsub.f32 %v546, %v629
        %v2237 = vand.u32 2147483647, %v2236
        %2238 = vrot.lane.b32.xlu0 %v418, 120
        %v2239 = vpop.permute.xlu0 %2238
        %v2240 = vsel %vm1873, %v2239, 0
        %2242 = vmatprep.subr.mxu0 0.0
        %2243 = vmatpush1.msra.mxu0 0.0
        %2244 = vmatprep.subr.mxu0 0.0
        %2245 = vmatpush1.msra.mxu0 0.0
        %2246 = vmatprep.subr.mxu0 0.0
        %2247 = vmatpush1.msra.mxu0 0.0
        %2248 = vmatprep.subr.mxu0 0.0
        %2249 = vmatpush1.msra.mxu0 0.0
        %2250 = vmatprep.subr.mxu0 0.0
        %2251 = vmatpush1.msra.mxu0 0.0
        %2252 = vmatprep.subr.mxu0 0.0
        %2253 = vmatpush1.msra.mxu0 0.0
        %2254 = vmatprep.subr.mxu0 0.0
        %2255 = vmatpush1.msra.mxu0 0.0
        %2256 = vmatprep.subr.mxu0 0.0
        %2257 = vmatpush1.msra.mxu0 0.0
        %2258 = vmatprep.subr.mxu0 0.0
        %2259 = vmatpush1.msra.mxu0 0.0
        %2260 = vmatprep.subr.mxu0 0.0
        %2261 = vmatpush1.msra.mxu0 0.0
        %2262 = vmatprep.subr.mxu0 0.0
        %2263 = vmatpush1.msra.mxu0 0.0
        %2264 = vmatprep.subr.mxu0 0.0
        %2265 = vmatpush1.msra.mxu0 0.0
        %2266 = vmatprep.subr.mxu0 0.0
        %2267 = vmatpush1.msra.mxu0 0.0
        %2268 = vmatprep.subr.mxu0 0.0
        %2269 = vmatpush1.msra.mxu0 0.0
        %2270 = vmatprep.subr.mxu0 0.0
        %2271 = vmatpush1.msra.mxu0 0.0
        %2272 = vmatprep.subr.mxu0 0.0
        %2273 = vmatpush1.msra.mxu0 %v2237
        %2274 = vmatprep.subr.mxu0 0.0
        %2275 = vmatpush2.msra.mxu0 0.0
        %2276 = vmatprep.subr.mxu0 0.0
        %2277 = vmatpush2.msra.mxu0 0.0
        %2278 = vmatprep.subr.mxu0 0.0
        %2279 = vmatpush2.msra.mxu0 0.0
        %2280 = vmatprep.subr.mxu0 0.0
        %2281 = vmatpush2.msra.mxu0 0.0
        %2282 = vmatprep.subr.mxu0 0.0
        %2283 = vmatpush2.msra.mxu0 0.0
        %2284 = vmatprep.subr.mxu0 0.0
        %2285 = vmatpush2.msra.mxu0 0.0
        %2286 = vmatprep.subr.mxu0 0.0
        %2287 = vmatpush2.msra.mxu0 0.0
        %2288 = vmatprep.subr.mxu0 0.0
        %2289 = vmatpush2.msra.mxu0 0.0
        %2290 = vmatprep.subr.mxu0 0.0
        %2291 = vmatpush2.msra.mxu0 0.0
        %2292 = vmatprep.subr.mxu0 0.0
        %2293 = vmatpush2.msra.mxu0 0.0
        %2294 = vmatprep.subr.mxu0 0.0
        %2295 = vmatpush2.msra.mxu0 0.0
        %2296 = vmatprep.subr.mxu0 0.0
        %2297 = vmatpush2.msra.mxu0 0.0
        %2298 = vmatprep.subr.mxu0 0.0
        %2299 = vmatpush2.msra.mxu0 0.0
        %2300 = vmatprep.subr.mxu0 0.0
        %2301 = vmatpush2.msra.mxu0 0.0
        %2302 = vmatprep.subr.mxu0 0.0
        %2303 = vmatpush2.msra.mxu0 0.0
        %2304 = vmatprep.subr.mxu0 0.0
        %2305 = vmatpush2.msra.mxu0 0.0
        %2306 = vmatprep.mubr.f32.mxu0 0.0
        %2307 = vmatmul.mubr.f32.gmra.mxu0 %v2240
        %v2308 = vpop.f32.mrf.mxu0
        %v2309 = vadd.f32 0.0, %v2308
        %v2310 = vpop.f32.mrf.mxu0
        %2311 = vdwg.mxu0
        %v2312 = vadd.f32 %v2235, %v2309
        %v2314 = vsel %vm1873, %v420, 0
        %2316 = vmatprep.subr.mxu0 0.0
        %2317 = vmatpush1.msra.mxu0 0.0
        %2318 = vmatprep.subr.mxu0 0.0
        %2319 = vmatpush1.msra.mxu0 0.0
        %2320 = vmatprep.subr.mxu0 0.0
        %2321 = vmatpush1.msra.mxu0 0.0
        %2322 = vmatprep.subr.mxu0 0.0
        %2323 = vmatpush1.msra.mxu0 0.0
        %2324 = vmatprep.subr.mxu0 0.0
        %2325 = vmatpush1.msra.mxu0 0.0
        %2326 = vmatprep.subr.mxu0 0.0
        %2327 = vmatpush1.msra.mxu0 0.0
        %2328 = vmatprep.subr.mxu0 0.0
        %2329 = vmatpush1.msra.mxu0 0.0
        %2330 = vmatprep.subr.mxu0 0.0
        %2331 = vmatpush1.msra.mxu0 0.0
        %2332 = vmatprep.subr.mxu0 0.0
        %2333 = vmatpush1.msra.mxu0 0.0
        %2334 = vmatprep.subr.mxu0 0.0
        %2335 = vmatpush1.msra.mxu0 0.0
        %2336 = vmatprep.subr.mxu0 0.0
        %2337 = vmatpush1.msra.mxu0 0.0
        %2338 = vmatprep.subr.mxu0 0.0
        %2339 = vmatpush1.msra.mxu0 0.0
        %2340 = vmatprep.subr.mxu0 0.0
        %2341 = vmatpush1.msra.mxu0 0.0
        %2342 = vmatprep.subr.mxu0 0.0
        %2343 = vmatpush1.msra.mxu0 0.0
        %2344 = vmatprep.subr.mxu0 0.0
        %2345 = vmatpush1.msra.mxu0 0.0
        %2346 = vmatprep.subr.mxu0 0.0
        %2347 = vmatpush1.msra.mxu0 %v1263
        %2348 = vmatprep.subr.mxu0 0.0
        %2349 = vmatpush2.msra.mxu0 0.0
        %2350 = vmatprep.subr.mxu0 0.0
        %2351 = vmatpush2.msra.mxu0 0.0
        %2352 = vmatprep.subr.mxu0 0.0
        %2353 = vmatpush2.msra.mxu0 0.0
        %2354 = vmatprep.subr.mxu0 0.0
        %2355 = vmatpush2.msra.mxu0 0.0
        %2356 = vmatprep.subr.mxu0 0.0
        %2357 = vmatpush2.msra.mxu0 0.0
        %2358 = vmatprep.subr.mxu0 0.0
        %2359 = vmatpush2.msra.mxu0 0.0
        %2360 = vmatprep.subr.mxu0 0.0
        %2361 = vmatpush2.msra.mxu0 0.0
        %2362 = vmatprep.subr.mxu0 0.0
        %2363 = vmatpush2.msra.mxu0 0.0
        %2364 = vmatprep.subr.mxu0 0.0
        %2365 = vmatpush2.msra.mxu0 0.0
        %2366 = vmatprep.subr.mxu0 0.0
        %2367 = vmatpush2.msra.mxu0 0.0
        %2368 = vmatprep.subr.mxu0 0.0
        %2369 = vmatpush2.msra.mxu0 0.0
        %2370 = vmatprep.subr.mxu0 0.0
        %2371 = vmatpush2.msra.mxu0 0.0
        %2372 = vmatprep.subr.mxu0 0.0
        %2373 = vmatpush2.msra.mxu0 0.0
        %2374 = vmatprep.subr.mxu0 0.0
        %2375 = vmatpush2.msra.mxu0 0.0
        %2376 = vmatprep.subr.mxu0 0.0
        %2377 = vmatpush2.msra.mxu0 0.0
        %2378 = vmatprep.subr.mxu0 0.0
        %2379 = vmatpush2.msra.mxu0 0.0
        %2380 = vmatprep.mubr.f32.mxu0 0.0
        %2381 = vmatmul.mubr.f32.gmra.mxu0 %v2314
        %v2382 = vpop.f32.mrf.mxu0
        %v2383 = vadd.f32 0.0, %v2382
        %v2384 = vpop.f32.mrf.mxu0
        %2385 = vdwg.mxu0
        %v2386 = vadd.f32 %v2312, %v2383
        %2387 = vrot.lane.b32.xlu0 %v420, 120
        %v2388 = vpop.permute.xlu0 %2387
        %v2389 = vsel %vm1873, %v2388, 0
        %2391 = vmatprep.subr.mxu0 0.0
        %2392 = vmatpush1.msra.mxu0 0.0
        %2393 = vmatprep.subr.mxu0 0.0
        %2394 = vmatpush1.msra.mxu0 0.0
        %2395 = vmatprep.subr.mxu0 0.0
        %2396 = vmatpush1.msra.mxu0 0.0
        %2397 = vmatprep.subr.mxu0 0.0
        %2398 = vmatpush1.msra.mxu0 0.0
        %2399 = vmatprep.subr.mxu0 0.0
        %2400 = vmatpush1.msra.mxu0 0.0
        %2401 = vmatprep.subr.mxu0 0.0
        %2402 = vmatpush1.msra.mxu0 0.0
        %2403 = vmatprep.subr.mxu0 0.0
        %2404 = vmatpush1.msra.mxu0 0.0
        %2405 = vmatprep.subr.mxu0 0.0
        %2406 = vmatpush1.msra.mxu0 0.0
        %2407 = vmatprep.subr.mxu0 0.0
        %2408 = vmatpush1.msra.mxu0 0.0
        %2409 = vmatprep.subr.mxu0 0.0
        %2410 = vmatpush1.msra.mxu0 0.0
        %2411 = vmatprep.subr.mxu0 0.0
        %2412 = vmatpush1.msra.mxu0 0.0
        %2413 = vmatprep.subr.mxu0 0.0
        %2414 = vmatpush1.msra.mxu0 0.0
        %2415 = vmatprep.subr.mxu0 0.0
        %2416 = vmatpush1.msra.mxu0 0.0
        %2417 = vmatprep.subr.mxu0 0.0
        %2418 = vmatpush1.msra.mxu0 0.0
        %2419 = vmatprep.subr.mxu0 0.0
        %2420 = vmatpush1.msra.mxu0 0.0
        %2421 = vmatprep.subr.mxu0 0.0
        %2422 = vmatpush1.msra.mxu0 %v1269
        %2423 = vmatprep.subr.mxu0 0.0
        %2424 = vmatpush2.msra.mxu0 0.0
        %2425 = vmatprep.subr.mxu0 0.0
        %2426 = vmatpush2.msra.mxu0 0.0
        %2427 = vmatprep.subr.mxu0 0.0
        %2428 = vmatpush2.msra.mxu0 0.0
        %2429 = vmatprep.subr.mxu0 0.0
        %2430 = vmatpush2.msra.mxu0 0.0
        %2431 = vmatprep.subr.mxu0 0.0
        %2432 = vmatpush2.msra.mxu0 0.0
        %2433 = vmatprep.subr.mxu0 0.0
        %2434 = vmatpush2.msra.mxu0 0.0
        %2435 = vmatprep.subr.mxu0 0.0
        %2436 = vmatpush2.msra.mxu0 0.0
        %2437 = vmatprep.subr.mxu0 0.0
        %2438 = vmatpush2.msra.mxu0 0.0
        %2439 = vmatprep.subr.mxu0 0.0
        %2440 = vmatpush2.msra.mxu0 0.0
        %2441 = vmatprep.subr.mxu0 0.0
        %2442 = vmatpush2.msra.mxu0 0.0
        %2443 = vmatprep.subr.mxu0 0.0
        %2444 = vmatpush2.msra.mxu0 0.0
        %2445 = vmatprep.subr.mxu0 0.0
        %2446 = vmatpush2.msra.mxu0 0.0
        %2447 = vmatprep.subr.mxu0 0.0
        %2448 = vmatpush2.msra.mxu0 0.0
        %2449 = vmatprep.subr.mxu0 0.0
        %2450 = vmatpush2.msra.mxu0 0.0
        %2451 = vmatprep.subr.mxu0 0.0
        %2452 = vmatpush2.msra.mxu0 0.0
        %2453 = vmatprep.subr.mxu0 0.0
        %2454 = vmatpush2.msra.mxu0 0.0
        %2455 = vmatprep.mubr.f32.mxu0 0.0
        %2456 = vmatmul.mubr.f32.gmra.mxu0 %v2389
        %v2457 = vpop.f32.mrf.mxu0
        %v2458 = vadd.f32 0.0, %v2457
        %v2459 = vpop.f32.mrf.mxu0
        %2460 = vdwg.mxu0
        %v2461 = vadd.f32 %v2386, %v2458
        %v2462 = vadd.f32 %v2461, %v434
        %v2463 = vadd.f32 %v2462, %v1258
        %v2464 = vsub.f32 %v1264, %v2462
        %2465 = vst [vmem:[%s407] sm:$0xff] %v2463
        %2466 = vst [vmem:[%s407 + $0x8] sm:$0xff] %v2464
        %v2467 = vmul.f32 %v2463, 0.5
        %v2468 = vtanh.pop %v2467
        %v2469 = vmul.f32 %v2467, %v2468
        %v2470 = vadd.f32 %v2467, %v2469
        %2471 = vst [vmem:[%s400] sm:$0xff] %v2470
        %v2472 = vmul.f32 %v2464, 0.5
        %v2473 = vtanh.pop %v2472
        %v2474 = vmul.f32 %v2472, %v2473
        %v2475 = vadd.f32 %v2472, %v2474
        %2476 = vst [vmem:[%s400 + $0x8] sm:$0xff] %v2475
        %2477 = vmatprep.subr.mxu0 0.0
        %2478 = vmatpush1.msra.mxu0 0.0
        %2479 = vmatprep.subr.mxu0 0.0
        %2480 = vmatpush1.msra.mxu0 0.0
        %2481 = vmatprep.subr.mxu0 0.0
        %2482 = vmatpush1.msra.mxu0 0.0
        %2483 = vmatprep.subr.mxu0 0.0
        %2484 = vmatpush1.msra.mxu0 0.0
        %2485 = vmatprep.subr.mxu0 0.0
        %2486 = vmatpush1.msra.mxu0 0.0
        %2487 = vmatprep.subr.mxu0 0.0
        %2488 = vmatpush1.msra.mxu0 0.0
        %2489 = vmatprep.subr.mxu0 0.0
        %2490 = vmatpush1.msra.mxu0 0.0
        %2491 = vmatprep.subr.mxu0 0.0
        %2492 = vmatpush1.msra.mxu0 0.0
        %2493 = vmatprep.subr.mxu0 0.0
        %2494 = vmatpush1.msra.mxu0 0.0
        %2495 = vmatprep.subr.mxu0 0.0
        %2496 = vmatpush1.msra.mxu0 0.0
        %2497 = vmatprep.subr.mxu0 0.0
        %2498 = vmatpush1.msra.mxu0 0.0
        %2499 = vmatprep.subr.mxu0 0.0
        %2500 = vmatpush1.msra.mxu0 0.0
        %2501 = vmatprep.subr.mxu0 0.0
        %2502 = vmatpush1.msra.mxu0 0.0
        %2503 = vmatprep.subr.mxu0 0.0
        %2504 = vmatpush1.msra.mxu0 0.0
        %2505 = vmatprep.subr.mxu0 0.0
        %2506 = vmatpush1.msra.mxu0 0.0
        %2507 = vmatprep.subr.mxu0 0.0
        %2508 = vmatpush1.msra.mxu0 %v712
        %2509 = vmatprep.subr.mxu0 0.0
        %2510 = vmatpush2.msra.mxu0 0.0
        %2511 = vmatprep.subr.mxu0 0.0
        %2512 = vmatpush2.msra.mxu0 0.0
        %2513 = vmatprep.subr.mxu0 0.0
        %2514 = vmatpush2.msra.mxu0 0.0
        %2515 = vmatprep.subr.mxu0 0.0
        %2516 = vmatpush2.msra.mxu0 0.0
        %2517 = vmatprep.subr.mxu0 0.0
        %2518 = vmatpush2.msra.mxu0 0.0
        %2519 = vmatprep.subr.mxu0 0.0
        %2520 = vmatpush2.msra.mxu0 0.0
        %2521 = vmatprep.subr.mxu0 0.0
        %2522 = vmatpush2.msra.mxu0 0.0
        %2523 = vmatprep.subr.mxu0 0.0
        %2524 = vmatpush2.msra.mxu0 0.0
        %2525 = vmatprep.subr.mxu0 0.0
        %2526 = vmatpush2.msra.mxu0 0.0
        %2527 = vmatprep.subr.mxu0 0.0
        %2528 = vmatpush2.msra.mxu0 0.0
        %2529 = vmatprep.subr.mxu0 0.0
        %2530 = vmatpush2.msra.mxu0 0.0
        %2531 = vmatprep.subr.mxu0 0.0
        %2532 = vmatpush2.msra.mxu0 0.0
        %2533 = vmatprep.subr.mxu0 0.0
        %2534 = vmatpush2.msra.mxu0 0.0
        %2535 = vmatprep.subr.mxu0 0.0
        %2536 = vmatpush2.msra.mxu0 0.0
        %2537 = vmatprep.subr.mxu0 0.0
        %2538 = vmatpush2.msra.mxu0 0.0
        %2539 = vmatprep.subr.mxu0 0.0
        %2540 = vmatpush2.msra.mxu0 0.0
        %2541 = vmatprep.mubr.f32.mxu0 0.0
        %2542 = vmatmul.mubr.f32.gmra.mxu0 %v1874
        %v2543 = vpop.f32.mrf.mxu0
        %v2544 = vadd.f32 0.0, %v2543
        %v2545 = vpop.f32.mrf.mxu0
        %2546 = vdwg.mxu0
        %2547 = vmatprep.subr.mxu0 0.0
        %2548 = vmatpush1.msra.mxu0 0.0
        %2549 = vmatprep.subr.mxu0 0.0
        %2550 = vmatpush1.msra.mxu0 0.0
        %2551 = vmatprep.subr.mxu0 0.0
        %2552 = vmatpush1.msra.mxu0 0.0
        %2553 = vmatprep.subr.mxu0 0.0
        %2554 = vmatpush1.msra.mxu0 0.0
        %2555 = vmatprep.subr.mxu0 0.0
        %2556 = vmatpush1.msra.mxu0 0.0
        %2557 = vmatprep.subr.mxu0 0.0
        %2558 = vmatpush1.msra.mxu0 0.0
        %2559 = vmatprep.subr.mxu0 0.0
        %2560 = vmatpush1.msra.mxu0 0.0
        %2561 = vmatprep.subr.mxu0 0.0
        %2562 = vmatpush1.msra.mxu0 0.0
        %2563 = vmatprep.subr.mxu0 0.0
        %2564 = vmatpush1.msra.mxu0 0.0
        %2565 = vmatprep.subr.mxu0 0.0
        %2566 = vmatpush1.msra.mxu0 0.0
        %2567 = vmatprep.subr.mxu0 0.0
        %2568 = vmatpush1.msra.mxu0 0.0
        %2569 = vmatprep.subr.mxu0 0.0
        %2570 = vmatpush1.msra.mxu0 0.0
        %2571 = vmatprep.subr.mxu0 0.0
        %2572 = vmatpush1.msra.mxu0 0.0
        %2573 = vmatprep.subr.mxu0 0.0
        %2574 = vmatpush1.msra.mxu0 0.0
        %2575 = vmatprep.subr.mxu0 0.0
        %2576 = vmatpush1.msra.mxu0 0.0
        %2577 = vmatprep.subr.mxu0 0.0
        %2578 = vmatpush1.msra.mxu0 %v706
        %2579 = vmatprep.subr.mxu0 0.0
        %2580 = vmatpush2.msra.mxu0 0.0
        %2581 = vmatprep.subr.mxu0 0.0
        %2582 = vmatpush2.msra.mxu0 0.0
        %2583 = vmatprep.subr.mxu0 0.0
        %2584 = vmatpush2.msra.mxu0 0.0
        %2585 = vmatprep.subr.mxu0 0.0
        %2586 = vmatpush2.msra.mxu0 0.0
        %2587 = vmatprep.subr.mxu0 0.0
        %2588 = vmatpush2.msra.mxu0 0.0
        %2589 = vmatprep.subr.mxu0 0.0
        %2590 = vmatpush2.msra.mxu0 0.0
        %2591 = vmatprep.subr.mxu0 0.0
        %2592 = vmatpush2.msra.mxu0 0.0
        %2593 = vmatprep.subr.mxu0 0.0
        %2594 = vmatpush2.msra.mxu0 0.0
        %2595 = vmatprep.subr.mxu0 0.0
        %2596 = vmatpush2.msra.mxu0 0.0
        %2597 = vmatprep.subr.mxu0 0.0
        %2598 = vmatpush2.msra.mxu0 0.0
        %2599 = vmatprep.subr.mxu0 0.0
        %2600 = vmatpush2.msra.mxu0 0.0
        %2601 = vmatprep.subr.mxu0 0.0
        %2602 = vmatpush2.msra.mxu0 0.0
        %2603 = vmatprep.subr.mxu0 0.0
        %2604 = vmatpush2.msra.mxu0 0.0
        %2605 = vmatprep.subr.mxu0 0.0
        %2606 = vmatpush2.msra.mxu0 0.0
        %2607 = vmatprep.subr.mxu0 0.0
        %2608 = vmatpush2.msra.mxu0 0.0
        %2609 = vmatprep.subr.mxu0 0.0
        %2610 = vmatpush2.msra.mxu0 0.0
        %2611 = vmatprep.mubr.f32.mxu0 0.0
        %2612 = vmatmul.mubr.f32.gmra.mxu0 %v1946
        %v2613 = vpop.f32.mrf.mxu0
        %v2614 = vadd.f32 %v2544, %v2613
        %v2615 = vpop.f32.mrf.mxu0
        %2616 = vdwg.mxu0
        %2617 = vmatprep.subr.mxu0 0.0
        %2618 = vmatpush1.msra.mxu0 0.0
        %2619 = vmatprep.subr.mxu0 0.0
        %2620 = vmatpush1.msra.mxu0 0.0
        %2621 = vmatprep.subr.mxu0 0.0
        %2622 = vmatpush1.msra.mxu0 0.0
        %2623 = vmatprep.subr.mxu0 0.0
        %2624 = vmatpush1.msra.mxu0 0.0
        %2625 = vmatprep.subr.mxu0 0.0
        %2626 = vmatpush1.msra.mxu0 0.0
        %2627 = vmatprep.subr.mxu0 0.0
        %2628 = vmatpush1.msra.mxu0 0.0
        %2629 = vmatprep.subr.mxu0 0.0
        %2630 = vmatpush1.msra.mxu0 0.0
        %2631 = vmatprep.subr.mxu0 0.0
        %2632 = vmatpush1.msra.mxu0 0.0
        %2633 = vmatprep.subr.mxu0 0.0
        %2634 = vmatpush1.msra.mxu0 0.0
        %2635 = vmatprep.subr.mxu0 0.0
        %2636 = vmatpush1.msra.mxu0 0.0
        %2637 = vmatprep.subr.mxu0 0.0
        %2638 = vmatpush1.msra.mxu0 0.0
        %2639 = vmatprep.subr.mxu0 0.0
        %2640 = vmatpush1.msra.mxu0 0.0
        %2641 = vmatprep.subr.mxu0 0.0
        %2642 = vmatpush1.msra.mxu0 0.0
        %2643 = vmatprep.subr.mxu0 0.0
        %2644 = vmatpush1.msra.mxu0 0.0
        %2645 = vmatprep.subr.mxu0 0.0
        %2646 = vmatpush1.msra.mxu0 0.0
        %2647 = vmatprep.subr.mxu0 0.0
        %2648 = vmatpush1.msra.mxu0 %v789
        %2649 = vmatprep.subr.mxu0 0.0
        %2650 = vmatpush2.msra.mxu0 0.0
        %2651 = vmatprep.subr.mxu0 0.0
        %2652 = vmatpush2.msra.mxu0 0.0
        %2653 = vmatprep.subr.mxu0 0.0
        %2654 = vmatpush2.msra.mxu0 0.0
        %2655 = vmatprep.subr.mxu0 0.0
        %2656 = vmatpush2.msra.mxu0 0.0
        %2657 = vmatprep.subr.mxu0 0.0
        %2658 = vmatpush2.msra.mxu0 0.0
        %2659 = vmatprep.subr.mxu0 0.0
        %2660 = vmatpush2.msra.mxu0 0.0
        %2661 = vmatprep.subr.mxu0 0.0
        %2662 = vmatpush2.msra.mxu0 0.0
        %2663 = vmatprep.subr.mxu0 0.0
        %2664 = vmatpush2.msra.mxu0 0.0
        %2665 = vmatprep.subr.mxu0 0.0
        %2666 = vmatpush2.msra.mxu0 0.0
        %2667 = vmatprep.subr.mxu0 0.0
        %2668 = vmatpush2.msra.mxu0 0.0
        %2669 = vmatprep.subr.mxu0 0.0
        %2670 = vmatpush2.msra.mxu0 0.0
        %2671 = vmatprep.subr.mxu0 0.0
        %2672 = vmatpush2.msra.mxu0 0.0
        %2673 = vmatprep.subr.mxu0 0.0
        %2674 = vmatpush2.msra.mxu0 0.0
        %2675 = vmatprep.subr.mxu0 0.0
        %2676 = vmatpush2.msra.mxu0 0.0
        %2677 = vmatprep.subr.mxu0 0.0
        %2678 = vmatpush2.msra.mxu0 0.0
        %2679 = vmatprep.subr.mxu0 0.0
        %2680 = vmatpush2.msra.mxu0 0.0
        %2681 = vmatprep.mubr.f32.mxu0 0.0
        %2682 = vmatmul.mubr.f32.gmra.mxu0 %v1946
        %v2683 = vpop.f32.mrf.mxu0
        %v2684 = vadd.f32 0.0, %v2683
        %v2685 = vpop.f32.mrf.mxu0
        %2686 = vdwg.mxu0
        %v2687 = vadd.f32 %v2614, %v2684
        %2688 = vmatprep.subr.mxu0 0.0
        %2689 = vmatpush1.msra.mxu0 0.0
        %2690 = vmatprep.subr.mxu0 0.0
        %2691 = vmatpush1.msra.mxu0 0.0
        %2692 = vmatprep.subr.mxu0 0.0
        %2693 = vmatpush1.msra.mxu0 0.0
        %2694 = vmatprep.subr.mxu0 0.0
        %2695 = vmatpush1.msra.mxu0 0.0
        %2696 = vmatprep.subr.mxu0 0.0
        %2697 = vmatpush1.msra.mxu0 0.0
        %2698 = vmatprep.subr.mxu0 0.0
        %2699 = vmatpush1.msra.mxu0 0.0
        %2700 = vmatprep.subr.mxu0 0.0
        %2701 = vmatpush1.msra.mxu0 0.0
        %2702 = vmatprep.subr.mxu0 0.0
        %2703 = vmatpush1.msra.mxu0 0.0
        %2704 = vmatprep.subr.mxu0 0.0
        %2705 = vmatpush1.msra.mxu0 0.0
        %2706 = vmatprep.subr.mxu0 0.0
        %2707 = vmatpush1.msra.mxu0 0.0
        %2708 = vmatprep.subr.mxu0 0.0
        %2709 = vmatpush1.msra.mxu0 0.0
        %2710 = vmatprep.subr.mxu0 0.0
        %2711 = vmatpush1.msra.mxu0 0.0
        %2712 = vmatprep.subr.mxu0 0.0
        %2713 = vmatpush1.msra.mxu0 0.0
        %2714 = vmatprep.subr.mxu0 0.0
        %2715 = vmatpush1.msra.mxu0 0.0
        %2716 = vmatprep.subr.mxu0 0.0
        %2717 = vmatpush1.msra.mxu0 0.0
        %2718 = vmatprep.subr.mxu0 0.0
        %2719 = vmatpush1.msra.mxu0 %v795
        %2720 = vmatprep.subr.mxu0 0.0
        %2721 = vmatpush2.msra.mxu0 0.0
        %2722 = vmatprep.subr.mxu0 0.0
        %2723 = vmatpush2.msra.mxu0 0.0
        %2724 = vmatprep.subr.mxu0 0.0
        %2725 = vmatpush2.msra.mxu0 0.0
        %2726 = vmatprep.subr.mxu0 0.0
        %2727 = vmatpush2.msra.mxu0 0.0
        %2728 = vmatprep.subr.mxu0 0.0
        %2729 = vmatpush2.msra.mxu0 0.0
        %2730 = vmatprep.subr.mxu0 0.0
        %2731 = vmatpush2.msra.mxu0 0.0
        %2732 = vmatprep.subr.mxu0 0.0
        %2733 = vmatpush2.msra.mxu0 0.0
        %2734 = vmatprep.subr.mxu0 0.0
        %2735 = vmatpush2.msra.mxu0 0.0
        %2736 = vmatprep.subr.mxu0 0.0
        %2737 = vmatpush2.msra.mxu0 0.0
        %2738 = vmatprep.subr.mxu0 0.0
        %2739 = vmatpush2.msra.mxu0 0.0
        %2740 = vmatprep.subr.mxu0 0.0
        %2741 = vmatpush2.msra.mxu0 0.0
        %2742 = vmatprep.subr.mxu0 0.0
        %2743 = vmatpush2.msra.mxu0 0.0
        %2744 = vmatprep.subr.mxu0 0.0
        %2745 = vmatpush2.msra.mxu0 0.0
        %2746 = vmatprep.subr.mxu0 0.0
        %2747 = vmatpush2.msra.mxu0 0.0
        %2748 = vmatprep.subr.mxu0 0.0
        %2749 = vmatpush2.msra.mxu0 0.0
        %2750 = vmatprep.subr.mxu0 0.0
        %2751 = vmatpush2.msra.mxu0 0.0
        %2752 = vmatprep.mubr.f32.mxu0 0.0
        %2753 = vmatmul.mubr.f32.gmra.mxu0 %v1874
        %v2754 = vpop.f32.mrf.mxu0
        %v2755 = vadd.f32 0.0, %v2754
        %v2756 = vpop.f32.mrf.mxu0
        %2757 = vdwg.mxu0
        %v2758 = vadd.f32 %v2687, %v2755
        %v2759 = vsub.f32 %v706, %v789
        %v2760 = vand.u32 2147483647, %v2759
        %2761 = vmatprep.subr.mxu0 0.0
        %2762 = vmatpush1.msra.mxu0 0.0
        %2763 = vmatprep.subr.mxu0 0.0
        %2764 = vmatpush1.msra.mxu0 0.0
        %2765 = vmatprep.subr.mxu0 0.0
        %2766 = vmatpush1.msra.mxu0 0.0
        %2767 = vmatprep.subr.mxu0 0.0
        %2768 = vmatpush1.msra.mxu0 0.0
        %2769 = vmatprep.subr.mxu0 0.0
        %2770 = vmatpush1.msra.mxu0 0.0
        %2771 = vmatprep.subr.mxu0 0.0
        %2772 = vmatpush1.msra.mxu0 0.0
        %2773 = vmatprep.subr.mxu0 0.0
        %2774 = vmatpush1.msra.mxu0 0.0
        %2775 = vmatprep.subr.mxu0 0.0
        %2776 = vmatpush1.msra.mxu0 0.0
        %2777 = vmatprep.subr.mxu0 0.0
        %2778 = vmatpush1.msra.mxu0 0.0
        %2779 = vmatprep.subr.mxu0 0.0
        %2780 = vmatpush1.msra.mxu0 0.0
        %2781 = vmatprep.subr.mxu0 0.0
        %2782 = vmatpush1.msra.mxu0 0.0
        %2783 = vmatprep.subr.mxu0 0.0
        %2784 = vmatpush1.msra.mxu0 0.0
        %2785 = vmatprep.subr.mxu0 0.0
        %2786 = vmatpush1.msra.mxu0 0.0
        %2787 = vmatprep.subr.mxu0 0.0
        %2788 = vmatpush1.msra.mxu0 0.0
        %2789 = vmatprep.subr.mxu0 0.0
        %2790 = vmatpush1.msra.mxu0 0.0
        %2791 = vmatprep.subr.mxu0 0.0
        %2792 = vmatpush1.msra.mxu0 %v2760
        %2793 = vmatprep.subr.mxu0 0.0
        %2794 = vmatpush2.msra.mxu0 0.0
        %2795 = vmatprep.subr.mxu0 0.0
        %2796 = vmatpush2.msra.mxu0 0.0
        %2797 = vmatprep.subr.mxu0 0.0
        %2798 = vmatpush2.msra.mxu0 0.0
        %2799 = vmatprep.subr.mxu0 0.0
        %2800 = vmatpush2.msra.mxu0 0.0
        %2801 = vmatprep.subr.mxu0 0.0
        %2802 = vmatpush2.msra.mxu0 0.0
        %2803 = vmatprep.subr.mxu0 0.0
        %2804 = vmatpush2.msra.mxu0 0.0
        %2805 = vmatprep.subr.mxu0 0.0
        %2806 = vmatpush2.msra.mxu0 0.0
        %2807 = vmatprep.subr.mxu0 0.0
        %2808 = vmatpush2.msra.mxu0 0.0
        %2809 = vmatprep.subr.mxu0 0.0
        %2810 = vmatpush2.msra.mxu0 0.0
        %2811 = vmatprep.subr.mxu0 0.0
        %2812 = vmatpush2.msra.mxu0 0.0
        %2813 = vmatprep.subr.mxu0 0.0
        %2814 = vmatpush2.msra.mxu0 0.0
        %2815 = vmatprep.subr.mxu0 0.0
        %2816 = vmatpush2.msra.mxu0 0.0
        %2817 = vmatprep.subr.mxu0 0.0
        %2818 = vmatpush2.msra.mxu0 0.0
        %2819 = vmatprep.subr.mxu0 0.0
        %2820 = vmatpush2.msra.mxu0 0.0
        %2821 = vmatprep.subr.mxu0 0.0
        %2822 = vmatpush2.msra.mxu0 0.0
        %2823 = vmatprep.subr.mxu0 0.0
        %2824 = vmatpush2.msra.mxu0 0.0
        %2825 = vmatprep.mubr.f32.mxu0 0.0
        %2826 = vmatmul.mubr.f32.gmra.mxu0 %v2163
        %v2827 = vpop.f32.mrf.mxu0
        %v2828 = vadd.f32 0.0, %v2827
        %v2829 = vpop.f32.mrf.mxu0
        %2830 = vdwg.mxu0
        %v2831 = vadd.f32 %v2758, %v2828
        %v2832 = vsub.f32 %v712, %v795
        %v2833 = vand.u32 2147483647, %v2832
        %2834 = vmatprep.subr.mxu0 0.0
        %2835 = vmatpush1.msra.mxu0 0.0
        %2836 = vmatprep.subr.mxu0 0.0
        %2837 = vmatpush1.msra.mxu0 0.0
        %2838 = vmatprep.subr.mxu0 0.0
        %2839 = vmatpush1.msra.mxu0 0.0
        %2840 = vmatprep.subr.mxu0 0.0
        %2841 = vmatpush1.msra.mxu0 0.0
        %2842 = vmatprep.subr.mxu0 0.0
        %2843 = vmatpush1.msra.mxu0 0.0
        %2844 = vmatprep.subr.mxu0 0.0
        %2845 = vmatpush1.msra.mxu0 0.0
        %2846 = vmatprep.subr.mxu0 0.0
        %2847 = vmatpush1.msra.mxu0 0.0
        %2848 = vmatprep.subr.mxu0 0.0
        %2849 = vmatpush1.msra.mxu0 0.0
        %2850 = vmatprep.subr.mxu0 0.0
        %2851 = vmatpush1.msra.mxu0 0.0
        %2852 = vmatprep.subr.mxu0 0.0
        %2853 = vmatpush1.msra.mxu0 0.0
        %2854 = vmatprep.subr.mxu0 0.0
        %2855 = vmatpush1.msra.mxu0 0.0
        %2856 = vmatprep.subr.mxu0 0.0
        %2857 = vmatpush1.msra.mxu0 0.0
        %2858 = vmatprep.subr.mxu0 0.0
        %2859 = vmatpush1.msra.mxu0 0.0
        %2860 = vmatprep.subr.mxu0 0.0
        %2861 = vmatpush1.msra.mxu0 0.0
        %2862 = vmatprep.subr.mxu0 0.0
        %2863 = vmatpush1.msra.mxu0 0.0
        %2864 = vmatprep.subr.mxu0 0.0
        %2865 = vmatpush1.msra.mxu0 %v2833
        %2866 = vmatprep.subr.mxu0 0.0
        %2867 = vmatpush2.msra.mxu0 0.0
        %2868 = vmatprep.subr.mxu0 0.0
        %2869 = vmatpush2.msra.mxu0 0.0
        %2870 = vmatprep.subr.mxu0 0.0
        %2871 = vmatpush2.msra.mxu0 0.0
        %2872 = vmatprep.subr.mxu0 0.0
        %2873 = vmatpush2.msra.mxu0 0.0
        %2874 = vmatprep.subr.mxu0 0.0
        %2875 = vmatpush2.msra.mxu0 0.0
        %2876 = vmatprep.subr.mxu0 0.0
        %2877 = vmatpush2.msra.mxu0 0.0
        %2878 = vmatprep.subr.mxu0 0.0
        %2879 = vmatpush2.msra.mxu0 0.0
        %2880 = vmatprep.subr.mxu0 0.0
        %2881 = vmatpush2.msra.mxu0 0.0
        %2882 = vmatprep.subr.mxu0 0.0
        %2883 = vmatpush2.msra.mxu0 0.0
        %2884 = vmatprep.subr.mxu0 0.0
        %2885 = vmatpush2.msra.mxu0 0.0
        %2886 = vmatprep.subr.mxu0 0.0
        %2887 = vmatpush2.msra.mxu0 0.0
        %2888 = vmatprep.subr.mxu0 0.0
        %2889 = vmatpush2.msra.mxu0 0.0
        %2890 = vmatprep.subr.mxu0 0.0
        %2891 = vmatpush2.msra.mxu0 0.0
        %2892 = vmatprep.subr.mxu0 0.0
        %2893 = vmatpush2.msra.mxu0 0.0
        %2894 = vmatprep.subr.mxu0 0.0
        %2895 = vmatpush2.msra.mxu0 0.0
        %2896 = vmatprep.subr.mxu0 0.0
        %2897 = vmatpush2.msra.mxu0 0.0
        %2898 = vmatprep.mubr.f32.mxu0 0.0
        %2899 = vmatmul.mubr.f32.gmra.mxu0 %v2240
        %v2900 = vpop.f32.mrf.mxu0
        %v2901 = vadd.f32 0.0, %v2900
        %v2902 = vpop.f32.mrf.mxu0
        %2903 = vdwg.mxu0
        %v2904 = vadd.f32 %v2831, %v2901
        %2905 = vmatprep.subr.mxu0 0.0
        %2906 = vmatpush1.msra.mxu0 0.0
        %2907 = vmatprep.subr.mxu0 0.0
        %2908 = vmatpush1.msra.mxu0 0.0
        %2909 = vmatprep.subr.mxu0 0.0
        %2910 = vmatpush1.msra.mxu0 0.0
        %2911 = vmatprep.subr.mxu0 0.0
        %2912 = vmatpush1.msra.mxu0 0.0
        %2913 = vmatprep.subr.mxu0 0.0
        %2914 = vmatpush1.msra.mxu0 0.0
        %2915 = vmatprep.subr.mxu0 0.0
        %2916 = vmatpush1.msra.mxu0 0.0
        %2917 = vmatprep.subr.mxu0 0.0
        %2918 = vmatpush1.msra.mxu0 0.0
        %2919 = vmatprep.subr.mxu0 0.0
        %2920 = vmatpush1.msra.mxu0 0.0
        %2921 = vmatprep.subr.mxu0 0.0
        %2922 = vmatpush1.msra.mxu0 0.0
        %2923 = vmatprep.subr.mxu0 0.0
        %2924 = vmatpush1.msra.mxu0 0.0
        %2925 = vmatprep.subr.mxu0 0.0
        %2926 = vmatpush1.msra.mxu0 0.0
        %2927 = vmatprep.subr.mxu0 0.0
        %2928 = vmatpush1.msra.mxu0 0.0
        %2929 = vmatprep.subr.mxu0 0.0
        %2930 = vmatpush1.msra.mxu0 0.0
        %2931 = vmatprep.subr.mxu0 0.0
        %2932 = vmatpush1.msra.mxu0 0.0
        %2933 = vmatprep.subr.mxu0 0.0
        %2934 = vmatpush1.msra.mxu0 0.0
        %2935 = vmatprep.subr.mxu0 0.0
        %2936 = vmatpush1.msra.mxu0 %v1563
        %2937 = vmatprep.subr.mxu0 0.0
        %2938 = vmatpush2.msra.mxu0 0.0
        %2939 = vmatprep.subr.mxu0 0.0
        %2940 = vmatpush2.msra.mxu0 0.0
        %2941 = vmatprep.subr.mxu0 0.0
        %2942 = vmatpush2.msra.mxu0 0.0
        %2943 = vmatprep.subr.mxu0 0.0
        %2944 = vmatpush2.msra.mxu0 0.0
        %2945 = vmatprep.subr.mxu0 0.0
        %2946 = vmatpush2.msra.mxu0 0.0
        %2947 = vmatprep.subr.mxu0 0.0
        %2948 = vmatpush2.msra.mxu0 0.0
        %2949 = vmatprep.subr.mxu0 0.0
        %2950 = vmatpush2.msra.mxu0 0.0
        %2951 = vmatprep.subr.mxu0 0.0
        %2952 = vmatpush2.msra.mxu0 0.0
        %2953 = vmatprep.subr.mxu0 0.0
        %2954 = vmatpush2.msra.mxu0 0.0
        %2955 = vmatprep.subr.mxu0 0.0
        %2956 = vmatpush2.msra.mxu0 0.0
        %2957 = vmatprep.subr.mxu0 0.0
        %2958 = vmatpush2.msra.mxu0 0.0
        %2959 = vmatprep.subr.mxu0 0.0
        %2960 = vmatpush2.msra.mxu0 0.0
        %2961 = vmatprep.subr.mxu0 0.0
        %2962 = vmatpush2.msra.mxu0 0.0
        %2963 = vmatprep.subr.mxu0 0.0
        %2964 = vmatpush2.msra.mxu0 0.0
        %2965 = vmatprep.subr.mxu0 0.0
        %2966 = vmatpush2.msra.mxu0 0.0
        %2967 = vmatprep.subr.mxu0 0.0
        %2968 = vmatpush2.msra.mxu0 0.0
        %2969 = vmatprep.mubr.f32.mxu0 0.0
        %2970 = vmatmul.mubr.f32.gmra.mxu0 %v2314
        %v2971 = vpop.f32.mrf.mxu0
        %v2972 = vadd.f32 0.0, %v2971
        %v2973 = vpop.f32.mrf.mxu0
        %2974 = vdwg.mxu0
        %v2975 = vadd.f32 %v2904, %v2972
        %2976 = vmatprep.subr.mxu0 0.0
        %2977 = vmatpush1.msra.mxu0 0.0
        %2978 = vmatprep.subr.mxu0 0.0
        %2979 = vmatpush1.msra.mxu0 0.0
        %2980 = vmatprep.subr.mxu0 0.0
        %2981 = vmatpush1.msra.mxu0 0.0
        %2982 = vmatprep.subr.mxu0 0.0
        %2983 = vmatpush1.msra.mxu0 0.0
        %2984 = vmatprep.subr.mxu0 0.0
        %2985 = vmatpush1.msra.mxu0 0.0
        %2986 = vmatprep.subr.mxu0 0.0
        %2987 = vmatpush1.msra.mxu0 0.0
        %2988 = vmatprep.subr.mxu0 0.0
        %2989 = vmatpush1.msra.mxu0 0.0
        %2990 = vmatprep.subr.mxu0 0.0
        %2991 = vmatpush1.msra.mxu0 0.0
        %2992 = vmatprep.subr.mxu0 0.0
        %2993 = vmatpush1.msra.mxu0 0.0
        %2994 = vmatprep.subr.mxu0 0.0
        %2995 = vmatpush1.msra.mxu0 0.0
        %2996 = vmatprep.subr.mxu0 0.0
        %2997 = vmatpush1.msra.mxu0 0.0
        %2998 = vmatprep.subr.mxu0 0.0
        %2999 = vmatpush1.msra.mxu0 0.0
        %3000 = vmatprep.subr.mxu0 0.0
        %3001 = vmatpush1.msra.mxu0 0.0
        %3002 = vmatprep.subr.mxu0 0.0
        %3003 = vmatpush1.msra.mxu0 0.0
        %3004 = vmatprep.subr.mxu0 0.0
        %3005 = vmatpush1.msra.mxu0 0.0
        %3006 = vmatprep.subr.mxu0 0.0
        %3007 = vmatpush1.msra.mxu0 %v1569
        %3008 = vmatprep.subr.mxu0 0.0
        %3009 = vmatpush2.msra.mxu0 0.0
        %3010 = vmatprep.subr.mxu0 0.0
        %3011 = vmatpush2.msra.mxu0 0.0
        %3012 = vmatprep.subr.mxu0 0.0
        %3013 = vmatpush2.msra.mxu0 0.0
        %3014 = vmatprep.subr.mxu0 0.0
        %3015 = vmatpush2.msra.mxu0 0.0
        %3016 = vmatprep.subr.mxu0 0.0
        %3017 = vmatpush2.msra.mxu0 0.0
        %3018 = vmatprep.subr.mxu0 0.0
        %3019 = vmatpush2.msra.mxu0 0.0
        %3020 = vmatprep.subr.mxu0 0.0
        %3021 = vmatpush2.msra.mxu0 0.0
        %3022 = vmatprep.subr.mxu0 0.0
        %3023 = vmatpush2.msra.mxu0 0.0
        %3024 = vmatprep.subr.mxu0 0.0
        %3025 = vmatpush2.msra.mxu0 0.0
        %3026 = vmatprep.subr.mxu0 0.0
        %3027 = vmatpush2.msra.mxu0 0.0
        %3028 = vmatprep.subr.mxu0 0.0
        %3029 = vmatpush2.msra.mxu0 0.0
        %3030 = vmatprep.subr.mxu0 0.0
        %3031 = vmatpush2.msra.mxu0 0.0
        %3032 = vmatprep.subr.mxu0 0.0
        %3033 = vmatpush2.msra.mxu0 0.0
        %3034 = vmatprep.subr.mxu0 0.0
        %3035 = vmatpush2.msra.mxu0 0.0
        %3036 = vmatprep.subr.mxu0 0.0
        %3037 = vmatpush2.msra.mxu0 0.0
        %3038 = vmatprep.subr.mxu0 0.0
        %3039 = vmatpush2.msra.mxu0 0.0
        %3040 = vmatprep.mubr.f32.mxu0 0.0
        %3041 = vmatmul.mubr.f32.gmra.mxu0 %v2389
        %v3042 = vpop.f32.mrf.mxu0
        %v3043 = vadd.f32 0.0, %v3042
        %v3044 = vpop.f32.mrf.mxu0
        %3045 = vdwg.mxu0
        %v3046 = vadd.f32 %v2975, %v3043
        %v3047 = vadd.f32 %v3046, %v434
        %v3048 = vld [vmem:[%s1557] sm:$0xff]
        %v3049 = vadd.f32 %v3047, %v3048
        %v3050 = vld [vmem:[%s1557 + $0x8] sm:$0xff]
        %v3051 = vsub.f32 %v3050, %v3047
        %s3052 = scalar_lea.vmem %s407, 16 [#allocation12]
        %3053 = vst [vmem:[%s3052] sm:$0xff] %v3049
        %3054 = vst [vmem:[%s3052 + $0x8] sm:$0xff] %v3051
        %v3055 = vmul.f32 %v3049, 0.5
        %v3056 = vtanh.pop %v3055
        %v3057 = vmul.f32 %v3055, %v3056
        %v3058 = vadd.f32 %v3055, %v3057
        %s3059 = scalar_lea.vmem %s400, 16 [#allocation11]
        %3060 = vst [vmem:[%s3059] sm:$0xff] %v3058
        %v3061 = vmul.f32 %v3051, 0.5
        %v3062 = vtanh.pop %v3061
        %v3063 = vmul.f32 %v3061, %v3062
        %v3064 = vadd.f32 %v3061, %v3063
        %3065 = vst [vmem:[%s3059 + $0x8] sm:$0xff] %v3064
        %3066 = vmatprep.subr.mxu0 0.0
        %3067 = vmatpush1.msra.mxu0 0.0
        %3068 = vmatprep.subr.mxu0 0.0
        %3069 = vmatpush1.msra.mxu0 0.0
        %3070 = vmatprep.subr.mxu0 0.0
        %3071 = vmatpush1.msra.mxu0 0.0
        %3072 = vmatprep.subr.mxu0 0.0
        %3073 = vmatpush1.msra.mxu0 0.0
        %3074 = vmatprep.subr.mxu0 0.0
        %3075 = vmatpush1.msra.mxu0 0.0
        %3076 = vmatprep.subr.mxu0 0.0
        %3077 = vmatpush1.msra.mxu0 0.0
        %3078 = vmatprep.subr.mxu0 0.0
        %3079 = vmatpush1.msra.mxu0 0.0
        %3080 = vmatprep.subr.mxu0 0.0
        %3081 = vmatpush1.msra.mxu0 0.0
        %3082 = vmatprep.subr.mxu0 0.0
        %3083 = vmatpush1.msra.mxu0 0.0
        %3084 = vmatprep.subr.mxu0 0.0
        %3085 = vmatpush1.msra.mxu0 0.0
        %3086 = vmatprep.subr.mxu0 0.0
        %3087 = vmatpush1.msra.mxu0 0.0
        %3088 = vmatprep.subr.mxu0 0.0
        %3089 = vmatpush1.msra.mxu0 0.0
        %3090 = vmatprep.subr.mxu0 0.0
        %3091 = vmatpush1.msra.mxu0 0.0
        %3092 = vmatprep.subr.mxu0 0.0
        %3093 = vmatpush1.msra.mxu0 0.0
        %3094 = vmatprep.subr.mxu0 0.0
        %3095 = vmatpush1.msra.mxu0 0.0
        %3096 = vmatprep.subr.mxu0 0.0
        %3097 = vmatpush1.msra.mxu0 %v878
        %3098 = vmatprep.subr.mxu0 0.0
        %3099 = vmatpush2.msra.mxu0 0.0
        %3100 = vmatprep.subr.mxu0 0.0
        %3101 = vmatpush2.msra.mxu0 0.0
        %3102 = vmatprep.subr.mxu0 0.0
        %3103 = vmatpush2.msra.mxu0 0.0
        %3104 = vmatprep.subr.mxu0 0.0
        %3105 = vmatpush2.msra.mxu0 0.0
        %3106 = vmatprep.subr.mxu0 0.0
        %3107 = vmatpush2.msra.mxu0 0.0
        %3108 = vmatprep.subr.mxu0 0.0
        %3109 = vmatpush2.msra.mxu0 0.0
        %3110 = vmatprep.subr.mxu0 0.0
        %3111 = vmatpush2.msra.mxu0 0.0
        %3112 = vmatprep.subr.mxu0 0.0
        %3113 = vmatpush2.msra.mxu0 0.0
        %3114 = vmatprep.subr.mxu0 0.0
        %3115 = vmatpush2.msra.mxu0 0.0
        %3116 = vmatprep.subr.mxu0 0.0
        %3117 = vmatpush2.msra.mxu0 0.0
        %3118 = vmatprep.subr.mxu0 0.0
        %3119 = vmatpush2.msra.mxu0 0.0
        %3120 = vmatprep.subr.mxu0 0.0
        %3121 = vmatpush2.msra.mxu0 0.0
        %3122 = vmatprep.subr.mxu0 0.0
        %3123 = vmatpush2.msra.mxu0 0.0
        %3124 = vmatprep.subr.mxu0 0.0
        %3125 = vmatpush2.msra.mxu0 0.0
        %3126 = vmatprep.subr.mxu0 0.0
        %3127 = vmatpush2.msra.mxu0 0.0
        %3128 = vmatprep.subr.mxu0 0.0
        %3129 = vmatpush2.msra.mxu0 0.0
        %3130 = vmatprep.mubr.f32.mxu0 0.0
        %3131 = vmatmul.mubr.f32.gmra.mxu0 %v1874
        %v3132 = vpop.f32.mrf.mxu0
        %v3133 = vadd.f32 0.0, %v3132
        %v3134 = vpop.f32.mrf.mxu0
        %3135 = vdwg.mxu0
        %3136 = vmatprep.subr.mxu0 0.0
        %3137 = vmatpush1.msra.mxu0 0.0
        %3138 = vmatprep.subr.mxu0 0.0
        %3139 = vmatpush1.msra.mxu0 0.0
        %3140 = vmatprep.subr.mxu0 0.0
        %3141 = vmatpush1.msra.mxu0 0.0
        %3142 = vmatprep.subr.mxu0 0.0
        %3143 = vmatpush1.msra.mxu0 0.0
        %3144 = vmatprep.subr.mxu0 0.0
        %3145 = vmatpush1.msra.mxu0 0.0
        %3146 = vmatprep.subr.mxu0 0.0
        %3147 = vmatpush1.msra.mxu0 0.0
        %3148 = vmatprep.subr.mxu0 0.0
        %3149 = vmatpush1.msra.mxu0 0.0
        %3150 = vmatprep.subr.mxu0 0.0
        %3151 = vmatpush1.msra.mxu0 0.0
        %3152 = vmatprep.subr.mxu0 0.0
        %3153 = vmatpush1.msra.mxu0 0.0
        %3154 = vmatprep.subr.mxu0 0.0
        %3155 = vmatpush1.msra.mxu0 0.0
        %3156 = vmatprep.subr.mxu0 0.0
        %3157 = vmatpush1.msra.mxu0 0.0
        %3158 = vmatprep.subr.mxu0 0.0
        %3159 = vmatpush1.msra.mxu0 0.0
        %3160 = vmatprep.subr.mxu0 0.0
        %3161 = vmatpush1.msra.mxu0 0.0
        %3162 = vmatprep.subr.mxu0 0.0
        %3163 = vmatpush1.msra.mxu0 0.0
        %3164 = vmatprep.subr.mxu0 0.0
        %3165 = vmatpush1.msra.mxu0 0.0
        %3166 = vmatprep.subr.mxu0 0.0
        %3167 = vmatpush1.msra.mxu0 %v872
        %3168 = vmatprep.subr.mxu0 0.0
        %3169 = vmatpush2.msra.mxu0 0.0
        %3170 = vmatprep.subr.mxu0 0.0
        %3171 = vmatpush2.msra.mxu0 0.0
        %3172 = vmatprep.subr.mxu0 0.0
        %3173 = vmatpush2.msra.mxu0 0.0
        %3174 = vmatprep.subr.mxu0 0.0
        %3175 = vmatpush2.msra.mxu0 0.0
        %3176 = vmatprep.subr.mxu0 0.0
        %3177 = vmatpush2.msra.mxu0 0.0
        %3178 = vmatprep.subr.mxu0 0.0
        %3179 = vmatpush2.msra.mxu0 0.0
        %3180 = vmatprep.subr.mxu0 0.0
        %3181 = vmatpush2.msra.mxu0 0.0
        %3182 = vmatprep.subr.mxu0 0.0
        %3183 = vmatpush2.msra.mxu0 0.0
        %3184 = vmatprep.subr.mxu0 0.0
        %3185 = vmatpush2.msra.mxu0 0.0
        %3186 = vmatprep.subr.mxu0 0.0
        %3187 = vmatpush2.msra.mxu0 0.0
        %3188 = vmatprep.subr.mxu0 0.0
        %3189 = vmatpush2.msra.mxu0 0.0
        %3190 = vmatprep.subr.mxu0 0.0
        %3191 = vmatpush2.msra.mxu0 0.0
        %3192 = vmatprep.subr.mxu0 0.0
        %3193 = vmatpush2.msra.mxu0 0.0
        %3194 = vmatprep.subr.mxu0 0.0
        %3195 = vmatpush2.msra.mxu0 0.0
        %3196 = vmatprep.subr.mxu0 0.0
        %3197 = vmatpush2.msra.mxu0 0.0
        %3198 = vmatprep.subr.mxu0 0.0
        %3199 = vmatpush2.msra.mxu0 0.0
        %3200 = vmatprep.mubr.f32.mxu0 0.0
        %3201 = vmatmul.mubr.f32.gmra.mxu0 %v1946
        %v3202 = vpop.f32.mrf.mxu0
        %v3203 = vadd.f32 %v3133, %v3202
        %v3204 = vpop.f32.mrf.mxu0
        %3205 = vdwg.mxu0
        %3206 = vmatprep.subr.mxu0 0.0
        %3207 = vmatpush1.msra.mxu0 0.0
        %3208 = vmatprep.subr.mxu0 0.0
        %3209 = vmatpush1.msra.mxu0 0.0
        %3210 = vmatprep.subr.mxu0 0.0
        %3211 = vmatpush1.msra.mxu0 0.0
        %3212 = vmatprep.subr.mxu0 0.0
        %3213 = vmatpush1.msra.mxu0 0.0
        %3214 = vmatprep.subr.mxu0 0.0
        %3215 = vmatpush1.msra.mxu0 0.0
        %3216 = vmatprep.subr.mxu0 0.0
        %3217 = vmatpush1.msra.mxu0 0.0
        %3218 = vmatprep.subr.mxu0 0.0
        %3219 = vmatpush1.msra.mxu0 0.0
        %3220 = vmatprep.subr.mxu0 0.0
        %3221 = vmatpush1.msra.mxu0 0.0
        %3222 = vmatprep.subr.mxu0 0.0
        %3223 = vmatpush1.msra.mxu0 0.0
        %3224 = vmatprep.subr.mxu0 0.0
        %3225 = vmatpush1.msra.mxu0 0.0
        %3226 = vmatprep.subr.mxu0 0.0
        %3227 = vmatpush1.msra.mxu0 0.0
        %3228 = vmatprep.subr.mxu0 0.0
        %3229 = vmatpush1.msra.mxu0 0.0
        %3230 = vmatprep.subr.mxu0 0.0
        %3231 = vmatpush1.msra.mxu0 0.0
        %3232 = vmatprep.subr.mxu0 0.0
        %3233 = vmatpush1.msra.mxu0 0.0
        %3234 = vmatprep.subr.mxu0 0.0
        %3235 = vmatpush1.msra.mxu0 0.0
        %3236 = vmatprep.subr.mxu0 0.0
        %3237 = vmatpush1.msra.mxu0 %v955
        %3238 = vmatprep.subr.mxu0 0.0
        %3239 = vmatpush2.msra.mxu0 0.0
        %3240 = vmatprep.subr.mxu0 0.0
        %3241 = vmatpush2.msra.mxu0 0.0
        %3242 = vmatprep.subr.mxu0 0.0
        %3243 = vmatpush2.msra.mxu0 0.0
        %3244 = vmatprep.subr.mxu0 0.0
        %3245 = vmatpush2.msra.mxu0 0.0
        %3246 = vmatprep.subr.mxu0 0.0
        %3247 = vmatpush2.msra.mxu0 0.0
        %3248 = vmatprep.subr.mxu0 0.0
        %3249 = vmatpush2.msra.mxu0 0.0
        %3250 = vmatprep.subr.mxu0 0.0
        %3251 = vmatpush2.msra.mxu0 0.0
        %3252 = vmatprep.subr.mxu0 0.0
        %3253 = vmatpush2.msra.mxu0 0.0
        %3254 = vmatprep.subr.mxu0 0.0
        %3255 = vmatpush2.msra.mxu0 0.0
        %3256 = vmatprep.subr.mxu0 0.0
        %3257 = vmatpush2.msra.mxu0 0.0
        %3258 = vmatprep.subr.mxu0 0.0
        %3259 = vmatpush2.msra.mxu0 0.0
        %3260 = vmatprep.subr.mxu0 0.0
        %3261 = vmatpush2.msra.mxu0 0.0
        %3262 = vmatprep.subr.mxu0 0.0
        %3263 = vmatpush2.msra.mxu0 0.0
        %3264 = vmatprep.subr.mxu0 0.0
        %3265 = vmatpush2.msra.mxu0 0.0
        %3266 = vmatprep.subr.mxu0 0.0
        %3267 = vmatpush2.msra.mxu0 0.0
        %3268 = vmatprep.subr.mxu0 0.0
        %3269 = vmatpush2.msra.mxu0 0.0
        %3270 = vmatprep.mubr.f32.mxu0 0.0
        %3271 = vmatmul.mubr.f32.gmra.mxu0 %v1946
        %v3272 = vpop.f32.mrf.mxu0
        %v3273 = vadd.f32 0.0, %v3272
        %v3274 = vpop.f32.mrf.mxu0
        %3275 = vdwg.mxu0
        %v3276 = vadd.f32 %v3203, %v3273
        %3277 = vmatprep.subr.mxu0 0.0
        %3278 = vmatpush1.msra.mxu0 0.0
        %3279 = vmatprep.subr.mxu0 0.0
        %3280 = vmatpush1.msra.mxu0 0.0
        %3281 = vmatprep.subr.mxu0 0.0
        %3282 = vmatpush1.msra.mxu0 0.0
        %3283 = vmatprep.subr.mxu0 0.0
        %3284 = vmatpush1.msra.mxu0 0.0
        %3285 = vmatprep.subr.mxu0 0.0
        %3286 = vmatpush1.msra.mxu0 0.0
        %3287 = vmatprep.subr.mxu0 0.0
        %3288 = vmatpush1.msra.mxu0 0.0
        %3289 = vmatprep.subr.mxu0 0.0
        %3290 = vmatpush1.msra.mxu0 0.0
        %3291 = vmatprep.subr.mxu0 0.0
        %3292 = vmatpush1.msra.mxu0 0.0
        %3293 = vmatprep.subr.mxu0 0.0
        %3294 = vmatpush1.msra.mxu0 0.0
        %3295 = vmatprep.subr.mxu0 0.0
        %3296 = vmatpush1.msra.mxu0 0.0
        %3297 = vmatprep.subr.mxu0 0.0
        %3298 = vmatpush1.msra.mxu0 0.0
        %3299 = vmatprep.subr.mxu0 0.0
        %3300 = vmatpush1.msra.mxu0 0.0
        %3301 = vmatprep.subr.mxu0 0.0
        %3302 = vmatpush1.msra.mxu0 0.0
        %3303 = vmatprep.subr.mxu0 0.0
        %3304 = vmatpush1.msra.mxu0 0.0
        %3305 = vmatprep.subr.mxu0 0.0
        %3306 = vmatpush1.msra.mxu0 0.0
        %3307 = vmatprep.subr.mxu0 0.0
        %3308 = vmatpush1.msra.mxu0 %v961
        %3309 = vmatprep.subr.mxu0 0.0
        %3310 = vmatpush2.msra.mxu0 0.0
        %3311 = vmatprep.subr.mxu0 0.0
        %3312 = vmatpush2.msra.mxu0 0.0
        %3313 = vmatprep.subr.mxu0 0.0
        %3314 = vmatpush2.msra.mxu0 0.0
        %3315 = vmatprep.subr.mxu0 0.0
        %3316 = vmatpush2.msra.mxu0 0.0
        %3317 = vmatprep.subr.mxu0 0.0
        %3318 = vmatpush2.msra.mxu0 0.0
        %3319 = vmatprep.subr.mxu0 0.0
        %3320 = vmatpush2.msra.mxu0 0.0
        %3321 = vmatprep.subr.mxu0 0.0
        %3322 = vmatpush2.msra.mxu0 0.0
        %3323 = vmatprep.subr.mxu0 0.0
        %3324 = vmatpush2.msra.mxu0 0.0
        %3325 = vmatprep.subr.mxu0 0.0
        %3326 = vmatpush2.msra.mxu0 0.0
        %3327 = vmatprep.subr.mxu0 0.0
        %3328 = vmatpush2.msra.mxu0 0.0
        %3329 = vmatprep.subr.mxu0 0.0
        %3330 = vmatpush2.msra.mxu0 0.0
        %3331 = vmatprep.subr.mxu0 0.0
        %3332 = vmatpush2.msra.mxu0 0.0
        %3333 = vmatprep.subr.mxu0 0.0
        %3334 = vmatpush2.msra.mxu0 0.0
        %3335 = vmatprep.subr.mxu0 0.0
        %3336 = vmatpush2.msra.mxu0 0.0
        %3337 = vmatprep.subr.mxu0 0.0
        %3338 = vmatpush2.msra.mxu0 0.0
        %3339 = vmatprep.subr.mxu0 0.0
        %3340 = vmatpush2.msra.mxu0 0.0
        %3341 = vmatprep.mubr.f32.mxu0 0.0
        %3342 = vmatmul.mubr.f32.gmra.mxu0 %v1874
        %v3343 = vpop.f32.mrf.mxu0
        %v3344 = vadd.f32 0.0, %v3343
        %v3345 = vpop.f32.mrf.mxu0
        %3346 = vdwg.mxu0
        %v3347 = vadd.f32 %v3276, %v3344
        %v3348 = vsub.f32 %v872, %v955
        %v3349 = vand.u32 2147483647, %v3348
        %3350 = vmatprep.subr.mxu0 0.0
        %3351 = vmatpush1.msra.mxu0 0.0
        %3352 = vmatprep.subr.mxu0 0.0
        %3353 = vmatpush1.msra.mxu0 0.0
        %3354 = vmatprep.subr.mxu0 0.0
        %3355 = vmatpush1.msra.mxu0 0.0
        %3356 = vmatprep.subr.mxu0 0.0
        %3357 = vmatpush1.msra.mxu0 0.0
        %3358 = vmatprep.subr.mxu0 0.0
        %3359 = vmatpush1.msra.mxu0 0.0
        %3360 = vmatprep.subr.mxu0 0.0
        %3361 = vmatpush1.msra.mxu0 0.0
        %3362 = vmatprep.subr.mxu0 0.0
        %3363 = vmatpush1.msra.mxu0 0.0
        %3364 = vmatprep.subr.mxu0 0.0
        %3365 = vmatpush1.msra.mxu0 0.0
        %3366 = vmatprep.subr.mxu0 0.0
        %3367 = vmatpush1.msra.mxu0 0.0
        %3368 = vmatprep.subr.mxu0 0.0
        %3369 = vmatpush1.msra.mxu0 0.0
        %3370 = vmatprep.subr.mxu0 0.0
        %3371 = vmatpush1.msra.mxu0 0.0
        %3372 = vmatprep.subr.mxu0 0.0
        %3373 = vmatpush1.msra.mxu0 0.0
        %3374 = vmatprep.subr.mxu0 0.0
        %3375 = vmatpush1.msra.mxu0 0.0
        %3376 = vmatprep.subr.mxu0 0.0
        %3377 = vmatpush1.msra.mxu0 0.0
        %3378 = vmatprep.subr.mxu0 0.0
        %3379 = vmatpush1.msra.mxu0 0.0
        %3380 = vmatprep.subr.mxu0 0.0
        %3381 = vmatpush1.msra.mxu0 %v3349
        %3382 = vmatprep.subr.mxu0 0.0
        %3383 = vmatpush2.msra.mxu0 0.0
        %3384 = vmatprep.subr.mxu0 0.0
        %3385 = vmatpush2.msra.mxu0 0.0
        %3386 = vmatprep.subr.mxu0 0.0
        %3387 = vmatpush2.msra.mxu0 0.0
        %3388 = vmatprep.subr.mxu0 0.0
        %3389 = vmatpush2.msra.mxu0 0.0
        %3390 = vmatprep.subr.mxu0 0.0
        %3391 = vmatpush2.msra.mxu0 0.0
        %3392 = vmatprep.subr.mxu0 0.0
        %3393 = vmatpush2.msra.mxu0 0.0
        %3394 = vmatprep.subr.mxu0 0.0
        %3395 = vmatpush2.msra.mxu0 0.0
        %3396 = vmatprep.subr.mxu0 0.0
        %3397 = vmatpush2.msra.mxu0 0.0
        %3398 = vmatprep.subr.mxu0 0.0
        %3399 = vmatpush2.msra.mxu0 0.0
        %3400 = vmatprep.subr.mxu0 0.0
        %3401 = vmatpush2.msra.mxu0 0.0
        %3402 = vmatprep.subr.mxu0 0.0
        %3403 = vmatpush2.msra.mxu0 0.0
        %3404 = vmatprep.subr.mxu0 0.0
        %3405 = vmatpush2.msra.mxu0 0.0
        %3406 = vmatprep.subr.mxu0 0.0
        %3407 = vmatpush2.msra.mxu0 0.0
        %3408 = vmatprep.subr.mxu0 0.0
        %3409 = vmatpush2.msra.mxu0 0.0
        %3410 = vmatprep.subr.mxu0 0.0
        %3411 = vmatpush2.msra.mxu0 0.0
        %3412 = vmatprep.subr.mxu0 0.0
        %3413 = vmatpush2.msra.mxu0 0.0
        %3414 = vmatprep.mubr.f32.mxu0 0.0
        %3415 = vmatmul.mubr.f32.gmra.mxu0 %v2163
        %v3416 = vpop.f32.mrf.mxu0
        %v3417 = vadd.f32 0.0, %v3416
        %v3418 = vpop.f32.mrf.mxu0
        %3419 = vdwg.mxu0
        %v3420 = vadd.f32 %v3347, %v3417
        %v3421 = vsub.f32 %v878, %v961
        %v3422 = vand.u32 2147483647, %v3421
        %3423 = vmatprep.subr.mxu0 0.0
        %3424 = vmatpush1.msra.mxu0 0.0
        %3425 = vmatprep.subr.mxu0 0.0
        %3426 = vmatpush1.msra.mxu0 0.0
        %3427 = vmatprep.subr.mxu0 0.0
        %3428 = vmatpush1.msra.mxu0 0.0
        %3429 = vmatprep.subr.mxu0 0.0
        %3430 = vmatpush1.msra.mxu0 0.0
        %3431 = vmatprep.subr.mxu0 0.0
        %3432 = vmatpush1.msra.mxu0 0.0
        %3433 = vmatprep.subr.mxu0 0.0
        %3434 = vmatpush1.msra.mxu0 0.0
        %3435 = vmatprep.subr.mxu0 0.0
        %3436 = vmatpush1.msra.mxu0 0.0
        %3437 = vmatprep.subr.mxu0 0.0
        %3438 = vmatpush1.msra.mxu0 0.0
        %3439 = vmatprep.subr.mxu0 0.0
        %3440 = vmatpush1.msra.mxu0 0.0
        %3441 = vmatprep.subr.mxu0 0.0
        %3442 = vmatpush1.msra.mxu0 0.0
        %3443 = vmatprep.subr.mxu0 0.0
        %3444 = vmatpush1.msra.mxu0 0.0
        %3445 = vmatprep.subr.mxu0 0.0
        %3446 = vmatpush1.msra.mxu0 0.0
        %3447 = vmatprep.subr.mxu0 0.0
        %3448 = vmatpush1.msra.mxu0 0.0
        %3449 = vmatprep.subr.mxu0 0.0
        %3450 = vmatpush1.msra.mxu0 0.0
        %3451 = vmatprep.subr.mxu0 0.0
        %3452 = vmatpush1.msra.mxu0 0.0
        %3453 = vmatprep.subr.mxu0 0.0
        %3454 = vmatpush1.msra.mxu0 %v3422
        %3455 = vmatprep.subr.mxu0 0.0
        %3456 = vmatpush2.msra.mxu0 0.0
        %3457 = vmatprep.subr.mxu0 0.0
        %3458 = vmatpush2.msra.mxu0 0.0
        %3459 = vmatprep.subr.mxu0 0.0
        %3460 = vmatpush2.msra.mxu0 0.0
        %3461 = vmatprep.subr.mxu0 0.0
        %3462 = vmatpush2.msra.mxu0 0.0
        %3463 = vmatprep.subr.mxu0 0.0
        %3464 = vmatpush2.msra.mxu0 0.0
        %3465 = vmatprep.subr.mxu0 0.0
        %3466 = vmatpush2.msra.mxu0 0.0
        %3467 = vmatprep.subr.mxu0 0.0
        %3468 = vmatpush2.msra.mxu0 0.0
        %3469 = vmatprep.subr.mxu0 0.0
        %3470 = vmatpush2.msra.mxu0 0.0
        %3471 = vmatprep.subr.mxu0 0.0
        %3472 = vmatpush2.msra.mxu0 0.0
        %3473 = vmatprep.subr.mxu0 0.0
        %3474 = vmatpush2.msra.mxu0 0.0
        %3475 = vmatprep.subr.mxu0 0.0
        %3476 = vmatpush2.msra.mxu0 0.0
        %3477 = vmatprep.subr.mxu0 0.0
        %3478 = vmatpush2.msra.mxu0 0.0
        %3479 = vmatprep.subr.mxu0 0.0
        %3480 = vmatpush2.msra.mxu0 0.0
        %3481 = vmatprep.subr.mxu0 0.0
        %3482 = vmatpush2.msra.mxu0 0.0
        %3483 = vmatprep.subr.mxu0 0.0
        %3484 = vmatpush2.msra.mxu0 0.0
        %3485 = vmatprep.subr.mxu0 0.0
        %3486 = vmatpush2.msra.mxu0 0.0
        %3487 = vmatprep.mubr.f32.mxu0 0.0
        %3488 = vmatmul.mubr.f32.gmra.mxu0 %v2240
        %v3489 = vpop.f32.mrf.mxu0
        %v3490 = vadd.f32 0.0, %v3489
        %v3491 = vpop.f32.mrf.mxu0
        %3492 = vdwg.mxu0
        %v3493 = vadd.f32 %v3420, %v3490
        %3494 = vmatprep.subr.mxu0 0.0
        %3495 = vmatpush1.msra.mxu0 0.0
        %3496 = vmatprep.subr.mxu0 0.0
        %3497 = vmatpush1.msra.mxu0 0.0
        %3498 = vmatprep.subr.mxu0 0.0
        %3499 = vmatpush1.msra.mxu0 0.0
        %3500 = vmatprep.subr.mxu0 0.0
        %3501 = vmatpush1.msra.mxu0 0.0
        %3502 = vmatprep.subr.mxu0 0.0
        %3503 = vmatpush1.msra.mxu0 0.0
        %3504 = vmatprep.subr.mxu0 0.0
        %3505 = vmatpush1.msra.mxu0 0.0
        %3506 = vmatprep.subr.mxu0 0.0
        %3507 = vmatpush1.msra.mxu0 0.0
        %3508 = vmatprep.subr.mxu0 0.0
        %3509 = vmatpush1.msra.mxu0 0.0
        %3510 = vmatprep.subr.mxu0 0.0
        %3511 = vmatpush1.msra.mxu0 0.0
        %3512 = vmatprep.subr.mxu0 0.0
        %3513 = vmatpush1.msra.mxu0 0.0
        %3514 = vmatprep.subr.mxu0 0.0
        %3515 = vmatpush1.msra.mxu0 0.0
        %3516 = vmatprep.subr.mxu0 0.0
        %3517 = vmatpush1.msra.mxu0 0.0
        %3518 = vmatprep.subr.mxu0 0.0
        %3519 = vmatpush1.msra.mxu0 0.0
        %3520 = vmatprep.subr.mxu0 0.0
        %3521 = vmatpush1.msra.mxu0 0.0
        %3522 = vmatprep.subr.mxu0 0.0
        %3523 = vmatpush1.msra.mxu0 0.0
        %3524 = vmatprep.subr.mxu0 0.0
        %3525 = vmatpush1.msra.mxu0 %v1863
        %3526 = vmatprep.subr.mxu0 0.0
        %3527 = vmatpush2.msra.mxu0 0.0
        %3528 = vmatprep.subr.mxu0 0.0
        %3529 = vmatpush2.msra.mxu0 0.0
        %3530 = vmatprep.subr.mxu0 0.0
        %3531 = vmatpush2.msra.mxu0 0.0
        %3532 = vmatprep.subr.mxu0 0.0
        %3533 = vmatpush2.msra.mxu0 0.0
        %3534 = vmatprep.subr.mxu0 0.0
        %3535 = vmatpush2.msra.mxu0 0.0
        %3536 = vmatprep.subr.mxu0 0.0
        %3537 = vmatpush2.msra.mxu0 0.0
        %3538 = vmatprep.subr.mxu0 0.0
        %3539 = vmatpush2.msra.mxu0 0.0
        %3540 = vmatprep.subr.mxu0 0.0
        %3541 = vmatpush2.msra.mxu0 0.0
        %3542 = vmatprep.subr.mxu0 0.0
        %3543 = vmatpush2.msra.mxu0 0.0
        %3544 = vmatprep.subr.mxu0 0.0
        %3545 = vmatpush2.msra.mxu0 0.0
        %3546 = vmatprep.subr.mxu0 0.0
        %3547 = vmatpush2.msra.mxu0 0.0
        %3548 = vmatprep.subr.mxu0 0.0
        %3549 = vmatpush2.msra.mxu0 0.0
        %3550 = vmatprep.subr.mxu0 0.0
        %3551 = vmatpush2.msra.mxu0 0.0
        %3552 = vmatprep.subr.mxu0 0.0
        %3553 = vmatpush2.msra.mxu0 0.0
        %3554 = vmatprep.subr.mxu0 0.0
        %3555 = vmatpush2.msra.mxu0 0.0
        %3556 = vmatprep.subr.mxu0 0.0
        %3557 = vmatpush2.msra.mxu0 0.0
        %3558 = vmatprep.mubr.f32.mxu0 0.0
        %3559 = vmatmul.mubr.f32.gmra.mxu0 %v2314
        %v3560 = vpop.f32.mrf.mxu0
        %v3561 = vadd.f32 0.0, %v3560
        %v3562 = vpop.f32.mrf.mxu0
        %3563 = vdwg.mxu0
        %v3564 = vadd.f32 %v3493, %v3561
        %3565 = vmatprep.subr.mxu0 0.0
        %3566 = vmatpush1.msra.mxu0 0.0
        %3567 = vmatprep.subr.mxu0 0.0
        %3568 = vmatpush1.msra.mxu0 0.0
        %3569 = vmatprep.subr.mxu0 0.0
        %3570 = vmatpush1.msra.mxu0 0.0
        %3571 = vmatprep.subr.mxu0 0.0
        %3572 = vmatpush1.msra.mxu0 0.0
        %3573 = vmatprep.subr.mxu0 0.0
        %3574 = vmatpush1.msra.mxu0 0.0
        %3575 = vmatprep.subr.mxu0 0.0
        %3576 = vmatpush1.msra.mxu0 0.0
        %3577 = vmatprep.subr.mxu0 0.0
        %3578 = vmatpush1.msra.mxu0 0.0
        %3579 = vmatprep.subr.mxu0 0.0
        %3580 = vmatpush1.msra.mxu0 0.0
        %3581 = vmatprep.subr.mxu0 0.0
        %3582 = vmatpush1.msra.mxu0 0.0
        %3583 = vmatprep.subr.mxu0 0.0
        %3584 = vmatpush1.msra.mxu0 0.0
        %3585 = vmatprep.subr.mxu0 0.0
        %3586 = vmatpush1.msra.mxu0 0.0
        %3587 = vmatprep.subr.mxu0 0.0
        %3588 = vmatpush1.msra.mxu0 0.0
        %3589 = vmatprep.subr.mxu0 0.0
        %3590 = vmatpush1.msra.mxu0 0.0
        %3591 = vmatprep.subr.mxu0 0.0
        %3592 = vmatpush1.msra.mxu0 0.0
        %3593 = vmatprep.subr.mxu0 0.0
        %3594 = vmatpush1.msra.mxu0 0.0
        %3595 = vmatprep.subr.mxu0 0.0
        %3596 = vmatpush1.msra.mxu0 %v1869
        %3597 = vmatprep.subr.mxu0 0.0
        %3598 = vmatpush2.msra.mxu0 0.0
        %3599 = vmatprep.subr.mxu0 0.0
        %3600 = vmatpush2.msra.mxu0 0.0
        %3601 = vmatprep.subr.mxu0 0.0
        %3602 = vmatpush2.msra.mxu0 0.0
        %3603 = vmatprep.subr.mxu0 0.0
        %3604 = vmatpush2.msra.mxu0 0.0
        %3605 = vmatprep.subr.mxu0 0.0
        %3606 = vmatpush2.msra.mxu0 0.0
        %3607 = vmatprep.subr.mxu0 0.0
        %3608 = vmatpush2.msra.mxu0 0.0
        %3609 = vmatprep.subr.mxu0 0.0
        %3610 = vmatpush2.msra.mxu0 0.0
        %3611 = vmatprep.subr.mxu0 0.0
        %3612 = vmatpush2.msra.mxu0 0.0
        %3613 = vmatprep.subr.mxu0 0.0
        %3614 = vmatpush2.msra.mxu0 0.0
        %3615 = vmatprep.subr.mxu0 0.0
        %3616 = vmatpush2.msra.mxu0 0.0
        %3617 = vmatprep.subr.mxu0 0.0
        %3618 = vmatpush2.msra.mxu0 0.0
        %3619 = vmatprep.subr.mxu0 0.0
        %3620 = vmatpush2.msra.mxu0 0.0
        %3621 = vmatprep.subr.mxu0 0.0
        %3622 = vmatpush2.msra.mxu0 0.0
        %3623 = vmatprep.subr.mxu0 0.0
        %3624 = vmatpush2.msra.mxu0 0.0
        %3625 = vmatprep.subr.mxu0 0.0
        %3626 = vmatpush2.msra.mxu0 0.0
        %3627 = vmatprep.subr.mxu0 0.0
        %3628 = vmatpush2.msra.mxu0 0.0
        %3629 = vmatprep.mubr.f32.mxu0 0.0
        %3630 = vmatmul.mubr.f32.gmra.mxu0 %v2389
        %v3631 = vpop.f32.mrf.mxu0
        %v3632 = vadd.f32 0.0, %v3631
        %v3633 = vpop.f32.mrf.mxu0
        %3634 = vdwg.mxu0
        %v3635 = vadd.f32 %v3564, %v3632
        %v3636 = vadd.f32 %v3635, %v434
        %v3637 = vld [vmem:[%s1857] sm:$0xff]
        %v3638 = vadd.f32 %v3636, %v3637
        %v3639 = vld [vmem:[%s1857 + $0x8] sm:$0xff]
        %v3640 = vsub.f32 %v3639, %v3636
        %s3641 = scalar_lea.vmem %s407, 32 [#allocation12]
        %3642 = vst [vmem:[%s3641] sm:$0xff] %v3638
        %3643 = vst [vmem:[%s3641 + $0x8] sm:$0xff] %v3640
        %v3644 = vmul.f32 %v3638, 0.5
        %v3645 = vtanh.pop %v3644
        %v3646 = vmul.f32 %v3644, %v3645
        %v3647 = vadd.f32 %v3644, %v3646
        %s3648 = scalar_lea.vmem %s400, 32 [#allocation11]
        %3649 = vst [vmem:[%s3648] sm:$0xff] %v3647
        %v3650 = vmul.f32 %v3640, 0.5
        %v3651 = vtanh.pop %v3650
        %v3652 = vmul.f32 %v3650, %v3651
        %v3653 = vadd.f32 %v3650, %v3652
        %3654 = vst [vmem:[%s3648 + $0x8] sm:$0xff] %v3653
        %s3655 = sand.u32 %s166, 1
        %s3656 = scalar_lea.sflag [#allocation4], %s3655
        %s3657 = sand.u32 %s166, 1
        %s3658 = smul.addr %s3657, 48
        %s3659 = scalar_lea.vmem [#allocation11], %s3658
        %s3660 = sand.u32 %s192, 1
        %s3661 = scalar_lea.sflag [#allocation13], %s3660
        %s3662 = sand.u32 %s192, 1
        %s3663 = smul.addr %s3662, 48
        %s3664 = scalar_lea.vmem [#allocation12], %s3663
        // Predicated region
        $region61: #{resnet_block_forward_pfb.1} parent=39 // pred_check
          %p3665 = pneg %p176
        $region62: #{resnet_block_forward_pfb.1} parent=39 // pred_check_branch
          %3667 = sbr.rel (%p3665) target = $region64
        $region63: #{resnet_block_forward_pfb.1} parent=39 // pred_region
          %s3669 = ssub.s32 768, 768
          %3670 = vsyncadd %s3656, %s3669
          %s3671 = smul.addr %s33, 128
          %s3672 = scalar_lea.hbm %s5, %s3671
          %s3673 = sshll.u32 %s3659, 4
          %s3674 = int_to_ptr.vmem [resolvable:$true] %s3673
          %3679 = dma.vmem_to_hbm [thread:$0]  %s3674, 768, %s3672, %s3656, 128, 256, 8
        $region64: #{resnet_block_forward_pfb.1} parent=39 // pred_fallthru
          _
        // Predicated region
        $region65: #{resnet_block_forward_pfb.1} parent=39 // pred_check
          %p3680 = pneg %p202
        $region66: #{resnet_block_forward_pfb.1} parent=39 // pred_check_branch
          %3682 = sbr.rel (%p3680) target = $region68
        $region67: #{resnet_block_forward_pfb.1} parent=39 // pred_region
          %s3684 = ssub.s32 768, 768
          %3685 = vsyncadd %s3661, %s3684
          %s3686 = smul.addr %s33, 128
          %s3687 = scalar_lea.hbm %s6, %s3686
          %s3688 = sshll.u32 %s3664, 4
          %s3689 = int_to_ptr.vmem [resolvable:$true] %s3688
          %3694 = dma.vmem_to_hbm [thread:$0]  %s3689, 768, %s3687, %s3661, 128, 256, 8
        $region68: #{resnet_block_forward_pfb.1} parent=39 // pred_fallthru
          _
      $region40: #{resnet_block_forward_pfb.1} parent=5 // pred_fallthru
        _
      %p3695 = scmp.le.s32.totalorder 2, %s28
      // Predicated region
      $region69: #{resnet_block_forward_pfb.1} parent=5 // pred_check
        %p3696 = pneg %p3695
      $region70: #{resnet_block_forward_pfb.1} parent=5 // pred_check_branch
        %3698 = sbr.rel (%p3696) target = $region72
      $region71: #{resnet_block_forward_pfb.1} parent=5 // pred_region
        %s3699 = ssub.s32 %s28, 2
        // Predicated region
        $region73: #{resnet_block_forward_pfb.1} parent=71 // pred_check
          %p3700 = pneg %p182
        $region74: #{resnet_block_forward_pfb.1} parent=71 // pred_check_branch
          %3702 = sbr.rel (%p3700) target = $region76
        $region75: #{resnet_block_forward_pfb.1} parent=71 // pred_region
          %s3703 = sand.u32 %s167, 1
          %s3704 = scalar_lea.sflag [#allocation4], %s3703
          %s3705 = sand.u32 %s167, 1
          %s3706 = smul.addr %s3705, 48
          %s3707 = scalar_lea.vmem [#allocation11], %s3706
          %3708 = dma.done %s3704, 768
        $region76: #{resnet_block_forward_pfb.1} parent=71 // pred_fallthru
          _
        // Predicated region
        $region77: #{resnet_block_forward_pfb.1} parent=71 // pred_check
          %p3709 = pneg %p208
        $region78: #{resnet_block_forward_pfb.1} parent=71 // pred_check_branch
          %3711 = sbr.rel (%p3709) target = $region80
        $region79: #{resnet_block_forward_pfb.1} parent=71 // pred_region
          %s3712 = sand.u32 %s193, 1
          %s3713 = scalar_lea.sflag [#allocation13], %s3712
          %s3714 = sand.u32 %s193, 1
          %s3715 = smul.addr %s3714, 48
          %s3716 = scalar_lea.vmem [#allocation12], %s3715
          %3717 = dma.done %s3713, 768
        $region80: #{resnet_block_forward_pfb.1} parent=71 // pred_fallthru
          _
      $region72: #{resnet_block_forward_pfb.1} parent=5 // pred_fallthru
        _
    $region6: #{resnet_block_forward_pfb.1} parent=1 // loop_footer
      %s32 = sadd.s32 1, %s28
    $region7: #{resnet_block_forward_pfb.1} parent=1 // loop_footer_branch
      %27 = sbr.rel target = $region3
    $region8: #{resnet_block_forward_pfb.1} parent=1 // loop_exit
      _
    %3718 = vsyncpa [#allocation3], 1
    %s3719 = scalar_lea.sflag [#allocation3], 1
    %3720 = vsyncpa %s3719, 1
    %3721 = vsyncpa [#allocation6], 1
    %s3722 = scalar_lea.sflag [#allocation6], 1
    %3723 = vsyncpa %s3722, 1
    %3724 = vsyncpa [#allocation9], 1
    %s3725 = scalar_lea.sflag [#allocation9], 1
    %3726 = vsyncpa %s3725, 1
    %3727 = vsyncpa [#allocation4], 1
    %s3728 = scalar_lea.sflag [#allocation4], 1
    %3729 = vsyncpa %s3728, 1
    %3730 = vsyncpa [#allocation13], 1
    %s3731 = scalar_lea.sflag [#allocation13], 1
    %3732 = vsyncpa %s3731, 1

</llo_original>
